<compile_context>
chip_gen: v7x
topology: tpu7x:2x2x1
jax: 0.10.0
libtpu: 0.0.40
codegen_flags: <defaults>
</compile_context>

<pallas_src>
import functools
import math

import jax
import jax.numpy as jnp
from jax import lax
from jax.experimental import pallas as pl
from jax.experimental.pallas import tpu as pltpu

LANES = 128
_SIGN = -2 ** 31          # 0x80000000 as int32
_INT_MAX = 2 ** 31 - 1


def _decode_key(key):
    """Inverse of the order-preserving float32 -> int32 key map (elementwise)."""
    sign = jnp.int32(_SIGN)
    bits = jnp.where(key >= 0, key,
                     jnp.bitwise_not(jnp.bitwise_xor(key, sign)))
    return pltpu.bitcast(bits, jnp.float32)


def _ema_quantile_kernel(x_ref, state_ref, out_ref, *,
                         n, k_low, frac_low, k_high, frac_high,
                         decay, inv_max):
    rows = x_ref.shape[0]
    padded_n = rows * LANES
    sign = jnp.int32(_SIGN)

    # ---- order-preserving int32 keys (signed compare == float compare) ----
    xv = x_ref[...].astype(jnp.float32)                 # (rows, 128)
    bits = pltpu.bitcast(xv, jnp.int32)
    ks = jnp.where(bits >= 0, bits,
                   jnp.bitwise_xor(jnp.bitwise_not(bits), sign))
    if padded_n != n:
        # Ragged tail: padded slots get INT32_MAX so they sort above all
        # real elements; order statistics below n are untouched.
        row_i = lax.broadcasted_iota(jnp.int32, (rows, LANES), 0)
        lane_i = lax.broadcasted_iota(jnp.int32, (rows, LANES), 1)
        ks = jnp.where(row_i * LANES + lane_i < n, ks, jnp.int32(_INT_MAX))
    # xv / bits are dead here — only the int32 key tile stays live in VMEM.

    use_packed = padded_n < (1 << 15)   # 16-bit count packing stays exact

    def ranks_le(cand_lo_s, cand_hi_s):
        """count(ks <= cand_lo), count(ks <= cand_hi) as (1,1) int32 each,
        using a single combined reduction per bisection step."""
        le_lo = (ks <= cand_lo_s).astype(jnp.int32)
        le_hi = (ks <= cand_hi_s).astype(jnp.int32)
        if use_packed:
            packed = jnp.sum(le_lo + le_hi * jnp.int32(1 << 16), keepdims=True)
            r_hi = jnp.right_shift(packed, jnp.int32(16))      # packed >= 0
            r_lo = jnp.bitwise_and(packed, jnp.int32(0xFFFF))
        else:
            p_lo = jnp.sum(le_lo, axis=0, keepdims=True)        # (1, 128)
            p_hi = jnp.sum(le_hi, axis=0, keepdims=True)        # (1, 128)
            both = jnp.concatenate([p_lo, p_hi], axis=0)        # (2, 128)
            r = jnp.sum(both, axis=1, keepdims=True)            # (2, 1)
            r_lo = r[0:1, 0:1]
            r_hi = r[1:2, 0:1]
        return r_lo, r_hi

    # ---- 32-step MSB-first bisection over the unsigned key space ---------
    # (fully unrolled: masks are compile-time immediates)
    ans_lo_u = jnp.zeros((1, 1), jnp.int32)
    ans_hi_u = jnp.zeros((1, 1), jnp.int32)
    for i in range(32):
        bit = 1 << (31 - i)
        if bit >= (1 << 31):
            bit -= 1 << 32                      # int32 two's complement
        ones_below = (1 << (31 - i)) - 1
        cand_lo_s = jnp.bitwise_xor(
            jnp.bitwise_or(ans_lo_u, jnp.int32(ones_below)), sign)
        cand_hi_s = jnp.bitwise_xor(
            jnp.bitwise_or(ans_hi_u, jnp.int32(ones_below)), sign)
        r_lo, r_hi = ranks_le(cand_lo_s, cand_hi_s)
        ans_lo_u = jnp.where(r_lo >= k_low + 1, ans_lo_u,
                             jnp.bitwise_or(ans_lo_u, jnp.int32(bit)))
        ans_hi_u = jnp.where(r_hi >= k_high + 1, ans_hi_u,
                             jnp.bitwise_or(ans_hi_u, jnp.int32(bit)))

    key_lo = jnp.bitwise_xor(ans_lo_u, sign)   # exact signed key of s_{k_low}
    key_hi = jnp.bitwise_xor(ans_hi_u, sign)   # exact signed key of s_{k_high}

    # Order statistics decoded straight from the bisection result (no extra
    # full-tile passes).
    v_l0 = _decode_key(key_lo)
    v_h0 = _decode_key(key_hi)

    # torch 'linear' interpolation; skipped statically when the fraction is 0
    # (also avoids 0*inf NaNs).  One compare per quantile feeds both the
    # rank-sum and the next-distinct-value min, all in key space.
    def interp(key, v0, k, frac):
        le = ks <= key
        r = jnp.sum(le.astype(jnp.int32), keepdims=True)
        nxt_key = jnp.min(jnp.where(le, jnp.int32(_INT_MAX), ks),
                          keepdims=True)
        v1 = jnp.where(r >= k + 2, v0, _decode_key(nxt_key))  # s_{k+1}
        return v0 + jnp.float32(frac) * (v1 - v0)

    q_low = interp(key_lo, v_l0, k_low, frac_low) if frac_low > 0.0 else v_l0
    q_high = interp(key_hi, v_h0, k_high, frac_high) if frac_high > 0.0 else v_h0

    # ---- EMA update + invscale -------------------------------------------
    low_prev = state_ref[0]
    high_prev = state_ref[1]
    d = jnp.float32(decay)
    omd = jnp.float32(1.0 - decay)
    new_low = d * low_prev + omd * q_low             # (1,1)
    new_high = d * high_prev + omd * q_high          # (1,1)
    invscale = jnp.maximum(jnp.float32(inv_max), new_high - new_low)

    # Pack [new_low, new_high, invscale] into lanes 0..2 of the output tile.
    lane = lax.broadcasted_iota(jnp.int32, (1, LANES), 1)
    out_ref[...] = jnp.where(lane == 0, new_low,
                             jnp.where(lane == 1, new_high,
                                       jnp.where(lane == 2, invscale,
                                                 jnp.float32(0.0))))


def _vmem_limit_bytes(x_bytes, padded_n):
    """Input-size-derived VMEM budget with a per-generation cap."""
    need = x_bytes + 4 * padded_n + (2 << 20)        # x tile + int32 keys + slack
    try:
        kind = jax.devices()[0].device_kind.lower()
    except Exception:  # pragma: no cover
        kind = ""
    cap = (48 << 20) if "v7" in kind else (100 << 20)   # v7x: 64 MiB physical
    return int(min(max(need, 8 << 20), cap))


def ema_forward(x, low, high, decay, max_, p_low, p_high):
    x = jnp.asarray(x)
    if not jnp.issubdtype(x.dtype, jnp.floating):
        x = x.astype(jnp.float32)
    xf = x.reshape(-1)
    n = int(xf.shape[0])
    if n == 0:
        raise ValueError("EMA forward requires a non-empty tensor")

    # Only a tiny zero-pad to a multiple of 128 lanes when needed; the ragged
    # tail is masked inside the kernel (keys -> INT32_MAX), so pad values are
    # irrelevant.  No f32 cast and no +inf concat on the host.
    pad = (-n) % LANES
    if pad:
        # TODO(synk): a fully copy-free ragged tail would need a manual-DMA
        # (pl.ANY) path; this copy only triggers when n % 128 != 0.
        xf = jnp.pad(xf, (0, pad))
    rows = (n + pad) // LANES
    x2d = xf.reshape(rows, LANES)
    padded_n = rows * LANES

    # Static quantile index math (matches torch 'linear' interpolation).
    idx_l = p_low * (n - 1)
    k_low = int(math.floor(idx_l))
    frac_low = float(idx_l - k_low)
    idx_h = p_high * (n - 1)
    k_high = int(math.floor(idx_h))
    frac_high = float(idx_h - k_high)

    state = jnp.stack([jnp.asarray(low, jnp.float32),
                       jnp.asarray(high, jnp.float32)])

    kernel = functools.partial(
        _ema_quantile_kernel,
        n=n, k_low=k_low, frac_low=frac_low,
        k_high=k_high, frac_high=frac_high,
        decay=float(decay), inv_max=1.0 / float(max_))

    out = pl.pallas_call(
        kernel,
        out_shape=jax.ShapeDtypeStruct((1, LANES), jnp.float32),
        in_specs=[
            pl.BlockSpec(memory_space=pltpu.MemorySpace.VMEM),   # x (rows, 128)
            pl.BlockSpec(memory_space=pltpu.MemorySpace.SMEM),   # (low, high)
        ],
        out_specs=pl.BlockSpec(memory_space=pltpu.MemorySpace.VMEM),
        compiler_params=pltpu.CompilerParams(
            vmem_limit_bytes=_vmem_limit_bytes(
                x2d.size * x2d.dtype.itemsize, padded_n)),
    )(x2d, state)

    return out[0, 0], out[0, 1], out[0, 2]  # new_low, new_high, invscale


class EMA:
    """JAX/Pallas port of the PyTorch EMA module (stateful buffers low/high)."""

    def __init__(self, decay=0.99, max_=1.0, percentile_low=0.05,
                 percentile_high=0.95):
        self._decay = float(decay)
        self._max = float(max_)
        self._p_low = float(percentile_low)
        self._p_high = float(percentile_high)
        self.low = jnp.zeros((), jnp.float32)
        self.high = jnp.zeros((), jnp.float32)

    def __call__(self, x):
        new_low, new_high, invscale = ema_forward(
            x, self.low, self.high, self._decay, self._max,
            self._p_low, self._p_high)
        self.low = new_low
        self.high = new_high
        return new_low, invscale


if __name__ == "__main__":
    key = jax.random.PRNGKey(0)
    x = jax.random.normal(key, (2, 4, 16, 16), jnp.float32)  # N = 2048

    ema = EMA()
    low, invscale = ema(x)
    low, invscale = jax.block_until_ready((low, invscale))

    # Pure-JAX reference (same semantics as the torch forward on fresh buffers).
    xf = x.reshape(-1)
    ql = jnp.quantile(xf, 0.05)
    qh = jnp.quantile(xf, 0.95)
    ref_low = 0.99 * 0.0 + 0.01 * ql
    ref_high = 0.99 * 0.0 + 0.01 * qh
    ref_inv = jnp.maximum(jnp.float32(1.0), ref_high - ref_low)
    assert abs(float(low) - float(ref_low)) < 1e-4, (float(low), float(ref_low))
    assert abs(float(invscale) - float(ref_inv)) < 1e-4, (float(invscale),
                                                          float(ref_inv))

    # Second step: exercises nonzero EMA state.
    x2 = jax.random.normal(jax.random.PRNGKey(1), (2, 4, 16, 16), jnp.float32)
    low2, inv2 = jax.block_until_ready(ema(x2))
    ref_low2 = 0.99 * ref_low + 0.01 * jnp.quantile(x2.reshape(-1), 0.05)
    ref_high2 = 0.99 * ref_high + 0.01 * jnp.quantile(x2.reshape(-1), 0.95)
    ref_inv2 = jnp.maximum(jnp.float32(1.0), ref_high2 - ref_low2)
    assert abs(float(low2) - float(ref_low2)) < 1e-4
    assert abs(float(inv2) - float(ref_inv2)) < 1e-4

    # Non-multiple-of-128 size (exercises the in-kernel ragged-tail masking).
    x3 = jax.random.normal(jax.random.PRNGKey(2), (3, 5, 7), jnp.float32)  # N=105
    ema3 = EMA()
    low3, inv3 = jax.block_until_ready(ema3(x3))
    ref_low3 = 0.01 * jnp.quantile(x3.reshape(-1), 0.05)
    ref_high3 = 0.01 * jnp.quantile(x3.reshape(-1), 0.95)
    ref_inv3 = jnp.maximum(jnp.float32(1.0), ref_high3 - ref_low3)
    assert abs(float(low3) - float(ref_low3)) < 1e-4
    assert abs(float(inv3) - float(ref_inv3)) < 1e-4

    print("KERNEL_OK")
</pallas_src>

<mosaic_0001>
module attributes {stable_mosaic.version = 11 : i64} {
  func.func @_ema_quantile_kernel(%arg0: memref<16x128xf32, #tpu.memory_space<vmem>>, %arg1: memref<2xf32, #tpu.memory_space<smem>>, %arg2: memref<1x128xf32, #tpu.memory_space<vmem>>) attributes {dimension_semantics = [], scalar_prefetch = 0 : i64, scratch_operands = 0 : i64, tpu.core_type = #tpu.core_type<tc>} {
    %c0 = arith.constant 0 : index
    %c0_0 = arith.constant 0 : index
    %0 = vector.load %arg0[%c0, %c0_0] : memref<16x128xf32, #tpu.memory_space<vmem>>, vector<16x128xf32>
    %1 = tpu.bitcast %0 : vector<16x128xf32> -> vector<16x128xi32>
    %c0_i32 = arith.constant 0 : i32
    %2 = vector.broadcast %c0_i32 : i32 to vector<16x128xi32>
    %3 = arith.cmpi sge, %1, %2 : vector<16x128xi32>
    %cst = arith.constant dense<-1> : vector<16x128xi32>
    %4 = arith.xori %1, %cst : vector<16x128xi32>
    %c-2147483648_i32 = arith.constant -2147483648 : i32
    %5 = vector.broadcast %c-2147483648_i32 : i32 to vector<16x128xi32>
    %6 = arith.xori %4, %5 : vector<16x128xi32>
    %7 = arith.select %3, %1, %6 : vector<16x128xi1>, vector<16x128xi32>
    %c0_i32_1 = arith.constant 0 : i32
    %8 = vector.broadcast %c0_i32_1 : i32 to vector<1x1xi32>
    %c0_i32_2 = arith.constant 0 : i32
    %9 = vector.broadcast %c0_i32_2 : i32 to vector<1x1xi32>
    %c2147483647_i32 = arith.constant 2147483647 : i32
    %10 = vector.broadcast %c2147483647_i32 : i32 to vector<1x1xi32>
    %11 = arith.ori %8, %10 : vector<1x1xi32>
    %c-2147483648_i32_3 = arith.constant -2147483648 : i32
    %12 = vector.broadcast %c-2147483648_i32_3 : i32 to vector<1x1xi32>
    %13 = arith.xori %11, %12 : vector<1x1xi32>
    %c2147483647_i32_4 = arith.constant 2147483647 : i32
    %14 = vector.broadcast %c2147483647_i32_4 : i32 to vector<1x1xi32>
    %15 = arith.ori %9, %14 : vector<1x1xi32>
    %c-2147483648_i32_5 = arith.constant -2147483648 : i32
    %16 = vector.broadcast %c-2147483648_i32_5 : i32 to vector<1x1xi32>
    %17 = arith.xori %15, %16 : vector<1x1xi32>
    %18 = vector.broadcast %13 : vector<1x1xi32> to vector<16x128xi32>
    %19 = arith.cmpi sle, %7, %18 : vector<16x128xi32>
    %20 = arith.extui %19 : vector<16x128xi1> to vector<16x128xi32>
    %21 = vector.broadcast %17 : vector<1x1xi32> to vector<16x128xi32>
    %22 = arith.cmpi sle, %7, %21 : vector<16x128xi32>
    %23 = arith.extui %22 : vector<16x128xi1> to vector<16x128xi32>
    %c65536_i32 = arith.constant 65536 : i32
    %24 = vector.broadcast %c65536_i32 : i32 to vector<16x128xi32>
    %25 = arith.muli %23, %24 : vector<16x128xi32>
    %26 = arith.addi %20, %25 : vector<16x128xi32>
    %27 = vector.shape_cast %26 : vector<16x128xi32> to vector<1x16x128xi32>
    %cst_6 = arith.constant dense<0> : vector<1xi32>
    %28 = vector.multi_reduction <add>, %27, %cst_6 [1, 2] : vector<1x16x128xi32> to vector<1xi32>
    %29 = vector.shape_cast %28 : vector<1xi32> to vector<1x1x1xi32>
    %30 = vector.extract %29[0, 0, 0] : i32 from vector<1x1x1xi32>
    %31 = vector.broadcast %30 : i32 to vector<1x1xi32>
    %c16_i32 = arith.constant 16 : i32
    %32 = vector.broadcast %c16_i32 : i32 to vector<1x1xi32>
    %33 = arith.shrsi %31, %32 : vector<1x1xi32>
    %c65535_i32 = arith.constant 65535 : i32
    %34 = vector.broadcast %c65535_i32 : i32 to vector<1x1xi32>
    %35 = arith.andi %31, %34 : vector<1x1xi32>
    %c103_i32 = arith.constant 103 : i32
    %36 = vector.broadcast %c103_i32 : i32 to vector<1x1xi32>
    %37 = arith.cmpi sge, %35, %36 : vector<1x1xi32>
    %c-2147483648_i32_7 = arith.constant -2147483648 : i32
    %38 = vector.broadcast %c-2147483648_i32_7 : i32 to vector<1x1xi32>
    %39 = arith.ori %8, %38 : vector<1x1xi32>
    %40 = arith.select %37, %8, %39 : vector<1x1xi1>, vector<1x1xi32>
    %c1945_i32 = arith.constant 1945 : i32
    %41 = vector.broadcast %c1945_i32 : i32 to vector<1x1xi32>
    %42 = arith.cmpi sge, %33, %41 : vector<1x1xi32>
    %c-2147483648_i32_8 = arith.constant -2147483648 : i32
    %43 = vector.broadcast %c-2147483648_i32_8 : i32 to vector<1x1xi32>
    %44 = arith.ori %9, %43 : vector<1x1xi32>
    %45 = arith.select %42, %9, %44 : vector<1x1xi1>, vector<1x1xi32>
    %c1073741823_i32 = arith.constant 1073741823 : i32
    %46 = vector.broadcast %c1073741823_i32 : i32 to vector<1x1xi32>
    %47 = arith.ori %40, %46 : vector<1x1xi32>
    %c-2147483648_i32_9 = arith.constant -2147483648 : i32
    %48 = vector.broadcast %c-2147483648_i32_9 : i32 to vector<1x1xi32>
    %49 = arith.xori %47, %48 : vector<1x1xi32>
    %c1073741823_i32_10 = arith.constant 1073741823 : i32
    %50 = vector.broadcast %c1073741823_i32_10 : i32 to vector<1x1xi32>
    %51 = arith.ori %45, %50 : vector<1x1xi32>
    %c-2147483648_i32_11 = arith.constant -2147483648 : i32
    %52 = vector.broadcast %c-2147483648_i32_11 : i32 to vector<1x1xi32>
    %53 = arith.xori %51, %52 : vector<1x1xi32>
    %54 = vector.broadcast %49 : vector<1x1xi32> to vector<16x128xi32>
    %55 = arith.cmpi sle, %7, %54 : vector<16x128xi32>
    %56 = arith.extui %55 : vector<16x128xi1> to vector<16x128xi32>
    %57 = vector.broadcast %53 : vector<1x1xi32> to vector<16x128xi32>
    %58 = arith.cmpi sle, %7, %57 : vector<16x128xi32>
    %59 = arith.extui %58 : vector<16x128xi1> to vector<16x128xi32>
    %c65536_i32_12 = arith.constant 65536 : i32
    %60 = vector.broadcast %c65536_i32_12 : i32 to vector<16x128xi32>
    %61 = arith.muli %59, %60 : vector<16x128xi32>
    %62 = arith.addi %56, %61 : vector<16x128xi32>
    %63 = vector.shape_cast %62 : vector<16x128xi32> to vector<1x16x128xi32>
    %cst_13 = arith.constant dense<0> : vector<1xi32>
    %64 = vector.multi_reduction <add>, %63, %cst_13 [1, 2] : vector<1x16x128xi32> to vector<1xi32>
    %65 = vector.shape_cast %64 : vector<1xi32> to vector<1x1x1xi32>
    %66 = vector.extract %65[0, 0, 0] : i32 from vector<1x1x1xi32>
    %67 = vector.broadcast %66 : i32 to vector<1x1xi32>
    %c16_i32_14 = arith.constant 16 : i32
    %68 = vector.broadcast %c16_i32_14 : i32 to vector<1x1xi32>
    %69 = arith.shrsi %67, %68 : vector<1x1xi32>
    %c65535_i32_15 = arith.constant 65535 : i32
    %70 = vector.broadcast %c65535_i32_15 : i32 to vector<1x1xi32>
    %71 = arith.andi %67, %70 : vector<1x1xi32>
    %c103_i32_16 = arith.constant 103 : i32
    %72 = vector.broadcast %c103_i32_16 : i32 to vector<1x1xi32>
    %73 = arith.cmpi sge, %71, %72 : vector<1x1xi32>
    %c1073741824_i32 = arith.constant 1073741824 : i32
    %74 = vector.broadcast %c1073741824_i32 : i32 to vector<1x1xi32>
    %75 = arith.ori %40, %74 : vector<1x1xi32>
    %76 = arith.select %73, %40, %75 : vector<1x1xi1>, vector<1x1xi32>
    %c1945_i32_17 = arith.constant 1945 : i32
    %77 = vector.broadcast %c1945_i32_17 : i32 to vector<1x1xi32>
    %78 = arith.cmpi sge, %69, %77 : vector<1x1xi32>
    %c1073741824_i32_18 = arith.constant 1073741824 : i32
    %79 = vector.broadcast %c1073741824_i32_18 : i32 to vector<1x1xi32>
    %80 = arith.ori %45, %79 : vector<1x1xi32>
    %81 = arith.select %78, %45, %80 : vector<1x1xi1>, vector<1x1xi32>
    %c536870911_i32 = arith.constant 536870911 : i32
    %82 = vector.broadcast %c536870911_i32 : i32 to vector<1x1xi32>
    %83 = arith.ori %76, %82 : vector<1x1xi32>
    %c-2147483648_i32_19 = arith.constant -2147483648 : i32
    %84 = vector.broadcast %c-2147483648_i32_19 : i32 to vector<1x1xi32>
    %85 = arith.xori %83, %84 : vector<1x1xi32>
    %c536870911_i32_20 = arith.constant 536870911 : i32
    %86 = vector.broadcast %c536870911_i32_20 : i32 to vector<1x1xi32>
    %87 = arith.ori %81, %86 : vector<1x1xi32>
    %c-2147483648_i32_21 = arith.constant -2147483648 : i32
    %88 = vector.broadcast %c-2147483648_i32_21 : i32 to vector<1x1xi32>
    %89 = arith.xori %87, %88 : vector<1x1xi32>
    %90 = vector.broadcast %85 : vector<1x1xi32> to vector<16x128xi32>
    %91 = arith.cmpi sle, %7, %90 : vector<16x128xi32>
    %92 = arith.extui %91 : vector<16x128xi1> to vector<16x128xi32>
    %93 = vector.broadcast %89 : vector<1x1xi32> to vector<16x128xi32>
    %94 = arith.cmpi sle, %7, %93 : vector<16x128xi32>
    %95 = arith.extui %94 : vector<16x128xi1> to vector<16x128xi32>
    %c65536_i32_22 = arith.constant 65536 : i32
    %96 = vector.broadcast %c65536_i32_22 : i32 to vector<16x128xi32>
    %97 = arith.muli %95, %96 : vector<16x128xi32>
    %98 = arith.addi %92, %97 : vector<16x128xi32>
    %99 = vector.shape_cast %98 : vector<16x128xi32> to vector<1x16x128xi32>
    %cst_23 = arith.constant dense<0> : vector<1xi32>
    %100 = vector.multi_reduction <add>, %99, %cst_23 [1, 2] : vector<1x16x128xi32> to vector<1xi32>
    %101 = vector.shape_cast %100 : vector<1xi32> to vector<1x1x1xi32>
    %102 = vector.extract %101[0, 0, 0] : i32 from vector<1x1x1xi32>
    %103 = vector.broadcast %102 : i32 to vector<1x1xi32>
    %c16_i32_24 = arith.constant 16 : i32
    %104 = vector.broadcast %c16_i32_24 : i32 to vector<1x1xi32>
    %105 = arith.shrsi %103, %104 : vector<1x1xi32>
    %c65535_i32_25 = arith.constant 65535 : i32
    %106 = vector.broadcast %c65535_i32_25 : i32 to vector<1x1xi32>
    %107 = arith.andi %103, %106 : vector<1x1xi32>
    %c103_i32_26 = arith.constant 103 : i32
    %108 = vector.broadcast %c103_i32_26 : i32 to vector<1x1xi32>
    %109 = arith.cmpi sge, %107, %108 : vector<1x1xi32>
    %c536870912_i32 = arith.constant 536870912 : i32
    %110 = vector.broadcast %c536870912_i32 : i32 to vector<1x1xi32>
    %111 = arith.ori %76, %110 : vector<1x1xi32>
    %112 = arith.select %109, %76, %111 : vector<1x1xi1>, vector<1x1xi32>
    %c1945_i32_27 = arith.constant 1945 : i32
    %113 = vector.broadcast %c1945_i32_27 : i32 to vector<1x1xi32>
    %114 = arith.cmpi sge, %105, %113 : vector<1x1xi32>
    %c536870912_i32_28 = arith.constant 536870912 : i32
    %115 = vector.broadcast %c536870912_i32_28 : i32 to vector<1x1xi32>
    %116 = arith.ori %81, %115 : vector<1x1xi32>
    %117 = arith.select %114, %81, %116 : vector<1x1xi1>, vector<1x1xi32>
    %c268435455_i32 = arith.constant 268435455 : i32
    %118 = vector.broadcast %c268435455_i32 : i32 to vector<1x1xi32>
    %119 = arith.ori %112, %118 : vector<1x1xi32>
    %c-2147483648_i32_29 = arith.constant -2147483648 : i32
    %120 = vector.broadcast %c-2147483648_i32_29 : i32 to vector<1x1xi32>
    %121 = arith.xori %119, %120 : vector<1x1xi32>
    %c268435455_i32_30 = arith.constant 268435455 : i32
    %122 = vector.broadcast %c268435455_i32_30 : i32 to vector<1x1xi32>
    %123 = arith.ori %117, %122 : vector<1x1xi32>
    %c-2147483648_i32_31 = arith.constant -2147483648 : i32
    %124 = vector.broadcast %c-2147483648_i32_31 : i32 to vector<1x1xi32>
    %125 = arith.xori %123, %124 : vector<1x1xi32>
    %126 = vector.broadcast %121 : vector<1x1xi32> to vector<16x128xi32>
    %127 = arith.cmpi sle, %7, %126 : vector<16x128xi32>
    %128 = arith.extui %127 : vector<16x128xi1> to vector<16x128xi32>
    %129 = vector.broadcast %125 : vector<1x1xi32> to vector<16x128xi32>
    %130 = arith.cmpi sle, %7, %129 : vector<16x128xi32>
    %131 = arith.extui %130 : vector<16x128xi1> to vector<16x128xi32>
    %c65536_i32_32 = arith.constant 65536 : i32
    %132 = vector.broadcast %c65536_i32_32 : i32 to vector<16x128xi32>
    %133 = arith.muli %131, %132 : vector<16x128xi32>
    %134 = arith.addi %128, %133 : vector<16x128xi32>
    %135 = vector.shape_cast %134 : vector<16x128xi32> to vector<1x16x128xi32>
    %cst_33 = arith.constant dense<0> : vector<1xi32>
    %136 = vector.multi_reduction <add>, %135, %cst_33 [1, 2] : vector<1x16x128xi32> to vector<1xi32>
    %137 = vector.shape_cast %136 : vector<1xi32> to vector<1x1x1xi32>
    %138 = vector.extract %137[0, 0, 0] : i32 from vector<1x1x1xi32>
    %139 = vector.broadcast %138 : i32 to vector<1x1xi32>
    %c16_i32_34 = arith.constant 16 : i32
    %140 = vector.broadcast %c16_i32_34 : i32 to vector<1x1xi32>
    %141 = arith.shrsi %139, %140 : vector<1x1xi32>
    %c65535_i32_35 = arith.constant 65535 : i32
    %142 = vector.broadcast %c65535_i32_35 : i32 to vector<1x1xi32>
    %143 = arith.andi %139, %142 : vector<1x1xi32>
    %c103_i32_36 = arith.constant 103 : i32
    %144 = vector.broadcast %c103_i32_36 : i32 to vector<1x1xi32>
    %145 = arith.cmpi sge, %143, %144 : vector<1x1xi32>
    %c268435456_i32 = arith.constant 268435456 : i32
    %146 = vector.broadcast %c268435456_i32 : i32 to vector<1x1xi32>
    %147 = arith.ori %112, %146 : vector<1x1xi32>
    %148 = arith.select %145, %112, %147 : vector<1x1xi1>, vector<1x1xi32>
    %c1945_i32_37 = arith.constant 1945 : i32
    %149 = vector.broadcast %c1945_i32_37 : i32 to vector<1x1xi32>
    %150 = arith.cmpi sge, %141, %149 : vector<1x1xi32>
    %c268435456_i32_38 = arith.constant 268435456 : i32
    %151 = vector.broadcast %c268435456_i32_38 : i32 to vector<1x1xi32>
    %152 = arith.ori %117, %151 : vector<1x1xi32>
    %153 = arith.select %150, %117, %152 : vector<1x1xi1>, vector<1x1xi32>
    %c134217727_i32 = arith.constant 134217727 : i32
    %154 = vector.broadcast %c134217727_i32 : i32 to vector<1x1xi32>
    %155 = arith.ori %148, %154 : vector<1x1xi32>
    %c-2147483648_i32_39 = arith.constant -2147483648 : i32
    %156 = vector.broadcast %c-2147483648_i32_39 : i32 to vector<1x1xi32>
    %157 = arith.xori %155, %156 : vector<1x1xi32>
    %c134217727_i32_40 = arith.constant 134217727 : i32
    %158 = vector.broadcast %c134217727_i32_40 : i32 to vector<1x1xi32>
    %159 = arith.ori %153, %158 : vector<1x1xi32>
    %c-2147483648_i32_41 = arith.constant -2147483648 : i32
    %160 = vector.broadcast %c-2147483648_i32_41 : i32 to vector<1x1xi32>
    %161 = arith.xori %159, %160 : vector<1x1xi32>
    %162 = vector.broadcast %157 : vector<1x1xi32> to vector<16x128xi32>
    %163 = arith.cmpi sle, %7, %162 : vector<16x128xi32>
    %164 = arith.extui %163 : vector<16x128xi1> to vector<16x128xi32>
    %165 = vector.broadcast %161 : vector<1x1xi32> to vector<16x128xi32>
    %166 = arith.cmpi sle, %7, %165 : vector<16x128xi32>
    %167 = arith.extui %166 : vector<16x128xi1> to vector<16x128xi32>
    %c65536_i32_42 = arith.constant 65536 : i32
    %168 = vector.broadcast %c65536_i32_42 : i32 to vector<16x128xi32>
    %169 = arith.muli %167, %168 : vector<16x128xi32>
    %170 = arith.addi %164, %169 : vector<16x128xi32>
    %171 = vector.shape_cast %170 : vector<16x128xi32> to vector<1x16x128xi32>
    %cst_43 = arith.constant dense<0> : vector<1xi32>
    %172 = vector.multi_reduction <add>, %171, %cst_43 [1, 2] : vector<1x16x128xi32> to vector<1xi32>
    %173 = vector.shape_cast %172 : vector<1xi32> to vector<1x1x1xi32>
    %174 = vector.extract %173[0, 0, 0] : i32 from vector<1x1x1xi32>
    %175 = vector.broadcast %174 : i32 to vector<1x1xi32>
    %c16_i32_44 = arith.constant 16 : i32
    %176 = vector.broadcast %c16_i32_44 : i32 to vector<1x1xi32>
    %177 = arith.shrsi %175, %176 : vector<1x1xi32>
    %c65535_i32_45 = arith.constant 65535 : i32
    %178 = vector.broadcast %c65535_i32_45 : i32 to vector<1x1xi32>
    %179 = arith.andi %175, %178 : vector<1x1xi32>
    %c103_i32_46 = arith.constant 103 : i32
    %180 = vector.broadcast %c103_i32_46 : i32 to vector<1x1xi32>
    %181 = arith.cmpi sge, %179, %180 : vector<1x1xi32>
    %c134217728_i32 = arith.constant 134217728 : i32
    %182 = vector.broadcast %c134217728_i32 : i32 to vector<1x1xi32>
    %183 = arith.ori %148, %182 : vector<1x1xi32>
    %184 = arith.select %181, %148, %183 : vector<1x1xi1>, vector<1x1xi32>
    %c1945_i32_47 = arith.constant 1945 : i32
    %185 = vector.broadcast %c1945_i32_47 : i32 to vector<1x1xi32>
    %186 = arith.cmpi sge, %177, %185 : vector<1x1xi32>
    %c134217728_i32_48 = arith.constant 134217728 : i32
    %187 = vector.broadcast %c134217728_i32_48 : i32 to vector<1x1xi32>
    %188 = arith.ori %153, %187 : vector<1x1xi32>
    %189 = arith.select %186, %153, %188 : vector<1x1xi1>, vector<1x1xi32>
    %c67108863_i32 = arith.constant 67108863 : i32
    %190 = vector.broadcast %c67108863_i32 : i32 to vector<1x1xi32>
    %191 = arith.ori %184, %190 : vector<1x1xi32>
    %c-2147483648_i32_49 = arith.constant -2147483648 : i32
    %192 = vector.broadcast %c-2147483648_i32_49 : i32 to vector<1x1xi32>
    %193 = arith.xori %191, %192 : vector<1x1xi32>
    %c67108863_i32_50 = arith.constant 67108863 : i32
    %194 = vector.broadcast %c67108863_i32_50 : i32 to vector<1x1xi32>
    %195 = arith.ori %189, %194 : vector<1x1xi32>
    %c-2147483648_i32_51 = arith.constant -2147483648 : i32
    %196 = vector.broadcast %c-2147483648_i32_51 : i32 to vector<1x1xi32>
    %197 = arith.xori %195, %196 : vector<1x1xi32>
    %198 = vector.broadcast %193 : vector<1x1xi32> to vector<16x128xi32>
    %199 = arith.cmpi sle, %7, %198 : vector<16x128xi32>
    %200 = arith.extui %199 : vector<16x128xi1> to vector<16x128xi32>
    %201 = vector.broadcast %197 : vector<1x1xi32> to vector<16x128xi32>
    %202 = arith.cmpi sle, %7, %201 : vector<16x128xi32>
    %203 = arith.extui %202 : vector<16x128xi1> to vector<16x128xi32>
    %c65536_i32_52 = arith.constant 65536 : i32
    %204 = vector.broadcast %c65536_i32_52 : i32 to vector<16x128xi32>
    %205 = arith.muli %203, %204 : vector<16x128xi32>
    %206 = arith.addi %200, %205 : vector<16x128xi32>
    %207 = vector.shape_cast %206 : vector<16x128xi32> to vector<1x16x128xi32>
    %cst_53 = arith.constant dense<0> : vector<1xi32>
    %208 = vector.multi_reduction <add>, %207, %cst_53 [1, 2] : vector<1x16x128xi32> to vector<1xi32>
    %209 = vector.shape_cast %208 : vector<1xi32> to vector<1x1x1xi32>
    %210 = vector.extract %209[0, 0, 0] : i32 from vector<1x1x1xi32>
    %211 = vector.broadcast %210 : i32 to vector<1x1xi32>
    %c16_i32_54 = arith.constant 16 : i32
    %212 = vector.broadcast %c16_i32_54 : i32 to vector<1x1xi32>
    %213 = arith.shrsi %211, %212 : vector<1x1xi32>
    %c65535_i32_55 = arith.constant 65535 : i32
    %214 = vector.broadcast %c65535_i32_55 : i32 to vector<1x1xi32>
    %215 = arith.andi %211, %214 : vector<1x1xi32>
    %c103_i32_56 = arith.constant 103 : i32
    %216 = vector.broadcast %c103_i32_56 : i32 to vector<1x1xi32>
    %217 = arith.cmpi sge, %215, %216 : vector<1x1xi32>
    %c67108864_i32 = arith.constant 67108864 : i32
    %218 = vector.broadcast %c67108864_i32 : i32 to vector<1x1xi32>
    %219 = arith.ori %184, %218 : vector<1x1xi32>
    %220 = arith.select %217, %184, %219 : vector<1x1xi1>, vector<1x1xi32>
    %c1945_i32_57 = arith.constant 1945 : i32
    %221 = vector.broadcast %c1945_i32_57 : i32 to vector<1x1xi32>
    %222 = arith.cmpi sge, %213, %221 : vector<1x1xi32>
    %c67108864_i32_58 = arith.constant 67108864 : i32
    %223 = vector.broadcast %c67108864_i32_58 : i32 to vector<1x1xi32>
    %224 = arith.ori %189, %223 : vector<1x1xi32>
    %225 = arith.select %222, %189, %224 : vector<1x1xi1>, vector<1x1xi32>
    %c33554431_i32 = arith.constant 33554431 : i32
    %226 = vector.broadcast %c33554431_i32 : i32 to vector<1x1xi32>
    %227 = arith.ori %220, %226 : vector<1x1xi32>
    %c-2147483648_i32_59 = arith.constant -2147483648 : i32
    %228 = vector.broadcast %c-2147483648_i32_59 : i32 to vector<1x1xi32>
    %229 = arith.xori %227, %228 : vector<1x1xi32>
    %c33554431_i32_60 = arith.constant 33554431 : i32
    %230 = vector.broadcast %c33554431_i32_60 : i32 to vector<1x1xi32>
    %231 = arith.ori %225, %230 : vector<1x1xi32>
    %c-2147483648_i32_61 = arith.constant -2147483648 : i32
    %232 = vector.broadcast %c-2147483648_i32_61 : i32 to vector<1x1xi32>
    %233 = arith.xori %231, %232 : vector<1x1xi32>
    %234 = vector.broadcast %229 : vector<1x1xi32> to vector<16x128xi32>
    %235 = arith.cmpi sle, %7, %234 : vector<16x128xi32>
    %236 = arith.extui %235 : vector<16x128xi1> to vector<16x128xi32>
    %237 = vector.broadcast %233 : vector<1x1xi32> to vector<16x128xi32>
    %238 = arith.cmpi sle, %7, %237 : vector<16x128xi32>
    %239 = arith.extui %238 : vector<16x128xi1> to vector<16x128xi32>
    %c65536_i32_62 = arith.constant 65536 : i32
    %240 = vector.broadcast %c65536_i32_62 : i32 to vector<16x128xi32>
    %241 = arith.muli %239, %240 : vector<16x128xi32>
    %242 = arith.addi %236, %241 : vector<16x128xi32>
    %243 = vector.shape_cast %242 : vector<16x128xi32> to vector<1x16x128xi32>
    %cst_63 = arith.constant dense<0> : vector<1xi32>
    %244 = vector.multi_reduction <add>, %243, %cst_63 [1, 2] : vector<1x16x128xi32> to vector<1xi32>
    %245 = vector.shape_cast %244 : vector<1xi32> to vector<1x1x1xi32>
    %246 = vector.extract %245[0, 0, 0] : i32 from vector<1x1x1xi32>
    %247 = vector.broadcast %246 : i32 to vector<1x1xi32>
    %c16_i32_64 = arith.constant 16 : i32
    %248 = vector.broadcast %c16_i32_64 : i32 to vector<1x1xi32>
    %249 = arith.shrsi %247, %248 : vector<1x1xi32>
    %c65535_i32_65 = arith.constant 65535 : i32
    %250 = vector.broadcast %c65535_i32_65 : i32 to vector<1x1xi32>
    %251 = arith.andi %247, %250 : vector<1x1xi32>
    %c103_i32_66 = arith.constant 103 : i32
    %252 = vector.broadcast %c103_i32_66 : i32 to vector<1x1xi32>
    %253 = arith.cmpi sge, %251, %252 : vector<1x1xi32>
    %c33554432_i32 = arith.constant 33554432 : i32
    %254 = vector.broadcast %c33554432_i32 : i32 to vector<1x1xi32>
    %255 = arith.ori %220, %254 : vector<1x1xi32>
    %256 = arith.select %253, %220, %255 : vector<1x1xi1>, vector<1x1xi32>
    %c1945_i32_67 = arith.constant 1945 : i32
    %257 = vector.broadcast %c1945_i32_67 : i32 to vector<1x1xi32>
    %258 = arith.cmpi sge, %249, %257 : vector<1x1xi32>
    %c33554432_i32_68 = arith.constant 33554432 : i32
    %259 = vector.broadcast %c33554432_i32_68 : i32 to vector<1x1xi32>
    %260 = arith.ori %225, %259 : vector<1x1xi32>
    %261 = arith.select %258, %225, %260 : vector<1x1xi1>, vector<1x1xi32>
    %c16777215_i32 = arith.constant 16777215 : i32
    %262 = vector.broadcast %c16777215_i32 : i32 to vector<1x1xi32>
    %263 = arith.ori %256, %262 : vector<1x1xi32>
    %c-2147483648_i32_69 = arith.constant -2147483648 : i32
    %264 = vector.broadcast %c-2147483648_i32_69 : i32 to vector<1x1xi32>
    %265 = arith.xori %263, %264 : vector<1x1xi32>
    %c16777215_i32_70 = arith.constant 16777215 : i32
    %266 = vector.broadcast %c16777215_i32_70 : i32 to vector<1x1xi32>
    %267 = arith.ori %261, %266 : vector<1x1xi32>
    %c-2147483648_i32_71 = arith.constant -2147483648 : i32
    %268 = vector.broadcast %c-2147483648_i32_71 : i32 to vector<1x1xi32>
    %269 = arith.xori %267, %268 : vector<1x1xi32>
    %270 = vector.broadcast %265 : vector<1x1xi32> to vector<16x128xi32>
    %271 = arith.cmpi sle, %7, %270 : vector<16x128xi32>
    %272 = arith.extui %271 : vector<16x128xi1> to vector<16x128xi32>
    %273 = vector.broadcast %269 : vector<1x1xi32> to vector<16x128xi32>
    %274 = arith.cmpi sle, %7, %273 : vector<16x128xi32>
    %275 = arith.extui %274 : vector<16x128xi1> to vector<16x128xi32>
    %c65536_i32_72 = arith.constant 65536 : i32
    %276 = vector.broadcast %c65536_i32_72 : i32 to vector<16x128xi32>
    %277 = arith.muli %275, %276 : vector<16x128xi32>
    %278 = arith.addi %272, %277 : vector<16x128xi32>
    %279 = vector.shape_cast %278 : vector<16x128xi32> to vector<1x16x128xi32>
    %cst_73 = arith.constant dense<0> : vector<1xi32>
    %280 = vector.multi_reduction <add>, %279, %cst_73 [1, 2] : vector<1x16x128xi32> to vector<1xi32>
    %281 = vector.shape_cast %280 : vector<1xi32> to vector<1x1x1xi32>
    %282 = vector.extract %281[0, 0, 0] : i32 from vector<1x1x1xi32>
    %283 = vector.broadcast %282 : i32 to vector<1x1xi32>
    %c16_i32_74 = arith.constant 16 : i32
    %284 = vector.broadcast %c16_i32_74 : i32 to vector<1x1xi32>
    %285 = arith.shrsi %283, %284 : vector<1x1xi32>
    %c65535_i32_75 = arith.constant 65535 : i32
    %286 = vector.broadcast %c65535_i32_75 : i32 to vector<1x1xi32>
    %287 = arith.andi %283, %286 : vector<1x1xi32>
    %c103_i32_76 = arith.constant 103 : i32
    %288 = vector.broadcast %c103_i32_76 : i32 to vector<1x1xi32>
    %289 = arith.cmpi sge, %287, %288 : vector<1x1xi32>
    %c16777216_i32 = arith.constant 16777216 : i32
    %290 = vector.broadcast %c16777216_i32 : i32 to vector<1x1xi32>
    %291 = arith.ori %256, %290 : vector<1x1xi32>
    %292 = arith.select %289, %256, %291 : vector<1x1xi1>, vector<1x1xi32>
    %c1945_i32_77 = arith.constant 1945 : i32
    %293 = vector.broadcast %c1945_i32_77 : i32 to vector<1x1xi32>
    %294 = arith.cmpi sge, %285, %293 : vector<1x1xi32>
    %c16777216_i32_78 = arith.constant 16777216 : i32
    %295 = vector.broadcast %c16777216_i32_78 : i32 to vector<1x1xi32>
    %296 = arith.ori %261, %295 : vector<1x1xi32>
    %297 = arith.select %294, %261, %296 : vector<1x1xi1>, vector<1x1xi32>
    %c8388607_i32 = arith.constant 8388607 : i32
    %298 = vector.broadcast %c8388607_i32 : i32 to vector<1x1xi32>
    %299 = arith.ori %292, %298 : vector<1x1xi32>
    %c-2147483648_i32_79 = arith.constant -2147483648 : i32
    %300 = vector.broadcast %c-2147483648_i32_79 : i32 to vector<1x1xi32>
    %301 = arith.xori %299, %300 : vector<1x1xi32>
    %c8388607_i32_80 = arith.constant 8388607 : i32
    %302 = vector.broadcast %c8388607_i32_80 : i32 to vector<1x1xi32>
    %303 = arith.ori %297, %302 : vector<1x1xi32>
    %c-2147483648_i32_81 = arith.constant -2147483648 : i32
    %304 = vector.broadcast %c-2147483648_i32_81 : i32 to vector<1x1xi32>
    %305 = arith.xori %303, %304 : vector<1x1xi32>
    %306 = vector.broadcast %301 : vector<1x1xi32> to vector<16x128xi32>
    %307 = arith.cmpi sle, %7, %306 : vector<16x128xi32>
    %308 = arith.extui %307 : vector<16x128xi1> to vector<16x128xi32>
    %309 = vector.broadcast %305 : vector<1x1xi32> to vector<16x128xi32>
    %310 = arith.cmpi sle, %7, %309 : vector<16x128xi32>
    %311 = arith.extui %310 : vector<16x128xi1> to vector<16x128xi32>
    %c65536_i32_82 = arith.constant 65536 : i32
    %312 = vector.broadcast %c65536_i32_82 : i32 to vector<16x128xi32>
    %313 = arith.muli %311, %312 : vector<16x128xi32>
    %314 = arith.addi %308, %313 : vector<16x128xi32>
    %315 = vector.shape_cast %314 : vector<16x128xi32> to vector<1x16x128xi32>
    %cst_83 = arith.constant dense<0> : vector<1xi32>
    %316 = vector.multi_reduction <add>, %315, %cst_83 [1, 2] : vector<1x16x128xi32> to vector<1xi32>
    %317 = vector.shape_cast %316 : vector<1xi32> to vector<1x1x1xi32>
    %318 = vector.extract %317[0, 0, 0] : i32 from vector<1x1x1xi32>
    %319 = vector.broadcast %318 : i32 to vector<1x1xi32>
    %c16_i32_84 = arith.constant 16 : i32
    %320 = vector.broadcast %c16_i32_84 : i32 to vector<1x1xi32>
    %321 = arith.shrsi %319, %320 : vector<1x1xi32>
    %c65535_i32_85 = arith.constant 65535 : i32
    %322 = vector.broadcast %c65535_i32_85 : i32 to vector<1x1xi32>
    %323 = arith.andi %319, %322 : vector<1x1xi32>
    %c103_i32_86 = arith.constant 103 : i32
    %324 = vector.broadcast %c103_i32_86 : i32 to vector<1x1xi32>
    %325 = arith.cmpi sge, %323, %324 : vector<1x1xi32>
    %c8388608_i32 = arith.constant 8388608 : i32
    %326 = vector.broadcast %c8388608_i32 : i32 to vector<1x1xi32>
    %327 = arith.ori %292, %326 : vector<1x1xi32>
    %328 = arith.select %325, %292, %327 : vector<1x1xi1>, vector<1x1xi32>
    %c1945_i32_87 = arith.constant 1945 : i32
    %329 = vector.broadcast %c1945_i32_87 : i32 to vector<1x1xi32>
    %330 = arith.cmpi sge, %321, %329 : vector<1x1xi32>
    %c8388608_i32_88 = arith.constant 8388608 : i32
    %331 = vector.broadcast %c8388608_i32_88 : i32 to vector<1x1xi32>
    %332 = arith.ori %297, %331 : vector<1x1xi32>
    %333 = arith.select %330, %297, %332 : vector<1x1xi1>, vector<1x1xi32>
    %c4194303_i32 = arith.constant 4194303 : i32
    %334 = vector.broadcast %c4194303_i32 : i32 to vector<1x1xi32>
    %335 = arith.ori %328, %334 : vector<1x1xi32>
    %c-2147483648_i32_89 = arith.constant -2147483648 : i32
    %336 = vector.broadcast %c-2147483648_i32_89 : i32 to vector<1x1xi32>
    %337 = arith.xori %335, %336 : vector<1x1xi32>
    %c4194303_i32_90 = arith.constant 4194303 : i32
    %338 = vector.broadcast %c4194303_i32_90 : i32 to vector<1x1xi32>
    %339 = arith.ori %333, %338 : vector<1x1xi32>
    %c-2147483648_i32_91 = arith.constant -2147483648 : i32
    %340 = vector.broadcast %c-2147483648_i32_91 : i32 to vector<1x1xi32>
    %341 = arith.xori %339, %340 : vector<1x1xi32>
    %342 = vector.broadcast %337 : vector<1x1xi32> to vector<16x128xi32>
    %343 = arith.cmpi sle, %7, %342 : vector<16x128xi32>
    %344 = arith.extui %343 : vector<16x128xi1> to vector<16x128xi32>
    %345 = vector.broadcast %341 : vector<1x1xi32> to vector<16x128xi32>
    %346 = arith.cmpi sle, %7, %345 : vector<16x128xi32>
    %347 = arith.extui %346 : vector<16x128xi1> to vector<16x128xi32>
    %c65536_i32_92 = arith.constant 65536 : i32
    %348 = vector.broadcast %c65536_i32_92 : i32 to vector<16x128xi32>
    %349 = arith.muli %347, %348 : vector<16x128xi32>
    %350 = arith.addi %344, %349 : vector<16x128xi32>
    %351 = vector.shape_cast %350 : vector<16x128xi32> to vector<1x16x128xi32>
    %cst_93 = arith.constant dense<0> : vector<1xi32>
    %352 = vector.multi_reduction <add>, %351, %cst_93 [1, 2] : vector<1x16x128xi32> to vector<1xi32>
    %353 = vector.shape_cast %352 : vector<1xi32> to vector<1x1x1xi32>
    %354 = vector.extract %353[0, 0, 0] : i32 from vector<1x1x1xi32>
    %355 = vector.broadcast %354 : i32 to vector<1x1xi32>
    %c16_i32_94 = arith.constant 16 : i32
    %356 = vector.broadcast %c16_i32_94 : i32 to vector<1x1xi32>
    %357 = arith.shrsi %355, %356 : vector<1x1xi32>
    %c65535_i32_95 = arith.constant 65535 : i32
    %358 = vector.broadcast %c65535_i32_95 : i32 to vector<1x1xi32>
    %359 = arith.andi %355, %358 : vector<1x1xi32>
    %c103_i32_96 = arith.constant 103 : i32
    %360 = vector.broadcast %c103_i32_96 : i32 to vector<1x1xi32>
    %361 = arith.cmpi sge, %359, %360 : vector<1x1xi32>
    %c4194304_i32 = arith.constant 4194304 : i32
    %362 = vector.broadcast %c4194304_i32 : i32 to vector<1x1xi32>
    %363 = arith.ori %328, %362 : vector<1x1xi32>
    %364 = arith.select %361, %328, %363 : vector<1x1xi1>, vector<1x1xi32>
    %c1945_i32_97 = arith.constant 1945 : i32
    %365 = vector.broadcast %c1945_i32_97 : i32 to vector<1x1xi32>
    %366 = arith.cmpi sge, %357, %365 : vector<1x1xi32>
    %c4194304_i32_98 = arith.constant 4194304 : i32
    %367 = vector.broadcast %c4194304_i32_98 : i32 to vector<1x1xi32>
    %368 = arith.ori %333, %367 : vector<1x1xi32>
    %369 = arith.select %366, %333, %368 : vector<1x1xi1>, vector<1x1xi32>
    %c2097151_i32 = arith.constant 2097151 : i32
    %370 = vector.broadcast %c2097151_i32 : i32 to vector<1x1xi32>
    %371 = arith.ori %364, %370 : vector<1x1xi32>
    %c-2147483648_i32_99 = arith.constant -2147483648 : i32
    %372 = vector.broadcast %c-2147483648_i32_99 : i32 to vector<1x1xi32>
    %373 = arith.xori %371, %372 : vector<1x1xi32>
    %c2097151_i32_100 = arith.constant 2097151 : i32
    %374 = vector.broadcast %c2097151_i32_100 : i32 to vector<1x1xi32>
    %375 = arith.ori %369, %374 : vector<1x1xi32>
    %c-2147483648_i32_101 = arith.constant -2147483648 : i32
    %376 = vector.broadcast %c-2147483648_i32_101 : i32 to vector<1x1xi32>
    %377 = arith.xori %375, %376 : vector<1x1xi32>
    %378 = vector.broadcast %373 : vector<1x1xi32> to vector<16x128xi32>
    %379 = arith.cmpi sle, %7, %378 : vector<16x128xi32>
    %380 = arith.extui %379 : vector<16x128xi1> to vector<16x128xi32>
    %381 = vector.broadcast %377 : vector<1x1xi32> to vector<16x128xi32>
    %382 = arith.cmpi sle, %7, %381 : vector<16x128xi32>
    %383 = arith.extui %382 : vector<16x128xi1> to vector<16x128xi32>
    %c65536_i32_102 = arith.constant 65536 : i32
    %384 = vector.broadcast %c65536_i32_102 : i32 to vector<16x128xi32>
    %385 = arith.muli %383, %384 : vector<16x128xi32>
    %386 = arith.addi %380, %385 : vector<16x128xi32>
    %387 = vector.shape_cast %386 : vector<16x128xi32> to vector<1x16x128xi32>
    %cst_103 = arith.constant dense<0> : vector<1xi32>
    %388 = vector.multi_reduction <add>, %387, %cst_103 [1, 2] : vector<1x16x128xi32> to vector<1xi32>
    %389 = vector.shape_cast %388 : vector<1xi32> to vector<1x1x1xi32>
    %390 = vector.extract %389[0, 0, 0] : i32 from vector<1x1x1xi32>
    %391 = vector.broadcast %390 : i32 to vector<1x1xi32>
    %c16_i32_104 = arith.constant 16 : i32
    %392 = vector.broadcast %c16_i32_104 : i32 to vector<1x1xi32>
    %393 = arith.shrsi %391, %392 : vector<1x1xi32>
    %c65535_i32_105 = arith.constant 65535 : i32
    %394 = vector.broadcast %c65535_i32_105 : i32 to vector<1x1xi32>
    %395 = arith.andi %391, %394 : vector<1x1xi32>
    %c103_i32_106 = arith.constant 103 : i32
    %396 = vector.broadcast %c103_i32_106 : i32 to vector<1x1xi32>
    %397 = arith.cmpi sge, %395, %396 : vector<1x1xi32>
    %c2097152_i32 = arith.constant 2097152 : i32
    %398 = vector.broadcast %c2097152_i32 : i32 to vector<1x1xi32>
    %399 = arith.ori %364, %398 : vector<1x1xi32>
    %400 = arith.select %397, %364, %399 : vector<1x1xi1>, vector<1x1xi32>
    %c1945_i32_107 = arith.constant 1945 : i32
    %401 = vector.broadcast %c1945_i32_107 : i32 to vector<1x1xi32>
    %402 = arith.cmpi sge, %393, %401 : vector<1x1xi32>
    %c2097152_i32_108 = arith.constant 2097152 : i32
    %403 = vector.broadcast %c2097152_i32_108 : i32 to vector<1x1xi32>
    %404 = arith.ori %369, %403 : vector<1x1xi32>
    %405 = arith.select %402, %369, %404 : vector<1x1xi1>, vector<1x1xi32>
    %c1048575_i32 = arith.constant 1048575 : i32
    %406 = vector.broadcast %c1048575_i32 : i32 to vector<1x1xi32>
    %407 = arith.ori %400, %406 : vector<1x1xi32>
    %c-2147483648_i32_109 = arith.constant -2147483648 : i32
    %408 = vector.broadcast %c-2147483648_i32_109 : i32 to vector<1x1xi32>
    %409 = arith.xori %407, %408 : vector<1x1xi32>
    %c1048575_i32_110 = arith.constant 1048575 : i32
    %410 = vector.broadcast %c1048575_i32_110 : i32 to vector<1x1xi32>
    %411 = arith.ori %405, %410 : vector<1x1xi32>
    %c-2147483648_i32_111 = arith.constant -2147483648 : i32
    %412 = vector.broadcast %c-2147483648_i32_111 : i32 to vector<1x1xi32>
    %413 = arith.xori %411, %412 : vector<1x1xi32>
    %414 = vector.broadcast %409 : vector<1x1xi32> to vector<16x128xi32>
    %415 = arith.cmpi sle, %7, %414 : vector<16x128xi32>
    %416 = arith.extui %415 : vector<16x128xi1> to vector<16x128xi32>
    %417 = vector.broadcast %413 : vector<1x1xi32> to vector<16x128xi32>
    %418 = arith.cmpi sle, %7, %417 : vector<16x128xi32>
    %419 = arith.extui %418 : vector<16x128xi1> to vector<16x128xi32>
    %c65536_i32_112 = arith.constant 65536 : i32
    %420 = vector.broadcast %c65536_i32_112 : i32 to vector<16x128xi32>
    %421 = arith.muli %419, %420 : vector<16x128xi32>
    %422 = arith.addi %416, %421 : vector<16x128xi32>
    %423 = vector.shape_cast %422 : vector<16x128xi32> to vector<1x16x128xi32>
    %cst_113 = arith.constant dense<0> : vector<1xi32>
    %424 = vector.multi_reduction <add>, %423, %cst_113 [1, 2] : vector<1x16x128xi32> to vector<1xi32>
    %425 = vector.shape_cast %424 : vector<1xi32> to vector<1x1x1xi32>
    %426 = vector.extract %425[0, 0, 0] : i32 from vector<1x1x1xi32>
    %427 = vector.broadcast %426 : i32 to vector<1x1xi32>
    %c16_i32_114 = arith.constant 16 : i32
    %428 = vector.broadcast %c16_i32_114 : i32 to vector<1x1xi32>
    %429 = arith.shrsi %427, %428 : vector<1x1xi32>
    %c65535_i32_115 = arith.constant 65535 : i32
    %430 = vector.broadcast %c65535_i32_115 : i32 to vector<1x1xi32>
    %431 = arith.andi %427, %430 : vector<1x1xi32>
    %c103_i32_116 = arith.constant 103 : i32
    %432 = vector.broadcast %c103_i32_116 : i32 to vector<1x1xi32>
    %433 = arith.cmpi sge, %431, %432 : vector<1x1xi32>
    %c1048576_i32 = arith.constant 1048576 : i32
    %434 = vector.broadcast %c1048576_i32 : i32 to vector<1x1xi32>
    %435 = arith.ori %400, %434 : vector<1x1xi32>
    %436 = arith.select %433, %400, %435 : vector<1x1xi1>, vector<1x1xi32>
    %c1945_i32_117 = arith.constant 1945 : i32
    %437 = vector.broadcast %c1945_i32_117 : i32 to vector<1x1xi32>
    %438 = arith.cmpi sge, %429, %437 : vector<1x1xi32>
    %c1048576_i32_118 = arith.constant 1048576 : i32
    %439 = vector.broadcast %c1048576_i32_118 : i32 to vector<1x1xi32>
    %440 = arith.ori %405, %439 : vector<1x1xi32>
    %441 = arith.select %438, %405, %440 : vector<1x1xi1>, vector<1x1xi32>
    %c524287_i32 = arith.constant 524287 : i32
    %442 = vector.broadcast %c524287_i32 : i32 to vector<1x1xi32>
    %443 = arith.ori %436, %442 : vector<1x1xi32>
    %c-2147483648_i32_119 = arith.constant -2147483648 : i32
    %444 = vector.broadcast %c-2147483648_i32_119 : i32 to vector<1x1xi32>
    %445 = arith.xori %443, %444 : vector<1x1xi32>
    %c524287_i32_120 = arith.constant 524287 : i32
    %446 = vector.broadcast %c524287_i32_120 : i32 to vector<1x1xi32>
    %447 = arith.ori %441, %446 : vector<1x1xi32>
    %c-2147483648_i32_121 = arith.constant -2147483648 : i32
    %448 = vector.broadcast %c-2147483648_i32_121 : i32 to vector<1x1xi32>
    %449 = arith.xori %447, %448 : vector<1x1xi32>
    %450 = vector.broadcast %445 : vector<1x1xi32> to vector<16x128xi32>
    %451 = arith.cmpi sle, %7, %450 : vector<16x128xi32>
    %452 = arith.extui %451 : vector<16x128xi1> to vector<16x128xi32>
    %453 = vector.broadcast %449 : vector<1x1xi32> to vector<16x128xi32>
    %454 = arith.cmpi sle, %7, %453 : vector<16x128xi32>
    %455 = arith.extui %454 : vector<16x128xi1> to vector<16x128xi32>
    %c65536_i32_122 = arith.constant 65536 : i32
    %456 = vector.broadcast %c65536_i32_122 : i32 to vector<16x128xi32>
    %457 = arith.muli %455, %456 : vector<16x128xi32>
    %458 = arith.addi %452, %457 : vector<16x128xi32>
    %459 = vector.shape_cast %458 : vector<16x128xi32> to vector<1x16x128xi32>
    %cst_123 = arith.constant dense<0> : vector<1xi32>
    %460 = vector.multi_reduction <add>, %459, %cst_123 [1, 2] : vector<1x16x128xi32> to vector<1xi32>
    %461 = vector.shape_cast %460 : vector<1xi32> to vector<1x1x1xi32>
    %462 = vector.extract %461[0, 0, 0] : i32 from vector<1x1x1xi32>
    %463 = vector.broadcast %462 : i32 to vector<1x1xi32>
    %c16_i32_124 = arith.constant 16 : i32
    %464 = vector.broadcast %c16_i32_124 : i32 to vector<1x1xi32>
    %465 = arith.shrsi %463, %464 : vector<1x1xi32>
    %c65535_i32_125 = arith.constant 65535 : i32
    %466 = vector.broadcast %c65535_i32_125 : i32 to vector<1x1xi32>
    %467 = arith.andi %463, %466 : vector<1x1xi32>
    %c103_i32_126 = arith.constant 103 : i32
    %468 = vector.broadcast %c103_i32_126 : i32 to vector<1x1xi32>
    %469 = arith.cmpi sge, %467, %468 : vector<1x1xi32>
    %c524288_i32 = arith.constant 524288 : i32
    %470 = vector.broadcast %c524288_i32 : i32 to vector<1x1xi32>
    %471 = arith.ori %436, %470 : vector<1x1xi32>
    %472 = arith.select %469, %436, %471 : vector<1x1xi1>, vector<1x1xi32>
    %c1945_i32_127 = arith.constant 1945 : i32
    %473 = vector.broadcast %c1945_i32_127 : i32 to vector<1x1xi32>
    %474 = arith.cmpi sge, %465, %473 : vector<1x1xi32>
    %c524288_i32_128 = arith.constant 524288 : i32
    %475 = vector.broadcast %c524288_i32_128 : i32 to vector<1x1xi32>
    %476 = arith.ori %441, %475 : vector<1x1xi32>
    %477 = arith.select %474, %441, %476 : vector<1x1xi1>, vector<1x1xi32>
    %c262143_i32 = arith.constant 262143 : i32
    %478 = vector.broadcast %c262143_i32 : i32 to vector<1x1xi32>
    %479 = arith.ori %472, %478 : vector<1x1xi32>
    %c-2147483648_i32_129 = arith.constant -2147483648 : i32
    %480 = vector.broadcast %c-2147483648_i32_129 : i32 to vector<1x1xi32>
    %481 = arith.xori %479, %480 : vector<1x1xi32>
    %c262143_i32_130 = arith.constant 262143 : i32
    %482 = vector.broadcast %c262143_i32_130 : i32 to vector<1x1xi32>
    %483 = arith.ori %477, %482 : vector<1x1xi32>
    %c-2147483648_i32_131 = arith.constant -2147483648 : i32
    %484 = vector.broadcast %c-2147483648_i32_131 : i32 to vector<1x1xi32>
    %485 = arith.xori %483, %484 : vector<1x1xi32>
    %486 = vector.broadcast %481 : vector<1x1xi32> to vector<16x128xi32>
    %487 = arith.cmpi sle, %7, %486 : vector<16x128xi32>
    %488 = arith.extui %487 : vector<16x128xi1> to vector<16x128xi32>
    %489 = vector.broadcast %485 : vector<1x1xi32> to vector<16x128xi32>
    %490 = arith.cmpi sle, %7, %489 : vector<16x128xi32>
    %491 = arith.extui %490 : vector<16x128xi1> to vector<16x128xi32>
    %c65536_i32_132 = arith.constant 65536 : i32
    %492 = vector.broadcast %c65536_i32_132 : i32 to vector<16x128xi32>
    %493 = arith.muli %491, %492 : vector<16x128xi32>
    %494 = arith.addi %488, %493 : vector<16x128xi32>
    %495 = vector.shape_cast %494 : vector<16x128xi32> to vector<1x16x128xi32>
    %cst_133 = arith.constant dense<0> : vector<1xi32>
    %496 = vector.multi_reduction <add>, %495, %cst_133 [1, 2] : vector<1x16x128xi32> to vector<1xi32>
    %497 = vector.shape_cast %496 : vector<1xi32> to vector<1x1x1xi32>
    %498 = vector.extract %497[0, 0, 0] : i32 from vector<1x1x1xi32>
    %499 = vector.broadcast %498 : i32 to vector<1x1xi32>
    %c16_i32_134 = arith.constant 16 : i32
    %500 = vector.broadcast %c16_i32_134 : i32 to vector<1x1xi32>
    %501 = arith.shrsi %499, %500 : vector<1x1xi32>
    %c65535_i32_135 = arith.constant 65535 : i32
    %502 = vector.broadcast %c65535_i32_135 : i32 to vector<1x1xi32>
    %503 = arith.andi %499, %502 : vector<1x1xi32>
    %c103_i32_136 = arith.constant 103 : i32
    %504 = vector.broadcast %c103_i32_136 : i32 to vector<1x1xi32>
    %505 = arith.cmpi sge, %503, %504 : vector<1x1xi32>
    %c262144_i32 = arith.constant 262144 : i32
    %506 = vector.broadcast %c262144_i32 : i32 to vector<1x1xi32>
    %507 = arith.ori %472, %506 : vector<1x1xi32>
    %508 = arith.select %505, %472, %507 : vector<1x1xi1>, vector<1x1xi32>
    %c1945_i32_137 = arith.constant 1945 : i32
    %509 = vector.broadcast %c1945_i32_137 : i32 to vector<1x1xi32>
    %510 = arith.cmpi sge, %501, %509 : vector<1x1xi32>
    %c262144_i32_138 = arith.constant 262144 : i32
    %511 = vector.broadcast %c262144_i32_138 : i32 to vector<1x1xi32>
    %512 = arith.ori %477, %511 : vector<1x1xi32>
    %513 = arith.select %510, %477, %512 : vector<1x1xi1>, vector<1x1xi32>
    %c131071_i32 = arith.constant 131071 : i32
    %514 = vector.broadcast %c131071_i32 : i32 to vector<1x1xi32>
    %515 = arith.ori %508, %514 : vector<1x1xi32>
    %c-2147483648_i32_139 = arith.constant -2147483648 : i32
    %516 = vector.broadcast %c-2147483648_i32_139 : i32 to vector<1x1xi32>
    %517 = arith.xori %515, %516 : vector<1x1xi32>
    %c131071_i32_140 = arith.constant 131071 : i32
    %518 = vector.broadcast %c131071_i32_140 : i32 to vector<1x1xi32>
    %519 = arith.ori %513, %518 : vector<1x1xi32>
    %c-2147483648_i32_141 = arith.constant -2147483648 : i32
    %520 = vector.broadcast %c-2147483648_i32_141 : i32 to vector<1x1xi32>
    %521 = arith.xori %519, %520 : vector<1x1xi32>
    %522 = vector.broadcast %517 : vector<1x1xi32> to vector<16x128xi32>
    %523 = arith.cmpi sle, %7, %522 : vector<16x128xi32>
    %524 = arith.extui %523 : vector<16x128xi1> to vector<16x128xi32>
    %525 = vector.broadcast %521 : vector<1x1xi32> to vector<16x128xi32>
    %526 = arith.cmpi sle, %7, %525 : vector<16x128xi32>
    %527 = arith.extui %526 : vector<16x128xi1> to vector<16x128xi32>
    %c65536_i32_142 = arith.constant 65536 : i32
    %528 = vector.broadcast %c65536_i32_142 : i32 to vector<16x128xi32>
    %529 = arith.muli %527, %528 : vector<16x128xi32>
    %530 = arith.addi %524, %529 : vector<16x128xi32>
    %531 = vector.shape_cast %530 : vector<16x128xi32> to vector<1x16x128xi32>
    %cst_143 = arith.constant dense<0> : vector<1xi32>
    %532 = vector.multi_reduction <add>, %531, %cst_143 [1, 2] : vector<1x16x128xi32> to vector<1xi32>
    %533 = vector.shape_cast %532 : vector<1xi32> to vector<1x1x1xi32>
    %534 = vector.extract %533[0, 0, 0] : i32 from vector<1x1x1xi32>
    %535 = vector.broadcast %534 : i32 to vector<1x1xi32>
    %c16_i32_144 = arith.constant 16 : i32
    %536 = vector.broadcast %c16_i32_144 : i32 to vector<1x1xi32>
    %537 = arith.shrsi %535, %536 : vector<1x1xi32>
    %c65535_i32_145 = arith.constant 65535 : i32
    %538 = vector.broadcast %c65535_i32_145 : i32 to vector<1x1xi32>
    %539 = arith.andi %535, %538 : vector<1x1xi32>
    %c103_i32_146 = arith.constant 103 : i32
    %540 = vector.broadcast %c103_i32_146 : i32 to vector<1x1xi32>
    %541 = arith.cmpi sge, %539, %540 : vector<1x1xi32>
    %c131072_i32 = arith.constant 131072 : i32
    %542 = vector.broadcast %c131072_i32 : i32 to vector<1x1xi32>
    %543 = arith.ori %508, %542 : vector<1x1xi32>
    %544 = arith.select %541, %508, %543 : vector<1x1xi1>, vector<1x1xi32>
    %c1945_i32_147 = arith.constant 1945 : i32
    %545 = vector.broadcast %c1945_i32_147 : i32 to vector<1x1xi32>
    %546 = arith.cmpi sge, %537, %545 : vector<1x1xi32>
    %c131072_i32_148 = arith.constant 131072 : i32
    %547 = vector.broadcast %c131072_i32_148 : i32 to vector<1x1xi32>
    %548 = arith.ori %513, %547 : vector<1x1xi32>
    %549 = arith.select %546, %513, %548 : vector<1x1xi1>, vector<1x1xi32>
    %c65535_i32_149 = arith.constant 65535 : i32
    %550 = vector.broadcast %c65535_i32_149 : i32 to vector<1x1xi32>
    %551 = arith.ori %544, %550 : vector<1x1xi32>
    %c-2147483648_i32_150 = arith.constant -2147483648 : i32
    %552 = vector.broadcast %c-2147483648_i32_150 : i32 to vector<1x1xi32>
    %553 = arith.xori %551, %552 : vector<1x1xi32>
    %c65535_i32_151 = arith.constant 65535 : i32
    %554 = vector.broadcast %c65535_i32_151 : i32 to vector<1x1xi32>
    %555 = arith.ori %549, %554 : vector<1x1xi32>
    %c-2147483648_i32_152 = arith.constant -2147483648 : i32
    %556 = vector.broadcast %c-2147483648_i32_152 : i32 to vector<1x1xi32>
    %557 = arith.xori %555, %556 : vector<1x1xi32>
    %558 = vector.broadcast %553 : vector<1x1xi32> to vector<16x128xi32>
    %559 = arith.cmpi sle, %7, %558 : vector<16x128xi32>
    %560 = arith.extui %559 : vector<16x128xi1> to vector<16x128xi32>
    %561 = vector.broadcast %557 : vector<1x1xi32> to vector<16x128xi32>
    %562 = arith.cmpi sle, %7, %561 : vector<16x128xi32>
    %563 = arith.extui %562 : vector<16x128xi1> to vector<16x128xi32>
    %c65536_i32_153 = arith.constant 65536 : i32
    %564 = vector.broadcast %c65536_i32_153 : i32 to vector<16x128xi32>
    %565 = arith.muli %563, %564 : vector<16x128xi32>
    %566 = arith.addi %560, %565 : vector<16x128xi32>
    %567 = vector.shape_cast %566 : vector<16x128xi32> to vector<1x16x128xi32>
    %cst_154 = arith.constant dense<0> : vector<1xi32>
    %568 = vector.multi_reduction <add>, %567, %cst_154 [1, 2] : vector<1x16x128xi32> to vector<1xi32>
    %569 = vector.shape_cast %568 : vector<1xi32> to vector<1x1x1xi32>
    %570 = vector.extract %569[0, 0, 0] : i32 from vector<1x1x1xi32>
    %571 = vector.broadcast %570 : i32 to vector<1x1xi32>
    %c16_i32_155 = arith.constant 16 : i32
    %572 = vector.broadcast %c16_i32_155 : i32 to vector<1x1xi32>
    %573 = arith.shrsi %571, %572 : vector<1x1xi32>
    %c65535_i32_156 = arith.constant 65535 : i32
    %574 = vector.broadcast %c65535_i32_156 : i32 to vector<1x1xi32>
    %575 = arith.andi %571, %574 : vector<1x1xi32>
    %c103_i32_157 = arith.constant 103 : i32
    %576 = vector.broadcast %c103_i32_157 : i32 to vector<1x1xi32>
    %577 = arith.cmpi sge, %575, %576 : vector<1x1xi32>
    %c65536_i32_158 = arith.constant 65536 : i32
    %578 = vector.broadcast %c65536_i32_158 : i32 to vector<1x1xi32>
    %579 = arith.ori %544, %578 : vector<1x1xi32>
    %580 = arith.select %577, %544, %579 : vector<1x1xi1>, vector<1x1xi32>
    %c1945_i32_159 = arith.constant 1945 : i32
    %581 = vector.broadcast %c1945_i32_159 : i32 to vector<1x1xi32>
    %582 = arith.cmpi sge, %573, %581 : vector<1x1xi32>
    %c65536_i32_160 = arith.constant 65536 : i32
    %583 = vector.broadcast %c65536_i32_160 : i32 to vector<1x1xi32>
    %584 = arith.ori %549, %583 : vector<1x1xi32>
    %585 = arith.select %582, %549, %584 : vector<1x1xi1>, vector<1x1xi32>
    %c32767_i32 = arith.constant 32767 : i32
    %586 = vector.broadcast %c32767_i32 : i32 to vector<1x1xi32>
    %587 = arith.ori %580, %586 : vector<1x1xi32>
    %c-2147483648_i32_161 = arith.constant -2147483648 : i32
    %588 = vector.broadcast %c-2147483648_i32_161 : i32 to vector<1x1xi32>
    %589 = arith.xori %587, %588 : vector<1x1xi32>
    %c32767_i32_162 = arith.constant 32767 : i32
    %590 = vector.broadcast %c32767_i32_162 : i32 to vector<1x1xi32>
    %591 = arith.ori %585, %590 : vector<1x1xi32>
    %c-2147483648_i32_163 = arith.constant -2147483648 : i32
    %592 = vector.broadcast %c-2147483648_i32_163 : i32 to vector<1x1xi32>
    %593 = arith.xori %591, %592 : vector<1x1xi32>
    %594 = vector.broadcast %589 : vector<1x1xi32> to vector<16x128xi32>
    %595 = arith.cmpi sle, %7, %594 : vector<16x128xi32>
    %596 = arith.extui %595 : vector<16x128xi1> to vector<16x128xi32>
    %597 = vector.broadcast %593 : vector<1x1xi32> to vector<16x128xi32>
    %598 = arith.cmpi sle, %7, %597 : vector<16x128xi32>
    %599 = arith.extui %598 : vector<16x128xi1> to vector<16x128xi32>
    %c65536_i32_164 = arith.constant 65536 : i32
    %600 = vector.broadcast %c65536_i32_164 : i32 to vector<16x128xi32>
    %601 = arith.muli %599, %600 : vector<16x128xi32>
    %602 = arith.addi %596, %601 : vector<16x128xi32>
    %603 = vector.shape_cast %602 : vector<16x128xi32> to vector<1x16x128xi32>
    %cst_165 = arith.constant dense<0> : vector<1xi32>
    %604 = vector.multi_reduction <add>, %603, %cst_165 [1, 2] : vector<1x16x128xi32> to vector<1xi32>
    %605 = vector.shape_cast %604 : vector<1xi32> to vector<1x1x1xi32>
    %606 = vector.extract %605[0, 0, 0] : i32 from vector<1x1x1xi32>
    %607 = vector.broadcast %606 : i32 to vector<1x1xi32>
    %c16_i32_166 = arith.constant 16 : i32
    %608 = vector.broadcast %c16_i32_166 : i32 to vector<1x1xi32>
    %609 = arith.shrsi %607, %608 : vector<1x1xi32>
    %c65535_i32_167 = arith.constant 65535 : i32
    %610 = vector.broadcast %c65535_i32_167 : i32 to vector<1x1xi32>
    %611 = arith.andi %607, %610 : vector<1x1xi32>
    %c103_i32_168 = arith.constant 103 : i32
    %612 = vector.broadcast %c103_i32_168 : i32 to vector<1x1xi32>
    %613 = arith.cmpi sge, %611, %612 : vector<1x1xi32>
    %c32768_i32 = arith.constant 32768 : i32
    %614 = vector.broadcast %c32768_i32 : i32 to vector<1x1xi32>
    %615 = arith.ori %580, %614 : vector<1x1xi32>
    %616 = arith.select %613, %580, %615 : vector<1x1xi1>, vector<1x1xi32>
    %c1945_i32_169 = arith.constant 1945 : i32
    %617 = vector.broadcast %c1945_i32_169 : i32 to vector<1x1xi32>
    %618 = arith.cmpi sge, %609, %617 : vector<1x1xi32>
    %c32768_i32_170 = arith.constant 32768 : i32
    %619 = vector.broadcast %c32768_i32_170 : i32 to vector<1x1xi32>
    %620 = arith.ori %585, %619 : vector<1x1xi32>
    %621 = arith.select %618, %585, %620 : vector<1x1xi1>, vector<1x1xi32>
    %c16383_i32 = arith.constant 16383 : i32
    %622 = vector.broadcast %c16383_i32 : i32 to vector<1x1xi32>
    %623 = arith.ori %616, %622 : vector<1x1xi32>
    %c-2147483648_i32_171 = arith.constant -2147483648 : i32
    %624 = vector.broadcast %c-2147483648_i32_171 : i32 to vector<1x1xi32>
    %625 = arith.xori %623, %624 : vector<1x1xi32>
    %c16383_i32_172 = arith.constant 16383 : i32
    %626 = vector.broadcast %c16383_i32_172 : i32 to vector<1x1xi32>
    %627 = arith.ori %621, %626 : vector<1x1xi32>
    %c-2147483648_i32_173 = arith.constant -2147483648 : i32
    %628 = vector.broadcast %c-2147483648_i32_173 : i32 to vector<1x1xi32>
    %629 = arith.xori %627, %628 : vector<1x1xi32>
    %630 = vector.broadcast %625 : vector<1x1xi32> to vector<16x128xi32>
    %631 = arith.cmpi sle, %7, %630 : vector<16x128xi32>
    %632 = arith.extui %631 : vector<16x128xi1> to vector<16x128xi32>
    %633 = vector.broadcast %629 : vector<1x1xi32> to vector<16x128xi32>
    %634 = arith.cmpi sle, %7, %633 : vector<16x128xi32>
    %635 = arith.extui %634 : vector<16x128xi1> to vector<16x128xi32>
    %c65536_i32_174 = arith.constant 65536 : i32
    %636 = vector.broadcast %c65536_i32_174 : i32 to vector<16x128xi32>
    %637 = arith.muli %635, %636 : vector<16x128xi32>
    %638 = arith.addi %632, %637 : vector<16x128xi32>
    %639 = vector.shape_cast %638 : vector<16x128xi32> to vector<1x16x128xi32>
    %cst_175 = arith.constant dense<0> : vector<1xi32>
    %640 = vector.multi_reduction <add>, %639, %cst_175 [1, 2] : vector<1x16x128xi32> to vector<1xi32>
    %641 = vector.shape_cast %640 : vector<1xi32> to vector<1x1x1xi32>
    %642 = vector.extract %641[0, 0, 0] : i32 from vector<1x1x1xi32>
    %643 = vector.broadcast %642 : i32 to vector<1x1xi32>
    %c16_i32_176 = arith.constant 16 : i32
    %644 = vector.broadcast %c16_i32_176 : i32 to vector<1x1xi32>
    %645 = arith.shrsi %643, %644 : vector<1x1xi32>
    %c65535_i32_177 = arith.constant 65535 : i32
    %646 = vector.broadcast %c65535_i32_177 : i32 to vector<1x1xi32>
    %647 = arith.andi %643, %646 : vector<1x1xi32>
    %c103_i32_178 = arith.constant 103 : i32
    %648 = vector.broadcast %c103_i32_178 : i32 to vector<1x1xi32>
    %649 = arith.cmpi sge, %647, %648 : vector<1x1xi32>
    %c16384_i32 = arith.constant 16384 : i32
    %650 = vector.broadcast %c16384_i32 : i32 to vector<1x1xi32>
    %651 = arith.ori %616, %650 : vector<1x1xi32>
    %652 = arith.select %649, %616, %651 : vector<1x1xi1>, vector<1x1xi32>
    %c1945_i32_179 = arith.constant 1945 : i32
    %653 = vector.broadcast %c1945_i32_179 : i32 to vector<1x1xi32>
    %654 = arith.cmpi sge, %645, %653 : vector<1x1xi32>
    %c16384_i32_180 = arith.constant 16384 : i32
    %655 = vector.broadcast %c16384_i32_180 : i32 to vector<1x1xi32>
    %656 = arith.ori %621, %655 : vector<1x1xi32>
    %657 = arith.select %654, %621, %656 : vector<1x1xi1>, vector<1x1xi32>
    %c8191_i32 = arith.constant 8191 : i32
    %658 = vector.broadcast %c8191_i32 : i32 to vector<1x1xi32>
    %659 = arith.ori %652, %658 : vector<1x1xi32>
    %c-2147483648_i32_181 = arith.constant -2147483648 : i32
    %660 = vector.broadcast %c-2147483648_i32_181 : i32 to vector<1x1xi32>
    %661 = arith.xori %659, %660 : vector<1x1xi32>
    %c8191_i32_182 = arith.constant 8191 : i32
    %662 = vector.broadcast %c8191_i32_182 : i32 to vector<1x1xi32>
    %663 = arith.ori %657, %662 : vector<1x1xi32>
    %c-2147483648_i32_183 = arith.constant -2147483648 : i32
    %664 = vector.broadcast %c-2147483648_i32_183 : i32 to vector<1x1xi32>
    %665 = arith.xori %663, %664 : vector<1x1xi32>
    %666 = vector.broadcast %661 : vector<1x1xi32> to vector<16x128xi32>
    %667 = arith.cmpi sle, %7, %666 : vector<16x128xi32>
    %668 = arith.extui %667 : vector<16x128xi1> to vector<16x128xi32>
    %669 = vector.broadcast %665 : vector<1x1xi32> to vector<16x128xi32>
    %670 = arith.cmpi sle, %7, %669 : vector<16x128xi32>
    %671 = arith.extui %670 : vector<16x128xi1> to vector<16x128xi32>
    %c65536_i32_184 = arith.constant 65536 : i32
    %672 = vector.broadcast %c65536_i32_184 : i32 to vector<16x128xi32>
    %673 = arith.muli %671, %672 : vector<16x128xi32>
    %674 = arith.addi %668, %673 : vector<16x128xi32>
    %675 = vector.shape_cast %674 : vector<16x128xi32> to vector<1x16x128xi32>
    %cst_185 = arith.constant dense<0> : vector<1xi32>
    %676 = vector.multi_reduction <add>, %675, %cst_185 [1, 2] : vector<1x16x128xi32> to vector<1xi32>
    %677 = vector.shape_cast %676 : vector<1xi32> to vector<1x1x1xi32>
    %678 = vector.extract %677[0, 0, 0] : i32 from vector<1x1x1xi32>
    %679 = vector.broadcast %678 : i32 to vector<1x1xi32>
    %c16_i32_186 = arith.constant 16 : i32
    %680 = vector.broadcast %c16_i32_186 : i32 to vector<1x1xi32>
    %681 = arith.shrsi %679, %680 : vector<1x1xi32>
    %c65535_i32_187 = arith.constant 65535 : i32
    %682 = vector.broadcast %c65535_i32_187 : i32 to vector<1x1xi32>
    %683 = arith.andi %679, %682 : vector<1x1xi32>
    %c103_i32_188 = arith.constant 103 : i32
    %684 = vector.broadcast %c103_i32_188 : i32 to vector<1x1xi32>
    %685 = arith.cmpi sge, %683, %684 : vector<1x1xi32>
    %c8192_i32 = arith.constant 8192 : i32
    %686 = vector.broadcast %c8192_i32 : i32 to vector<1x1xi32>
    %687 = arith.ori %652, %686 : vector<1x1xi32>
    %688 = arith.select %685, %652, %687 : vector<1x1xi1>, vector<1x1xi32>
    %c1945_i32_189 = arith.constant 1945 : i32
    %689 = vector.broadcast %c1945_i32_189 : i32 to vector<1x1xi32>
    %690 = arith.cmpi sge, %681, %689 : vector<1x1xi32>
    %c8192_i32_190 = arith.constant 8192 : i32
    %691 = vector.broadcast %c8192_i32_190 : i32 to vector<1x1xi32>
    %692 = arith.ori %657, %691 : vector<1x1xi32>
    %693 = arith.select %690, %657, %692 : vector<1x1xi1>, vector<1x1xi32>
    %c4095_i32 = arith.constant 4095 : i32
    %694 = vector.broadcast %c4095_i32 : i32 to vector<1x1xi32>
    %695 = arith.ori %688, %694 : vector<1x1xi32>
    %c-2147483648_i32_191 = arith.constant -2147483648 : i32
    %696 = vector.broadcast %c-2147483648_i32_191 : i32 to vector<1x1xi32>
    %697 = arith.xori %695, %696 : vector<1x1xi32>
    %c4095_i32_192 = arith.constant 4095 : i32
    %698 = vector.broadcast %c4095_i32_192 : i32 to vector<1x1xi32>
    %699 = arith.ori %693, %698 : vector<1x1xi32>
    %c-2147483648_i32_193 = arith.constant -2147483648 : i32
    %700 = vector.broadcast %c-2147483648_i32_193 : i32 to vector<1x1xi32>
    %701 = arith.xori %699, %700 : vector<1x1xi32>
    %702 = vector.broadcast %697 : vector<1x1xi32> to vector<16x128xi32>
    %703 = arith.cmpi sle, %7, %702 : vector<16x128xi32>
    %704 = arith.extui %703 : vector<16x128xi1> to vector<16x128xi32>
    %705 = vector.broadcast %701 : vector<1x1xi32> to vector<16x128xi32>
    %706 = arith.cmpi sle, %7, %705 : vector<16x128xi32>
    %707 = arith.extui %706 : vector<16x128xi1> to vector<16x128xi32>
    %c65536_i32_194 = arith.constant 65536 : i32
    %708 = vector.broadcast %c65536_i32_194 : i32 to vector<16x128xi32>
    %709 = arith.muli %707, %708 : vector<16x128xi32>
    %710 = arith.addi %704, %709 : vector<16x128xi32>
    %711 = vector.shape_cast %710 : vector<16x128xi32> to vector<1x16x128xi32>
    %cst_195 = arith.constant dense<0> : vector<1xi32>
    %712 = vector.multi_reduction <add>, %711, %cst_195 [1, 2] : vector<1x16x128xi32> to vector<1xi32>
    %713 = vector.shape_cast %712 : vector<1xi32> to vector<1x1x1xi32>
    %714 = vector.extract %713[0, 0, 0] : i32 from vector<1x1x1xi32>
    %715 = vector.broadcast %714 : i32 to vector<1x1xi32>
    %c16_i32_196 = arith.constant 16 : i32
    %716 = vector.broadcast %c16_i32_196 : i32 to vector<1x1xi32>
    %717 = arith.shrsi %715, %716 : vector<1x1xi32>
    %c65535_i32_197 = arith.constant 65535 : i32
    %718 = vector.broadcast %c65535_i32_197 : i32 to vector<1x1xi32>
    %719 = arith.andi %715, %718 : vector<1x1xi32>
    %c103_i32_198 = arith.constant 103 : i32
    %720 = vector.broadcast %c103_i32_198 : i32 to vector<1x1xi32>
    %721 = arith.cmpi sge, %719, %720 : vector<1x1xi32>
    %c4096_i32 = arith.constant 4096 : i32
    %722 = vector.broadcast %c4096_i32 : i32 to vector<1x1xi32>
    %723 = arith.ori %688, %722 : vector<1x1xi32>
    %724 = arith.select %721, %688, %723 : vector<1x1xi1>, vector<1x1xi32>
    %c1945_i32_199 = arith.constant 1945 : i32
    %725 = vector.broadcast %c1945_i32_199 : i32 to vector<1x1xi32>
    %726 = arith.cmpi sge, %717, %725 : vector<1x1xi32>
    %c4096_i32_200 = arith.constant 4096 : i32
    %727 = vector.broadcast %c4096_i32_200 : i32 to vector<1x1xi32>
    %728 = arith.ori %693, %727 : vector<1x1xi32>
    %729 = arith.select %726, %693, %728 : vector<1x1xi1>, vector<1x1xi32>
    %c2047_i32 = arith.constant 2047 : i32
    %730 = vector.broadcast %c2047_i32 : i32 to vector<1x1xi32>
    %731 = arith.ori %724, %730 : vector<1x1xi32>
    %c-2147483648_i32_201 = arith.constant -2147483648 : i32
    %732 = vector.broadcast %c-2147483648_i32_201 : i32 to vector<1x1xi32>
    %733 = arith.xori %731, %732 : vector<1x1xi32>
    %c2047_i32_202 = arith.constant 2047 : i32
    %734 = vector.broadcast %c2047_i32_202 : i32 to vector<1x1xi32>
    %735 = arith.ori %729, %734 : vector<1x1xi32>
    %c-2147483648_i32_203 = arith.constant -2147483648 : i32
    %736 = vector.broadcast %c-2147483648_i32_203 : i32 to vector<1x1xi32>
    %737 = arith.xori %735, %736 : vector<1x1xi32>
    %738 = vector.broadcast %733 : vector<1x1xi32> to vector<16x128xi32>
    %739 = arith.cmpi sle, %7, %738 : vector<16x128xi32>
    %740 = arith.extui %739 : vector<16x128xi1> to vector<16x128xi32>
    %741 = vector.broadcast %737 : vector<1x1xi32> to vector<16x128xi32>
    %742 = arith.cmpi sle, %7, %741 : vector<16x128xi32>
    %743 = arith.extui %742 : vector<16x128xi1> to vector<16x128xi32>
    %c65536_i32_204 = arith.constant 65536 : i32
    %744 = vector.broadcast %c65536_i32_204 : i32 to vector<16x128xi32>
    %745 = arith.muli %743, %744 : vector<16x128xi32>
    %746 = arith.addi %740, %745 : vector<16x128xi32>
    %747 = vector.shape_cast %746 : vector<16x128xi32> to vector<1x16x128xi32>
    %cst_205 = arith.constant dense<0> : vector<1xi32>
    %748 = vector.multi_reduction <add>, %747, %cst_205 [1, 2] : vector<1x16x128xi32> to vector<1xi32>
    %749 = vector.shape_cast %748 : vector<1xi32> to vector<1x1x1xi32>
    %750 = vector.extract %749[0, 0, 0] : i32 from vector<1x1x1xi32>
    %751 = vector.broadcast %750 : i32 to vector<1x1xi32>
    %c16_i32_206 = arith.constant 16 : i32
    %752 = vector.broadcast %c16_i32_206 : i32 to vector<1x1xi32>
    %753 = arith.shrsi %751, %752 : vector<1x1xi32>
    %c65535_i32_207 = arith.constant 65535 : i32
    %754 = vector.broadcast %c65535_i32_207 : i32 to vector<1x1xi32>
    %755 = arith.andi %751, %754 : vector<1x1xi32>
    %c103_i32_208 = arith.constant 103 : i32
    %756 = vector.broadcast %c103_i32_208 : i32 to vector<1x1xi32>
    %757 = arith.cmpi sge, %755, %756 : vector<1x1xi32>
    %c2048_i32 = arith.constant 2048 : i32
    %758 = vector.broadcast %c2048_i32 : i32 to vector<1x1xi32>
    %759 = arith.ori %724, %758 : vector<1x1xi32>
    %760 = arith.select %757, %724, %759 : vector<1x1xi1>, vector<1x1xi32>
    %c1945_i32_209 = arith.constant 1945 : i32
    %761 = vector.broadcast %c1945_i32_209 : i32 to vector<1x1xi32>
    %762 = arith.cmpi sge, %753, %761 : vector<1x1xi32>
    %c2048_i32_210 = arith.constant 2048 : i32
    %763 = vector.broadcast %c2048_i32_210 : i32 to vector<1x1xi32>
    %764 = arith.ori %729, %763 : vector<1x1xi32>
    %765 = arith.select %762, %729, %764 : vector<1x1xi1>, vector<1x1xi32>
    %c1023_i32 = arith.constant 1023 : i32
    %766 = vector.broadcast %c1023_i32 : i32 to vector<1x1xi32>
    %767 = arith.ori %760, %766 : vector<1x1xi32>
    %c-2147483648_i32_211 = arith.constant -2147483648 : i32
    %768 = vector.broadcast %c-2147483648_i32_211 : i32 to vector<1x1xi32>
    %769 = arith.xori %767, %768 : vector<1x1xi32>
    %c1023_i32_212 = arith.constant 1023 : i32
    %770 = vector.broadcast %c1023_i32_212 : i32 to vector<1x1xi32>
    %771 = arith.ori %765, %770 : vector<1x1xi32>
    %c-2147483648_i32_213 = arith.constant -2147483648 : i32
    %772 = vector.broadcast %c-2147483648_i32_213 : i32 to vector<1x1xi32>
    %773 = arith.xori %771, %772 : vector<1x1xi32>
    %774 = vector.broadcast %769 : vector<1x1xi32> to vector<16x128xi32>
    %775 = arith.cmpi sle, %7, %774 : vector<16x128xi32>
    %776 = arith.extui %775 : vector<16x128xi1> to vector<16x128xi32>
    %777 = vector.broadcast %773 : vector<1x1xi32> to vector<16x128xi32>
    %778 = arith.cmpi sle, %7, %777 : vector<16x128xi32>
    %779 = arith.extui %778 : vector<16x128xi1> to vector<16x128xi32>
    %c65536_i32_214 = arith.constant 65536 : i32
    %780 = vector.broadcast %c65536_i32_214 : i32 to vector<16x128xi32>
    %781 = arith.muli %779, %780 : vector<16x128xi32>
    %782 = arith.addi %776, %781 : vector<16x128xi32>
    %783 = vector.shape_cast %782 : vector<16x128xi32> to vector<1x16x128xi32>
    %cst_215 = arith.constant dense<0> : vector<1xi32>
    %784 = vector.multi_reduction <add>, %783, %cst_215 [1, 2] : vector<1x16x128xi32> to vector<1xi32>
    %785 = vector.shape_cast %784 : vector<1xi32> to vector<1x1x1xi32>
    %786 = vector.extract %785[0, 0, 0] : i32 from vector<1x1x1xi32>
    %787 = vector.broadcast %786 : i32 to vector<1x1xi32>
    %c16_i32_216 = arith.constant 16 : i32
    %788 = vector.broadcast %c16_i32_216 : i32 to vector<1x1xi32>
    %789 = arith.shrsi %787, %788 : vector<1x1xi32>
    %c65535_i32_217 = arith.constant 65535 : i32
    %790 = vector.broadcast %c65535_i32_217 : i32 to vector<1x1xi32>
    %791 = arith.andi %787, %790 : vector<1x1xi32>
    %c103_i32_218 = arith.constant 103 : i32
    %792 = vector.broadcast %c103_i32_218 : i32 to vector<1x1xi32>
    %793 = arith.cmpi sge, %791, %792 : vector<1x1xi32>
    %c1024_i32 = arith.constant 1024 : i32
    %794 = vector.broadcast %c1024_i32 : i32 to vector<1x1xi32>
    %795 = arith.ori %760, %794 : vector<1x1xi32>
    %796 = arith.select %793, %760, %795 : vector<1x1xi1>, vector<1x1xi32>
    %c1945_i32_219 = arith.constant 1945 : i32
    %797 = vector.broadcast %c1945_i32_219 : i32 to vector<1x1xi32>
    %798 = arith.cmpi sge, %789, %797 : vector<1x1xi32>
    %c1024_i32_220 = arith.constant 1024 : i32
    %799 = vector.broadcast %c1024_i32_220 : i32 to vector<1x1xi32>
    %800 = arith.ori %765, %799 : vector<1x1xi32>
    %801 = arith.select %798, %765, %800 : vector<1x1xi1>, vector<1x1xi32>
    %c511_i32 = arith.constant 511 : i32
    %802 = vector.broadcast %c511_i32 : i32 to vector<1x1xi32>
    %803 = arith.ori %796, %802 : vector<1x1xi32>
    %c-2147483648_i32_221 = arith.constant -2147483648 : i32
    %804 = vector.broadcast %c-2147483648_i32_221 : i32 to vector<1x1xi32>
    %805 = arith.xori %803, %804 : vector<1x1xi32>
    %c511_i32_222 = arith.constant 511 : i32
    %806 = vector.broadcast %c511_i32_222 : i32 to vector<1x1xi32>
    %807 = arith.ori %801, %806 : vector<1x1xi32>
    %c-2147483648_i32_223 = arith.constant -2147483648 : i32
    %808 = vector.broadcast %c-2147483648_i32_223 : i32 to vector<1x1xi32>
    %809 = arith.xori %807, %808 : vector<1x1xi32>
    %810 = vector.broadcast %805 : vector<1x1xi32> to vector<16x128xi32>
    %811 = arith.cmpi sle, %7, %810 : vector<16x128xi32>
    %812 = arith.extui %811 : vector<16x128xi1> to vector<16x128xi32>
    %813 = vector.broadcast %809 : vector<1x1xi32> to vector<16x128xi32>
    %814 = arith.cmpi sle, %7, %813 : vector<16x128xi32>
    %815 = arith.extui %814 : vector<16x128xi1> to vector<16x128xi32>
    %c65536_i32_224 = arith.constant 65536 : i32
    %816 = vector.broadcast %c65536_i32_224 : i32 to vector<16x128xi32>
    %817 = arith.muli %815, %816 : vector<16x128xi32>
    %818 = arith.addi %812, %817 : vector<16x128xi32>
    %819 = vector.shape_cast %818 : vector<16x128xi32> to vector<1x16x128xi32>
    %cst_225 = arith.constant dense<0> : vector<1xi32>
    %820 = vector.multi_reduction <add>, %819, %cst_225 [1, 2] : vector<1x16x128xi32> to vector<1xi32>
    %821 = vector.shape_cast %820 : vector<1xi32> to vector<1x1x1xi32>
    %822 = vector.extract %821[0, 0, 0] : i32 from vector<1x1x1xi32>
    %823 = vector.broadcast %822 : i32 to vector<1x1xi32>
    %c16_i32_226 = arith.constant 16 : i32
    %824 = vector.broadcast %c16_i32_226 : i32 to vector<1x1xi32>
    %825 = arith.shrsi %823, %824 : vector<1x1xi32>
    %c65535_i32_227 = arith.constant 65535 : i32
    %826 = vector.broadcast %c65535_i32_227 : i32 to vector<1x1xi32>
    %827 = arith.andi %823, %826 : vector<1x1xi32>
    %c103_i32_228 = arith.constant 103 : i32
    %828 = vector.broadcast %c103_i32_228 : i32 to vector<1x1xi32>
    %829 = arith.cmpi sge, %827, %828 : vector<1x1xi32>
    %c512_i32 = arith.constant 512 : i32
    %830 = vector.broadcast %c512_i32 : i32 to vector<1x1xi32>
    %831 = arith.ori %796, %830 : vector<1x1xi32>
    %832 = arith.select %829, %796, %831 : vector<1x1xi1>, vector<1x1xi32>
    %c1945_i32_229 = arith.constant 1945 : i32
    %833 = vector.broadcast %c1945_i32_229 : i32 to vector<1x1xi32>
    %834 = arith.cmpi sge, %825, %833 : vector<1x1xi32>
    %c512_i32_230 = arith.constant 512 : i32
    %835 = vector.broadcast %c512_i32_230 : i32 to vector<1x1xi32>
    %836 = arith.ori %801, %835 : vector<1x1xi32>
    %837 = arith.select %834, %801, %836 : vector<1x1xi1>, vector<1x1xi32>
    %c255_i32 = arith.constant 255 : i32
    %838 = vector.broadcast %c255_i32 : i32 to vector<1x1xi32>
    %839 = arith.ori %832, %838 : vector<1x1xi32>
    %c-2147483648_i32_231 = arith.constant -2147483648 : i32
    %840 = vector.broadcast %c-2147483648_i32_231 : i32 to vector<1x1xi32>
    %841 = arith.xori %839, %840 : vector<1x1xi32>
    %c255_i32_232 = arith.constant 255 : i32
    %842 = vector.broadcast %c255_i32_232 : i32 to vector<1x1xi32>
    %843 = arith.ori %837, %842 : vector<1x1xi32>
    %c-2147483648_i32_233 = arith.constant -2147483648 : i32
    %844 = vector.broadcast %c-2147483648_i32_233 : i32 to vector<1x1xi32>
    %845 = arith.xori %843, %844 : vector<1x1xi32>
    %846 = vector.broadcast %841 : vector<1x1xi32> to vector<16x128xi32>
    %847 = arith.cmpi sle, %7, %846 : vector<16x128xi32>
    %848 = arith.extui %847 : vector<16x128xi1> to vector<16x128xi32>
    %849 = vector.broadcast %845 : vector<1x1xi32> to vector<16x128xi32>
    %850 = arith.cmpi sle, %7, %849 : vector<16x128xi32>
    %851 = arith.extui %850 : vector<16x128xi1> to vector<16x128xi32>
    %c65536_i32_234 = arith.constant 65536 : i32
    %852 = vector.broadcast %c65536_i32_234 : i32 to vector<16x128xi32>
    %853 = arith.muli %851, %852 : vector<16x128xi32>
    %854 = arith.addi %848, %853 : vector<16x128xi32>
    %855 = vector.shape_cast %854 : vector<16x128xi32> to vector<1x16x128xi32>
    %cst_235 = arith.constant dense<0> : vector<1xi32>
    %856 = vector.multi_reduction <add>, %855, %cst_235 [1, 2] : vector<1x16x128xi32> to vector<1xi32>
    %857 = vector.shape_cast %856 : vector<1xi32> to vector<1x1x1xi32>
    %858 = vector.extract %857[0, 0, 0] : i32 from vector<1x1x1xi32>
    %859 = vector.broadcast %858 : i32 to vector<1x1xi32>
    %c16_i32_236 = arith.constant 16 : i32
    %860 = vector.broadcast %c16_i32_236 : i32 to vector<1x1xi32>
    %861 = arith.shrsi %859, %860 : vector<1x1xi32>
    %c65535_i32_237 = arith.constant 65535 : i32
    %862 = vector.broadcast %c65535_i32_237 : i32 to vector<1x1xi32>
    %863 = arith.andi %859, %862 : vector<1x1xi32>
    %c103_i32_238 = arith.constant 103 : i32
    %864 = vector.broadcast %c103_i32_238 : i32 to vector<1x1xi32>
    %865 = arith.cmpi sge, %863, %864 : vector<1x1xi32>
    %c256_i32 = arith.constant 256 : i32
    %866 = vector.broadcast %c256_i32 : i32 to vector<1x1xi32>
    %867 = arith.ori %832, %866 : vector<1x1xi32>
    %868 = arith.select %865, %832, %867 : vector<1x1xi1>, vector<1x1xi32>
    %c1945_i32_239 = arith.constant 1945 : i32
    %869 = vector.broadcast %c1945_i32_239 : i32 to vector<1x1xi32>
    %870 = arith.cmpi sge, %861, %869 : vector<1x1xi32>
    %c256_i32_240 = arith.constant 256 : i32
    %871 = vector.broadcast %c256_i32_240 : i32 to vector<1x1xi32>
    %872 = arith.ori %837, %871 : vector<1x1xi32>
    %873 = arith.select %870, %837, %872 : vector<1x1xi1>, vector<1x1xi32>
    %c127_i32 = arith.constant 127 : i32
    %874 = vector.broadcast %c127_i32 : i32 to vector<1x1xi32>
    %875 = arith.ori %868, %874 : vector<1x1xi32>
    %c-2147483648_i32_241 = arith.constant -2147483648 : i32
    %876 = vector.broadcast %c-2147483648_i32_241 : i32 to vector<1x1xi32>
    %877 = arith.xori %875, %876 : vector<1x1xi32>
    %c127_i32_242 = arith.constant 127 : i32
    %878 = vector.broadcast %c127_i32_242 : i32 to vector<1x1xi32>
    %879 = arith.ori %873, %878 : vector<1x1xi32>
    %c-2147483648_i32_243 = arith.constant -2147483648 : i32
    %880 = vector.broadcast %c-2147483648_i32_243 : i32 to vector<1x1xi32>
    %881 = arith.xori %879, %880 : vector<1x1xi32>
    %882 = vector.broadcast %877 : vector<1x1xi32> to vector<16x128xi32>
    %883 = arith.cmpi sle, %7, %882 : vector<16x128xi32>
    %884 = arith.extui %883 : vector<16x128xi1> to vector<16x128xi32>
    %885 = vector.broadcast %881 : vector<1x1xi32> to vector<16x128xi32>
    %886 = arith.cmpi sle, %7, %885 : vector<16x128xi32>
    %887 = arith.extui %886 : vector<16x128xi1> to vector<16x128xi32>
    %c65536_i32_244 = arith.constant 65536 : i32
    %888 = vector.broadcast %c65536_i32_244 : i32 to vector<16x128xi32>
    %889 = arith.muli %887, %888 : vector<16x128xi32>
    %890 = arith.addi %884, %889 : vector<16x128xi32>
    %891 = vector.shape_cast %890 : vector<16x128xi32> to vector<1x16x128xi32>
    %cst_245 = arith.constant dense<0> : vector<1xi32>
    %892 = vector.multi_reduction <add>, %891, %cst_245 [1, 2] : vector<1x16x128xi32> to vector<1xi32>
    %893 = vector.shape_cast %892 : vector<1xi32> to vector<1x1x1xi32>
    %894 = vector.extract %893[0, 0, 0] : i32 from vector<1x1x1xi32>
    %895 = vector.broadcast %894 : i32 to vector<1x1xi32>
    %c16_i32_246 = arith.constant 16 : i32
    %896 = vector.broadcast %c16_i32_246 : i32 to vector<1x1xi32>
    %897 = arith.shrsi %895, %896 : vector<1x1xi32>
    %c65535_i32_247 = arith.constant 65535 : i32
    %898 = vector.broadcast %c65535_i32_247 : i32 to vector<1x1xi32>
    %899 = arith.andi %895, %898 : vector<1x1xi32>
    %c103_i32_248 = arith.constant 103 : i32
    %900 = vector.broadcast %c103_i32_248 : i32 to vector<1x1xi32>
    %901 = arith.cmpi sge, %899, %900 : vector<1x1xi32>
    %c128_i32 = arith.constant 128 : i32
    %902 = vector.broadcast %c128_i32 : i32 to vector<1x1xi32>
    %903 = arith.ori %868, %902 : vector<1x1xi32>
    %904 = arith.select %901, %868, %903 : vector<1x1xi1>, vector<1x1xi32>
    %c1945_i32_249 = arith.constant 1945 : i32
    %905 = vector.broadcast %c1945_i32_249 : i32 to vector<1x1xi32>
    %906 = arith.cmpi sge, %897, %905 : vector<1x1xi32>
    %c128_i32_250 = arith.constant 128 : i32
    %907 = vector.broadcast %c128_i32_250 : i32 to vector<1x1xi32>
    %908 = arith.ori %873, %907 : vector<1x1xi32>
    %909 = arith.select %906, %873, %908 : vector<1x1xi1>, vector<1x1xi32>
    %c63_i32 = arith.constant 63 : i32
    %910 = vector.broadcast %c63_i32 : i32 to vector<1x1xi32>
    %911 = arith.ori %904, %910 : vector<1x1xi32>
    %c-2147483648_i32_251 = arith.constant -2147483648 : i32
    %912 = vector.broadcast %c-2147483648_i32_251 : i32 to vector<1x1xi32>
    %913 = arith.xori %911, %912 : vector<1x1xi32>
    %c63_i32_252 = arith.constant 63 : i32
    %914 = vector.broadcast %c63_i32_252 : i32 to vector<1x1xi32>
    %915 = arith.ori %909, %914 : vector<1x1xi32>
    %c-2147483648_i32_253 = arith.constant -2147483648 : i32
    %916 = vector.broadcast %c-2147483648_i32_253 : i32 to vector<1x1xi32>
    %917 = arith.xori %915, %916 : vector<1x1xi32>
    %918 = vector.broadcast %913 : vector<1x1xi32> to vector<16x128xi32>
    %919 = arith.cmpi sle, %7, %918 : vector<16x128xi32>
    %920 = arith.extui %919 : vector<16x128xi1> to vector<16x128xi32>
    %921 = vector.broadcast %917 : vector<1x1xi32> to vector<16x128xi32>
    %922 = arith.cmpi sle, %7, %921 : vector<16x128xi32>
    %923 = arith.extui %922 : vector<16x128xi1> to vector<16x128xi32>
    %c65536_i32_254 = arith.constant 65536 : i32
    %924 = vector.broadcast %c65536_i32_254 : i32 to vector<16x128xi32>
    %925 = arith.muli %923, %924 : vector<16x128xi32>
    %926 = arith.addi %920, %925 : vector<16x128xi32>
    %927 = vector.shape_cast %926 : vector<16x128xi32> to vector<1x16x128xi32>
    %cst_255 = arith.constant dense<0> : vector<1xi32>
    %928 = vector.multi_reduction <add>, %927, %cst_255 [1, 2] : vector<1x16x128xi32> to vector<1xi32>
    %929 = vector.shape_cast %928 : vector<1xi32> to vector<1x1x1xi32>
    %930 = vector.extract %929[0, 0, 0] : i32 from vector<1x1x1xi32>
    %931 = vector.broadcast %930 : i32 to vector<1x1xi32>
    %c16_i32_256 = arith.constant 16 : i32
    %932 = vector.broadcast %c16_i32_256 : i32 to vector<1x1xi32>
    %933 = arith.shrsi %931, %932 : vector<1x1xi32>
    %c65535_i32_257 = arith.constant 65535 : i32
    %934 = vector.broadcast %c65535_i32_257 : i32 to vector<1x1xi32>
    %935 = arith.andi %931, %934 : vector<1x1xi32>
    %c103_i32_258 = arith.constant 103 : i32
    %936 = vector.broadcast %c103_i32_258 : i32 to vector<1x1xi32>
    %937 = arith.cmpi sge, %935, %936 : vector<1x1xi32>
    %c64_i32 = arith.constant 64 : i32
    %938 = vector.broadcast %c64_i32 : i32 to vector<1x1xi32>
    %939 = arith.ori %904, %938 : vector<1x1xi32>
    %940 = arith.select %937, %904, %939 : vector<1x1xi1>, vector<1x1xi32>
    %c1945_i32_259 = arith.constant 1945 : i32
    %941 = vector.broadcast %c1945_i32_259 : i32 to vector<1x1xi32>
    %942 = arith.cmpi sge, %933, %941 : vector<1x1xi32>
    %c64_i32_260 = arith.constant 64 : i32
    %943 = vector.broadcast %c64_i32_260 : i32 to vector<1x1xi32>
    %944 = arith.ori %909, %943 : vector<1x1xi32>
    %945 = arith.select %942, %909, %944 : vector<1x1xi1>, vector<1x1xi32>
    %c31_i32 = arith.constant 31 : i32
    %946 = vector.broadcast %c31_i32 : i32 to vector<1x1xi32>
    %947 = arith.ori %940, %946 : vector<1x1xi32>
    %c-2147483648_i32_261 = arith.constant -2147483648 : i32
    %948 = vector.broadcast %c-2147483648_i32_261 : i32 to vector<1x1xi32>
    %949 = arith.xori %947, %948 : vector<1x1xi32>
    %c31_i32_262 = arith.constant 31 : i32
    %950 = vector.broadcast %c31_i32_262 : i32 to vector<1x1xi32>
    %951 = arith.ori %945, %950 : vector<1x1xi32>
    %c-2147483648_i32_263 = arith.constant -2147483648 : i32
    %952 = vector.broadcast %c-2147483648_i32_263 : i32 to vector<1x1xi32>
    %953 = arith.xori %951, %952 : vector<1x1xi32>
    %954 = vector.broadcast %949 : vector<1x1xi32> to vector<16x128xi32>
    %955 = arith.cmpi sle, %7, %954 : vector<16x128xi32>
    %956 = arith.extui %955 : vector<16x128xi1> to vector<16x128xi32>
    %957 = vector.broadcast %953 : vector<1x1xi32> to vector<16x128xi32>
    %958 = arith.cmpi sle, %7, %957 : vector<16x128xi32>
    %959 = arith.extui %958 : vector<16x128xi1> to vector<16x128xi32>
    %c65536_i32_264 = arith.constant 65536 : i32
    %960 = vector.broadcast %c65536_i32_264 : i32 to vector<16x128xi32>
    %961 = arith.muli %959, %960 : vector<16x128xi32>
    %962 = arith.addi %956, %961 : vector<16x128xi32>
    %963 = vector.shape_cast %962 : vector<16x128xi32> to vector<1x16x128xi32>
    %cst_265 = arith.constant dense<0> : vector<1xi32>
    %964 = vector.multi_reduction <add>, %963, %cst_265 [1, 2] : vector<1x16x128xi32> to vector<1xi32>
    %965 = vector.shape_cast %964 : vector<1xi32> to vector<1x1x1xi32>
    %966 = vector.extract %965[0, 0, 0] : i32 from vector<1x1x1xi32>
    %967 = vector.broadcast %966 : i32 to vector<1x1xi32>
    %c16_i32_266 = arith.constant 16 : i32
    %968 = vector.broadcast %c16_i32_266 : i32 to vector<1x1xi32>
    %969 = arith.shrsi %967, %968 : vector<1x1xi32>
    %c65535_i32_267 = arith.constant 65535 : i32
    %970 = vector.broadcast %c65535_i32_267 : i32 to vector<1x1xi32>
    %971 = arith.andi %967, %970 : vector<1x1xi32>
    %c103_i32_268 = arith.constant 103 : i32
    %972 = vector.broadcast %c103_i32_268 : i32 to vector<1x1xi32>
    %973 = arith.cmpi sge, %971, %972 : vector<1x1xi32>
    %c32_i32 = arith.constant 32 : i32
    %974 = vector.broadcast %c32_i32 : i32 to vector<1x1xi32>
    %975 = arith.ori %940, %974 : vector<1x1xi32>
    %976 = arith.select %973, %940, %975 : vector<1x1xi1>, vector<1x1xi32>
    %c1945_i32_269 = arith.constant 1945 : i32
    %977 = vector.broadcast %c1945_i32_269 : i32 to vector<1x1xi32>
    %978 = arith.cmpi sge, %969, %977 : vector<1x1xi32>
    %c32_i32_270 = arith.constant 32 : i32
    %979 = vector.broadcast %c32_i32_270 : i32 to vector<1x1xi32>
    %980 = arith.ori %945, %979 : vector<1x1xi32>
    %981 = arith.select %978, %945, %980 : vector<1x1xi1>, vector<1x1xi32>
    %c15_i32 = arith.constant 15 : i32
    %982 = vector.broadcast %c15_i32 : i32 to vector<1x1xi32>
    %983 = arith.ori %976, %982 : vector<1x1xi32>
    %c-2147483648_i32_271 = arith.constant -2147483648 : i32
    %984 = vector.broadcast %c-2147483648_i32_271 : i32 to vector<1x1xi32>
    %985 = arith.xori %983, %984 : vector<1x1xi32>
    %c15_i32_272 = arith.constant 15 : i32
    %986 = vector.broadcast %c15_i32_272 : i32 to vector<1x1xi32>
    %987 = arith.ori %981, %986 : vector<1x1xi32>
    %c-2147483648_i32_273 = arith.constant -2147483648 : i32
    %988 = vector.broadcast %c-2147483648_i32_273 : i32 to vector<1x1xi32>
    %989 = arith.xori %987, %988 : vector<1x1xi32>
    %990 = vector.broadcast %985 : vector<1x1xi32> to vector<16x128xi32>
    %991 = arith.cmpi sle, %7, %990 : vector<16x128xi32>
    %992 = arith.extui %991 : vector<16x128xi1> to vector<16x128xi32>
    %993 = vector.broadcast %989 : vector<1x1xi32> to vector<16x128xi32>
    %994 = arith.cmpi sle, %7, %993 : vector<16x128xi32>
    %995 = arith.extui %994 : vector<16x128xi1> to vector<16x128xi32>
    %c65536_i32_274 = arith.constant 65536 : i32
    %996 = vector.broadcast %c65536_i32_274 : i32 to vector<16x128xi32>
    %997 = arith.muli %995, %996 : vector<16x128xi32>
    %998 = arith.addi %992, %997 : vector<16x128xi32>
    %999 = vector.shape_cast %998 : vector<16x128xi32> to vector<1x16x128xi32>
    %cst_275 = arith.constant dense<0> : vector<1xi32>
    %1000 = vector.multi_reduction <add>, %999, %cst_275 [1, 2] : vector<1x16x128xi32> to vector<1xi32>
    %1001 = vector.shape_cast %1000 : vector<1xi32> to vector<1x1x1xi32>
    %1002 = vector.extract %1001[0, 0, 0] : i32 from vector<1x1x1xi32>
    %1003 = vector.broadcast %1002 : i32 to vector<1x1xi32>
    %c16_i32_276 = arith.constant 16 : i32
    %1004 = vector.broadcast %c16_i32_276 : i32 to vector<1x1xi32>
    %1005 = arith.shrsi %1003, %1004 : vector<1x1xi32>
    %c65535_i32_277 = arith.constant 65535 : i32
    %1006 = vector.broadcast %c65535_i32_277 : i32 to vector<1x1xi32>
    %1007 = arith.andi %1003, %1006 : vector<1x1xi32>
    %c103_i32_278 = arith.constant 103 : i32
    %1008 = vector.broadcast %c103_i32_278 : i32 to vector<1x1xi32>
    %1009 = arith.cmpi sge, %1007, %1008 : vector<1x1xi32>
    %c16_i32_279 = arith.constant 16 : i32
    %1010 = vector.broadcast %c16_i32_279 : i32 to vector<1x1xi32>
    %1011 = arith.ori %976, %1010 : vector<1x1xi32>
    %1012 = arith.select %1009, %976, %1011 : vector<1x1xi1>, vector<1x1xi32>
    %c1945_i32_280 = arith.constant 1945 : i32
    %1013 = vector.broadcast %c1945_i32_280 : i32 to vector<1x1xi32>
    %1014 = arith.cmpi sge, %1005, %1013 : vector<1x1xi32>
    %c16_i32_281 = arith.constant 16 : i32
    %1015 = vector.broadcast %c16_i32_281 : i32 to vector<1x1xi32>
    %1016 = arith.ori %981, %1015 : vector<1x1xi32>
    %1017 = arith.select %1014, %981, %1016 : vector<1x1xi1>, vector<1x1xi32>
    %c7_i32 = arith.constant 7 : i32
    %1018 = vector.broadcast %c7_i32 : i32 to vector<1x1xi32>
    %1019 = arith.ori %1012, %1018 : vector<1x1xi32>
    %c-2147483648_i32_282 = arith.constant -2147483648 : i32
    %1020 = vector.broadcast %c-2147483648_i32_282 : i32 to vector<1x1xi32>
    %1021 = arith.xori %1019, %1020 : vector<1x1xi32>
    %c7_i32_283 = arith.constant 7 : i32
    %1022 = vector.broadcast %c7_i32_283 : i32 to vector<1x1xi32>
    %1023 = arith.ori %1017, %1022 : vector<1x1xi32>
    %c-2147483648_i32_284 = arith.constant -2147483648 : i32
    %1024 = vector.broadcast %c-2147483648_i32_284 : i32 to vector<1x1xi32>
    %1025 = arith.xori %1023, %1024 : vector<1x1xi32>
    %1026 = vector.broadcast %1021 : vector<1x1xi32> to vector<16x128xi32>
    %1027 = arith.cmpi sle, %7, %1026 : vector<16x128xi32>
    %1028 = arith.extui %1027 : vector<16x128xi1> to vector<16x128xi32>
    %1029 = vector.broadcast %1025 : vector<1x1xi32> to vector<16x128xi32>
    %1030 = arith.cmpi sle, %7, %1029 : vector<16x128xi32>
    %1031 = arith.extui %1030 : vector<16x128xi1> to vector<16x128xi32>
    %c65536_i32_285 = arith.constant 65536 : i32
    %1032 = vector.broadcast %c65536_i32_285 : i32 to vector<16x128xi32>
    %1033 = arith.muli %1031, %1032 : vector<16x128xi32>
    %1034 = arith.addi %1028, %1033 : vector<16x128xi32>
    %1035 = vector.shape_cast %1034 : vector<16x128xi32> to vector<1x16x128xi32>
    %cst_286 = arith.constant dense<0> : vector<1xi32>
    %1036 = vector.multi_reduction <add>, %1035, %cst_286 [1, 2] : vector<1x16x128xi32> to vector<1xi32>
    %1037 = vector.shape_cast %1036 : vector<1xi32> to vector<1x1x1xi32>
    %1038 = vector.extract %1037[0, 0, 0] : i32 from vector<1x1x1xi32>
    %1039 = vector.broadcast %1038 : i32 to vector<1x1xi32>
    %c16_i32_287 = arith.constant 16 : i32
    %1040 = vector.broadcast %c16_i32_287 : i32 to vector<1x1xi32>
    %1041 = arith.shrsi %1039, %1040 : vector<1x1xi32>
    %c65535_i32_288 = arith.constant 65535 : i32
    %1042 = vector.broadcast %c65535_i32_288 : i32 to vector<1x1xi32>
    %1043 = arith.andi %1039, %1042 : vector<1x1xi32>
    %c103_i32_289 = arith.constant 103 : i32
    %1044 = vector.broadcast %c103_i32_289 : i32 to vector<1x1xi32>
    %1045 = arith.cmpi sge, %1043, %1044 : vector<1x1xi32>
    %c8_i32 = arith.constant 8 : i32
    %1046 = vector.broadcast %c8_i32 : i32 to vector<1x1xi32>
    %1047 = arith.ori %1012, %1046 : vector<1x1xi32>
    %1048 = arith.select %1045, %1012, %1047 : vector<1x1xi1>, vector<1x1xi32>
    %c1945_i32_290 = arith.constant 1945 : i32
    %1049 = vector.broadcast %c1945_i32_290 : i32 to vector<1x1xi32>
    %1050 = arith.cmpi sge, %1041, %1049 : vector<1x1xi32>
    %c8_i32_291 = arith.constant 8 : i32
    %1051 = vector.broadcast %c8_i32_291 : i32 to vector<1x1xi32>
    %1052 = arith.ori %1017, %1051 : vector<1x1xi32>
    %1053 = arith.select %1050, %1017, %1052 : vector<1x1xi1>, vector<1x1xi32>
    %c3_i32 = arith.constant 3 : i32
    %1054 = vector.broadcast %c3_i32 : i32 to vector<1x1xi32>
    %1055 = arith.ori %1048, %1054 : vector<1x1xi32>
    %c-2147483648_i32_292 = arith.constant -2147483648 : i32
    %1056 = vector.broadcast %c-2147483648_i32_292 : i32 to vector<1x1xi32>
    %1057 = arith.xori %1055, %1056 : vector<1x1xi32>
    %c3_i32_293 = arith.constant 3 : i32
    %1058 = vector.broadcast %c3_i32_293 : i32 to vector<1x1xi32>
    %1059 = arith.ori %1053, %1058 : vector<1x1xi32>
    %c-2147483648_i32_294 = arith.constant -2147483648 : i32
    %1060 = vector.broadcast %c-2147483648_i32_294 : i32 to vector<1x1xi32>
    %1061 = arith.xori %1059, %1060 : vector<1x1xi32>
    %1062 = vector.broadcast %1057 : vector<1x1xi32> to vector<16x128xi32>
    %1063 = arith.cmpi sle, %7, %1062 : vector<16x128xi32>
    %1064 = arith.extui %1063 : vector<16x128xi1> to vector<16x128xi32>
    %1065 = vector.broadcast %1061 : vector<1x1xi32> to vector<16x128xi32>
    %1066 = arith.cmpi sle, %7, %1065 : vector<16x128xi32>
    %1067 = arith.extui %1066 : vector<16x128xi1> to vector<16x128xi32>
    %c65536_i32_295 = arith.constant 65536 : i32
    %1068 = vector.broadcast %c65536_i32_295 : i32 to vector<16x128xi32>
    %1069 = arith.muli %1067, %1068 : vector<16x128xi32>
    %1070 = arith.addi %1064, %1069 : vector<16x128xi32>
    %1071 = vector.shape_cast %1070 : vector<16x128xi32> to vector<1x16x128xi32>
    %cst_296 = arith.constant dense<0> : vector<1xi32>
    %1072 = vector.multi_reduction <add>, %1071, %cst_296 [1, 2] : vector<1x16x128xi32> to vector<1xi32>
    %1073 = vector.shape_cast %1072 : vector<1xi32> to vector<1x1x1xi32>
    %1074 = vector.extract %1073[0, 0, 0] : i32 from vector<1x1x1xi32>
    %1075 = vector.broadcast %1074 : i32 to vector<1x1xi32>
    %c16_i32_297 = arith.constant 16 : i32
    %1076 = vector.broadcast %c16_i32_297 : i32 to vector<1x1xi32>
    %1077 = arith.shrsi %1075, %1076 : vector<1x1xi32>
    %c65535_i32_298 = arith.constant 65535 : i32
    %1078 = vector.broadcast %c65535_i32_298 : i32 to vector<1x1xi32>
    %1079 = arith.andi %1075, %1078 : vector<1x1xi32>
    %c103_i32_299 = arith.constant 103 : i32
    %1080 = vector.broadcast %c103_i32_299 : i32 to vector<1x1xi32>
    %1081 = arith.cmpi sge, %1079, %1080 : vector<1x1xi32>
    %c4_i32 = arith.constant 4 : i32
    %1082 = vector.broadcast %c4_i32 : i32 to vector<1x1xi32>
    %1083 = arith.ori %1048, %1082 : vector<1x1xi32>
    %1084 = arith.select %1081, %1048, %1083 : vector<1x1xi1>, vector<1x1xi32>
    %c1945_i32_300 = arith.constant 1945 : i32
    %1085 = vector.broadcast %c1945_i32_300 : i32 to vector<1x1xi32>
    %1086 = arith.cmpi sge, %1077, %1085 : vector<1x1xi32>
    %c4_i32_301 = arith.constant 4 : i32
    %1087 = vector.broadcast %c4_i32_301 : i32 to vector<1x1xi32>
    %1088 = arith.ori %1053, %1087 : vector<1x1xi32>
    %1089 = arith.select %1086, %1053, %1088 : vector<1x1xi1>, vector<1x1xi32>
    %c1_i32 = arith.constant 1 : i32
    %1090 = vector.broadcast %c1_i32 : i32 to vector<1x1xi32>
    %1091 = arith.ori %1084, %1090 : vector<1x1xi32>
    %c-2147483648_i32_302 = arith.constant -2147483648 : i32
    %1092 = vector.broadcast %c-2147483648_i32_302 : i32 to vector<1x1xi32>
    %1093 = arith.xori %1091, %1092 : vector<1x1xi32>
    %c1_i32_303 = arith.constant 1 : i32
    %1094 = vector.broadcast %c1_i32_303 : i32 to vector<1x1xi32>
    %1095 = arith.ori %1089, %1094 : vector<1x1xi32>
    %c-2147483648_i32_304 = arith.constant -2147483648 : i32
    %1096 = vector.broadcast %c-2147483648_i32_304 : i32 to vector<1x1xi32>
    %1097 = arith.xori %1095, %1096 : vector<1x1xi32>
    %1098 = vector.broadcast %1093 : vector<1x1xi32> to vector<16x128xi32>
    %1099 = arith.cmpi sle, %7, %1098 : vector<16x128xi32>
    %1100 = arith.extui %1099 : vector<16x128xi1> to vector<16x128xi32>
    %1101 = vector.broadcast %1097 : vector<1x1xi32> to vector<16x128xi32>
    %1102 = arith.cmpi sle, %7, %1101 : vector<16x128xi32>
    %1103 = arith.extui %1102 : vector<16x128xi1> to vector<16x128xi32>
    %c65536_i32_305 = arith.constant 65536 : i32
    %1104 = vector.broadcast %c65536_i32_305 : i32 to vector<16x128xi32>
    %1105 = arith.muli %1103, %1104 : vector<16x128xi32>
    %1106 = arith.addi %1100, %1105 : vector<16x128xi32>
    %1107 = vector.shape_cast %1106 : vector<16x128xi32> to vector<1x16x128xi32>
    %cst_306 = arith.constant dense<0> : vector<1xi32>
    %1108 = vector.multi_reduction <add>, %1107, %cst_306 [1, 2] : vector<1x16x128xi32> to vector<1xi32>
    %1109 = vector.shape_cast %1108 : vector<1xi32> to vector<1x1x1xi32>
    %1110 = vector.extract %1109[0, 0, 0] : i32 from vector<1x1x1xi32>
    %1111 = vector.broadcast %1110 : i32 to vector<1x1xi32>
    %c16_i32_307 = arith.constant 16 : i32
    %1112 = vector.broadcast %c16_i32_307 : i32 to vector<1x1xi32>
    %1113 = arith.shrsi %1111, %1112 : vector<1x1xi32>
    %c65535_i32_308 = arith.constant 65535 : i32
    %1114 = vector.broadcast %c65535_i32_308 : i32 to vector<1x1xi32>
    %1115 = arith.andi %1111, %1114 : vector<1x1xi32>
    %c103_i32_309 = arith.constant 103 : i32
    %1116 = vector.broadcast %c103_i32_309 : i32 to vector<1x1xi32>
    %1117 = arith.cmpi sge, %1115, %1116 : vector<1x1xi32>
    %c2_i32 = arith.constant 2 : i32
    %1118 = vector.broadcast %c2_i32 : i32 to vector<1x1xi32>
    %1119 = arith.ori %1084, %1118 : vector<1x1xi32>
    %1120 = arith.select %1117, %1084, %1119 : vector<1x1xi1>, vector<1x1xi32>
    %c1945_i32_310 = arith.constant 1945 : i32
    %1121 = vector.broadcast %c1945_i32_310 : i32 to vector<1x1xi32>
    %1122 = arith.cmpi sge, %1113, %1121 : vector<1x1xi32>
    %c2_i32_311 = arith.constant 2 : i32
    %1123 = vector.broadcast %c2_i32_311 : i32 to vector<1x1xi32>
    %1124 = arith.ori %1089, %1123 : vector<1x1xi32>
    %1125 = arith.select %1122, %1089, %1124 : vector<1x1xi1>, vector<1x1xi32>
    %c0_i32_312 = arith.constant 0 : i32
    %1126 = vector.broadcast %c0_i32_312 : i32 to vector<1x1xi32>
    %1127 = arith.ori %1120, %1126 : vector<1x1xi32>
    %c-2147483648_i32_313 = arith.constant -2147483648 : i32
    %1128 = vector.broadcast %c-2147483648_i32_313 : i32 to vector<1x1xi32>
    %1129 = arith.xori %1127, %1128 : vector<1x1xi32>
    %c0_i32_314 = arith.constant 0 : i32
    %1130 = vector.broadcast %c0_i32_314 : i32 to vector<1x1xi32>
    %1131 = arith.ori %1125, %1130 : vector<1x1xi32>
    %c-2147483648_i32_315 = arith.constant -2147483648 : i32
    %1132 = vector.broadcast %c-2147483648_i32_315 : i32 to vector<1x1xi32>
    %1133 = arith.xori %1131, %1132 : vector<1x1xi32>
    %1134 = vector.broadcast %1129 : vector<1x1xi32> to vector<16x128xi32>
    %1135 = arith.cmpi sle, %7, %1134 : vector<16x128xi32>
    %1136 = arith.extui %1135 : vector<16x128xi1> to vector<16x128xi32>
    %1137 = vector.broadcast %1133 : vector<1x1xi32> to vector<16x128xi32>
    %1138 = arith.cmpi sle, %7, %1137 : vector<16x128xi32>
    %1139 = arith.extui %1138 : vector<16x128xi1> to vector<16x128xi32>
    %c65536_i32_316 = arith.constant 65536 : i32
    %1140 = vector.broadcast %c65536_i32_316 : i32 to vector<16x128xi32>
    %1141 = arith.muli %1139, %1140 : vector<16x128xi32>
    %1142 = arith.addi %1136, %1141 : vector<16x128xi32>
    %1143 = vector.shape_cast %1142 : vector<16x128xi32> to vector<1x16x128xi32>
    %cst_317 = arith.constant dense<0> : vector<1xi32>
    %1144 = vector.multi_reduction <add>, %1143, %cst_317 [1, 2] : vector<1x16x128xi32> to vector<1xi32>
    %1145 = vector.shape_cast %1144 : vector<1xi32> to vector<1x1x1xi32>
    %1146 = vector.extract %1145[0, 0, 0] : i32 from vector<1x1x1xi32>
    %1147 = vector.broadcast %1146 : i32 to vector<1x1xi32>
    %c16_i32_318 = arith.constant 16 : i32
    %1148 = vector.broadcast %c16_i32_318 : i32 to vector<1x1xi32>
    %1149 = arith.shrsi %1147, %1148 : vector<1x1xi32>
    %c65535_i32_319 = arith.constant 65535 : i32
    %1150 = vector.broadcast %c65535_i32_319 : i32 to vector<1x1xi32>
    %1151 = arith.andi %1147, %1150 : vector<1x1xi32>
    %c103_i32_320 = arith.constant 103 : i32
    %1152 = vector.broadcast %c103_i32_320 : i32 to vector<1x1xi32>
    %1153 = arith.cmpi sge, %1151, %1152 : vector<1x1xi32>
    %c1_i32_321 = arith.constant 1 : i32
    %1154 = vector.broadcast %c1_i32_321 : i32 to vector<1x1xi32>
    %1155 = arith.ori %1120, %1154 : vector<1x1xi32>
    %1156 = arith.select %1153, %1120, %1155 : vector<1x1xi1>, vector<1x1xi32>
    %c1945_i32_322 = arith.constant 1945 : i32
    %1157 = vector.broadcast %c1945_i32_322 : i32 to vector<1x1xi32>
    %1158 = arith.cmpi sge, %1149, %1157 : vector<1x1xi32>
    %c1_i32_323 = arith.constant 1 : i32
    %1159 = vector.broadcast %c1_i32_323 : i32 to vector<1x1xi32>
    %1160 = arith.ori %1125, %1159 : vector<1x1xi32>
    %1161 = arith.select %1158, %1125, %1160 : vector<1x1xi1>, vector<1x1xi32>
    %c-2147483648_i32_324 = arith.constant -2147483648 : i32
    %1162 = vector.broadcast %c-2147483648_i32_324 : i32 to vector<1x1xi32>
    %1163 = arith.xori %1156, %1162 : vector<1x1xi32>
    %c-2147483648_i32_325 = arith.constant -2147483648 : i32
    %1164 = vector.broadcast %c-2147483648_i32_325 : i32 to vector<1x1xi32>
    %1165 = arith.xori %1161, %1164 : vector<1x1xi32>
    %c0_i32_326 = arith.constant 0 : i32
    %1166 = vector.broadcast %c0_i32_326 : i32 to vector<1x1xi32>
    %1167 = arith.cmpi sge, %1163, %1166 : vector<1x1xi32>
    %c-2147483648_i32_327 = arith.constant -2147483648 : i32
    %1168 = vector.broadcast %c-2147483648_i32_327 : i32 to vector<1x1xi32>
    %1169 = arith.xori %1163, %1168 : vector<1x1xi32>
    %cst_328 = arith.constant dense<-1> : vector<1x1xi32>
    %1170 = arith.xori %1169, %cst_328 : vector<1x1xi32>
    %1171 = arith.select %1167, %1163, %1170 : vector<1x1xi1>, vector<1x1xi32>
    %1172 = tpu.bitcast %1171 : vector<1x1xi32> -> vector<1x1xf32>
    %c0_i32_329 = arith.constant 0 : i32
    %1173 = vector.broadcast %c0_i32_329 : i32 to vector<1x1xi32>
    %1174 = arith.cmpi sge, %1165, %1173 : vector<1x1xi32>
    %c-2147483648_i32_330 = arith.constant -2147483648 : i32
    %1175 = vector.broadcast %c-2147483648_i32_330 : i32 to vector<1x1xi32>
    %1176 = arith.xori %1165, %1175 : vector<1x1xi32>
    %cst_331 = arith.constant dense<-1> : vector<1x1xi32>
    %1177 = arith.xori %1176, %cst_331 : vector<1x1xi32>
    %1178 = arith.select %1174, %1165, %1177 : vector<1x1xi1>, vector<1x1xi32>
    %1179 = tpu.bitcast %1178 : vector<1x1xi32> -> vector<1x1xf32>
    %1180 = vector.broadcast %1163 : vector<1x1xi32> to vector<16x128xi32>
    %1181 = arith.cmpi sle, %7, %1180 : vector<16x128xi32>
    %1182 = arith.extui %1181 : vector<16x128xi1> to vector<16x128xi32>
    %1183 = vector.shape_cast %1182 : vector<16x128xi32> to vector<1x16x128xi32>
    %cst_332 = arith.constant dense<0> : vector<1xi32>
    %1184 = vector.multi_reduction <add>, %1183, %cst_332 [1, 2] : vector<1x16x128xi32> to vector<1xi32>
    %1185 = vector.shape_cast %1184 : vector<1xi32> to vector<1x1x1xi32>
    %1186 = vector.extract %1185[0, 0, 0] : i32 from vector<1x1x1xi32>
    %1187 = vector.broadcast %1186 : i32 to vector<1x1xi32>
    %c2147483647_i32_333 = arith.constant 2147483647 : i32
    %1188 = vector.broadcast %c2147483647_i32_333 : i32 to vector<16x128xi32>
    %1189 = arith.select %1181, %1188, %7 : vector<16x128xi1>, vector<16x128xi32>
    %1190 = vector.shape_cast %1189 : vector<16x128xi32> to vector<1x16x128xi32>
    %cst_334 = arith.constant dense<2147483647> : vector<1xi32>
    %1191 = vector.multi_reduction <minsi>, %1190, %cst_334 [1, 2] : vector<1x16x128xi32> to vector<1xi32>
    %1192 = vector.shape_cast %1191 : vector<1xi32> to vector<1x1x1xi32>
    %1193 = vector.extract %1192[0, 0, 0] : i32 from vector<1x1x1xi32>
    %1194 = vector.broadcast %1193 : i32 to vector<1x1xi32>
    %c104_i32 = arith.constant 104 : i32
    %1195 = vector.broadcast %c104_i32 : i32 to vector<1x1xi32>
    %1196 = arith.cmpi sge, %1187, %1195 : vector<1x1xi32>
    %c0_i32_335 = arith.constant 0 : i32
    %1197 = vector.broadcast %c0_i32_335 : i32 to vector<1x1xi32>
    %1198 = arith.cmpi sge, %1194, %1197 : vector<1x1xi32>
    %c-2147483648_i32_336 = arith.constant -2147483648 : i32
    %1199 = vector.broadcast %c-2147483648_i32_336 : i32 to vector<1x1xi32>
    %1200 = arith.xori %1194, %1199 : vector<1x1xi32>
    %cst_337 = arith.constant dense<-1> : vector<1x1xi32>
    %1201 = arith.xori %1200, %cst_337 : vector<1x1xi32>
    %1202 = arith.select %1198, %1194, %1201 : vector<1x1xi1>, vector<1x1xi32>
    %1203 = tpu.bitcast %1202 : vector<1x1xi32> -> vector<1x1xf32>
    %1204 = arith.select %1196, %1172, %1203 : vector<1x1xi1>, vector<1x1xf32>
    %1205 = arith.subf %1204, %1172 : vector<1x1xf32>
    %cst_338 = arith.constant 3.500000e-01 : f32
    %1206 = vector.broadcast %cst_338 : f32 to vector<1x1xf32>
    %1207 = arith.mulf %1206, %1205 : vector<1x1xf32>
    %1208 = arith.addf %1172, %1207 : vector<1x1xf32>
    %1209 = vector.broadcast %1165 : vector<1x1xi32> to vector<16x128xi32>
    %1210 = arith.cmpi sle, %7, %1209 : vector<16x128xi32>
    %1211 = arith.extui %1210 : vector<16x128xi1> to vector<16x128xi32>
    %1212 = vector.shape_cast %1211 : vector<16x128xi32> to vector<1x16x128xi32>
    %cst_339 = arith.constant dense<0> : vector<1xi32>
    %1213 = vector.multi_reduction <add>, %1212, %cst_339 [1, 2] : vector<1x16x128xi32> to vector<1xi32>
    %1214 = vector.shape_cast %1213 : vector<1xi32> to vector<1x1x1xi32>
    %1215 = vector.extract %1214[0, 0, 0] : i32 from vector<1x1x1xi32>
    %1216 = vector.broadcast %1215 : i32 to vector<1x1xi32>
    %c2147483647_i32_340 = arith.constant 2147483647 : i32
    %1217 = vector.broadcast %c2147483647_i32_340 : i32 to vector<16x128xi32>
    %1218 = arith.select %1210, %1217, %7 : vector<16x128xi1>, vector<16x128xi32>
    %1219 = vector.shape_cast %1218 : vector<16x128xi32> to vector<1x16x128xi32>
    %cst_341 = arith.constant dense<2147483647> : vector<1xi32>
    %1220 = vector.multi_reduction <minsi>, %1219, %cst_341 [1, 2] : vector<1x16x128xi32> to vector<1xi32>
    %1221 = vector.shape_cast %1220 : vector<1xi32> to vector<1x1x1xi32>
    %1222 = vector.extract %1221[0, 0, 0] : i32 from vector<1x1x1xi32>
    %1223 = vector.broadcast %1222 : i32 to vector<1x1xi32>
    %c1946_i32 = arith.constant 1946 : i32
    %1224 = vector.broadcast %c1946_i32 : i32 to vector<1x1xi32>
    %1225 = arith.cmpi sge, %1216, %1224 : vector<1x1xi32>
    %c0_i32_342 = arith.constant 0 : i32
    %1226 = vector.broadcast %c0_i32_342 : i32 to vector<1x1xi32>
    %1227 = arith.cmpi sge, %1223, %1226 : vector<1x1xi32>
    %c-2147483648_i32_343 = arith.constant -2147483648 : i32
    %1228 = vector.broadcast %c-2147483648_i32_343 : i32 to vector<1x1xi32>
    %1229 = arith.xori %1223, %1228 : vector<1x1xi32>
    %cst_344 = arith.constant dense<-1> : vector<1x1xi32>
    %1230 = arith.xori %1229, %cst_344 : vector<1x1xi32>
    %1231 = arith.select %1227, %1223, %1230 : vector<1x1xi1>, vector<1x1xi32>
    %1232 = tpu.bitcast %1231 : vector<1x1xi32> -> vector<1x1xf32>
    %1233 = arith.select %1225, %1179, %1232 : vector<1x1xi1>, vector<1x1xf32>
    %1234 = arith.subf %1233, %1179 : vector<1x1xf32>
    %cst_345 = arith.constant 6.500000e-01 : f32
    %1235 = vector.broadcast %cst_345 : f32 to vector<1x1xf32>
    %1236 = arith.mulf %1235, %1234 : vector<1x1xf32>
    %1237 = arith.addf %1179, %1236 : vector<1x1xf32>
    %c0_346 = arith.constant 0 : index
    %1238 = memref.load %arg1[%c0_346] : memref<2xf32, #tpu.memory_space<smem>>
    %c1 = arith.constant 1 : index
    %1239 = memref.load %arg1[%c1] : memref<2xf32, #tpu.memory_space<smem>>
    %cst_347 = arith.constant 9.900000e-01 : f32
    %1240 = arith.mulf %cst_347, %1238 : f32
    %cst_348 = arith.constant 0.00999999977 : f32
    %1241 = vector.broadcast %cst_348 : f32 to vector<1x1xf32>
    %1242 = arith.mulf %1241, %1208 : vector<1x1xf32>
    %1243 = vector.broadcast %1240 : f32 to vector<1x1xf32>
    %1244 = arith.addf %1243, %1242 : vector<1x1xf32>
    %cst_349 = arith.constant 9.900000e-01 : f32
    %1245 = arith.mulf %cst_349, %1239 : f32
    %cst_350 = arith.constant 0.00999999977 : f32
    %1246 = vector.broadcast %cst_350 : f32 to vector<1x1xf32>
    %1247 = arith.mulf %1246, %1237 : vector<1x1xf32>
    %1248 = vector.broadcast %1245 : f32 to vector<1x1xf32>
    %1249 = arith.addf %1248, %1247 : vector<1x1xf32>
    %1250 = arith.subf %1249, %1244 : vector<1x1xf32>
    %cst_351 = arith.constant 1.000000e+00 : f32
    %1251 = vector.broadcast %cst_351 : f32 to vector<1x1xf32>
    %1252 = arith.maximumf %1251, %1250 : vector<1x1xf32>
    %1253 = tpu.iota {dimensions = array<i32: 1>} : vector<1x128xi32>
    %c0_i32_352 = arith.constant 0 : i32
    %1254 = vector.broadcast %c0_i32_352 : i32 to vector<1x128xi32>
    %1255 = arith.cmpi eq, %1253, %1254 : vector<1x128xi32>
    %c1_i32_353 = arith.constant 1 : i32
    %1256 = vector.broadcast %c1_i32_353 : i32 to vector<1x128xi32>
    %1257 = arith.cmpi eq, %1253, %1256 : vector<1x128xi32>
    %c2_i32_354 = arith.constant 2 : i32
    %1258 = vector.broadcast %c2_i32_354 : i32 to vector<1x128xi32>
    %1259 = arith.cmpi eq, %1253, %1258 : vector<1x128xi32>
    %cst_355 = arith.constant 0.000000e+00 : f32
    %1260 = vector.shape_cast %1252 : vector<1x1xf32> to vector<1x1xf32>
    %1261 = vector.broadcast %1260 : vector<1x1xf32> to vector<1x128xf32>
    %1262 = vector.broadcast %cst_355 : f32 to vector<1x128xf32>
    %1263 = arith.select %1259, %1261, %1262 : vector<1x128xi1>, vector<1x128xf32>
    %1264 = vector.shape_cast %1249 : vector<1x1xf32> to vector<1x1xf32>
    %1265 = vector.broadcast %1264 : vector<1x1xf32> to vector<1x128xf32>
    %1266 = arith.select %1257, %1265, %1263 : vector<1x128xi1>, vector<1x128xf32>
    %1267 = vector.shape_cast %1244 : vector<1x1xf32> to vector<1x1xf32>
    %1268 = vector.broadcast %1267 : vector<1x1xf32> to vector<1x128xf32>
    %1269 = arith.select %1255, %1268, %1266 : vector<1x128xi1>, vector<1x128xf32>
    %c0_356 = arith.constant 0 : index
    %c0_357 = arith.constant 0 : index
    %1270 = vector.load %arg2[%c0_356, %c0_357] : memref<1x128xf32, #tpu.memory_space<vmem>>, vector<1x128xf32>
    tpu.vector_store %arg2[%c0_356, %c0_357], %1269 {strides = array<i32>} : memref<1x128xf32, #tpu.memory_space<vmem>>, vector<1x128xf32>,
    return
  }
}

</mosaic_0001>

<llo_original>
// kernel: tpu_custom_call.1
$region0: #{tpu_custom_call.1}
  #allocation0 [shape = 'u32[]', space=smem, size = 0x4, offset = 0x4, fixed_abs, tag = 'smem constant byte address 0x4 - core index']
  #allocation1 [shape = 'u32[144,128]{1,0:T(1,128)}', space=vmem, size = 0x12000, scoped, tag = 'internal scratch']
  %s0 = inlined_call_operand.hbm [shape: f32[16,128], index: 0, kind: input, shape index: {}]
  %s1 = inlined_call_operand.vmem [shape: f32[2], index: 1, kind: input, shape index: {}]
  %s2 = inlined_call_operand.hbm [shape: f32[1,128], index: 2, kind: output, shape index: {}]
  %s3 = sld [smem:[#allocation0]]
  $region26: #{tpu_custom_call.1} parent=0
    _
  %s5 = ssub.s32 1, %s3
  %s6 = scalar_select 0, %s5, %s3
  $region1: #{tpu_custom_call.1} parent=0
    #allocation2 [shape = 'u8[8192]{0}', space=vmem, size = 0x2000, scoped, tag = 'input window, operand 0, single buffered']
    #allocation3 [shape = 's32[1]{0}', space=sflag, size = 0x4, scoped, tag = 'scoped memory for tpu_custom_call.1']
    #allocation4 [shape = 's32[1]{0}', space=sflag, size = 0x4, scoped, tag = 'scoped memory for tpu_custom_call.1']
    #allocation5 [shape = 's32[1]{0}', space=sflag, size = 0x4, scoped, tag = 'scoped memory for tpu_custom_call.1']
    #allocation6 [shape = 'u8[512]{0}', space=smem, size = 0x200, scoped, tag = 'input window, operand 1, single buffered']
    #allocation7 [shape = 'u8[512]{0}', space=vmem, size = 0x400, scoped, tag = 'output window, operand 0, single buffered']
    %7 = vsyncpa [#allocation3], 0
    %8 = vsyncpa [#allocation5], 0
    %9 = vsyncpa [#allocation4], 0
    // Predicated region
    $region2: #{tpu_custom_call.1} parent=1 // pred_check
      _
    $region3: #{tpu_custom_call.1} parent=1 // pred_check_branch
      %11 = sbr.rel (0) target = $region5
    $region4: #{tpu_custom_call.1} parent=1 // pred_region
      %s13 = ssub.s32 256, 256
      %14 = vsyncadd [#allocation3], %s13
      %s15 = sshll.u32 [#allocation2], 4
      %s16 = int_to_ptr.vmem [resolvable:$true] %s15
      %21 = dma.hbm_to_vmem [thread:$0]  %s0, 256, %s16, [#allocation3], 128, 128, 8
    $region5: #{tpu_custom_call.1} parent=1 // pred_fallthru
      _
    // Predicated region
    $region6: #{tpu_custom_call.1} parent=1 // pred_check
      _
    $region7: #{tpu_custom_call.1} parent=1 // pred_check_branch
      %23 = sbr.rel (0) target = $region9
    $region8: #{tpu_custom_call.1} parent=1 // pred_region
      %s25 = ssub.s32 16, 16
      %26 = vsyncadd [#allocation5], %s25
      %s28 = sshll.u32 %s1, 4
      %s29 = int_to_ptr.vmem [resolvable:$true] %s28
      %31 = dma.vmem_to_smem %s29, 16, [#allocation6], [#allocation5]
    $region9: #{tpu_custom_call.1} parent=1 // pred_fallthru
      _
    // Predicated region
    $region10: #{tpu_custom_call.1} parent=1 // pred_check
      _
    $region11: #{tpu_custom_call.1} parent=1 // pred_check_branch
      %33 = sbr.rel (0) target = $region13
    $region12: #{tpu_custom_call.1} parent=1 // pred_region
      %34 = dma.done [#allocation3], 256
    $region13: #{tpu_custom_call.1} parent=1 // pred_fallthru
      _
    // Predicated region
    $region14: #{tpu_custom_call.1} parent=1 // pred_check
      _
    $region15: #{tpu_custom_call.1} parent=1 // pred_check_branch
      %36 = sbr.rel (0) target = $region17
    $region16: #{tpu_custom_call.1} parent=1 // pred_region
      %37 = dma.done [#allocation5], 16
    $region17: #{tpu_custom_call.1} parent=1 // pred_fallthru
      _
    %38 = sfence
    %v39 = vld [vmem:[#allocation2] sm:$0xff]
    %v40 = vld [vmem:[#allocation2 + $0x8] sm:$0xff]
    %vm43 = vcmp.ge.s32.totalorder %v39, 0
    %vm44 = vcmp.ge.s32.totalorder %v40, 0
    %v45 = vxor.u32 %v39, 4294967295
    %v46 = vxor.u32 %v40, 4294967295
    %v47 = vxor.u32 %v45, 2147483648
    %v48 = vxor.u32 %v46, 2147483648
    %v49 = vsel %vm43, %v39, %v47
    %v50 = vsel %vm44, %v40, %v48
    %vm51 = vcmp.le.s32.totalorder %v49, 4294967295
    %vm52 = vcmp.le.s32.totalorder %v50, 4294967295
    %v53 = vsel %vm51, 1, 0
    %v54 = vsel %vm52, 1, 0
    %v55 = vmul.u32 %v53, 65536
    %v56 = vmul.u32 %v54, 65536
    %v57 = vadd.s32 %v53, %v55
    %v58 = vadd.s32 %v54, %v56
    %v59 = vadd.s32 %v57, %v58
    %v60 = vand.u32 %v59, 65535
    %v61 = vshrl.u32 %v59, 16
    %v62 = vcvt.s32.f32 %v60
    %v63 = vcvt.s32.f32 %v61
    %64 = vadd.xlane.f32.xlu0 %v62
    %v65 = vpop.xlane.xlu0 %64
    %66 = vadd.xlane.f32.xlu0 %v63
    %v67 = vpop.xlane.xlu0 %66
    %v68 = vcvt.f32.s32 %v65
    %v69 = vcvt.f32.s32 %v67
    %v70 = vshll.u32 %v69, 16
    %v71 = vadd.s32 %v70, %v68
    %v72 = vrot.slane %v71, 4
    %v73 = vadd.s32 %v71, %v72
    %v74 = vrot.slane %v73, 2
    %v75 = vadd.s32 %v73, %v74
    %v76 = vrot.slane %v75, 1
    %v77 = vadd.s32 %v75, %v76
    %s78 = vtos %v77
    %v79 = vstv %s78
    %v80 = vshra.s32 %v79, 16
    %v81 = vand.u32 %v79, 65535
    %vm82 = vcmp.ge.s32.totalorder %v81, 103
    %v83 = vsel %vm82, 0, 2147483648
    %vm84 = vcmp.ge.s32.totalorder %v80, 1945
    %v85 = vsel %vm84, 0, 2147483648
    %v86 = vor.u32 %v83, 1073741823
    %v87 = vxor.u32 %v86, 2147483648
    %v88 = vor.u32 %v85, 1073741823
    %v89 = vxor.u32 %v88, 2147483648
    %vm90 = vcmp.le.s32.totalorder %v49, %v87
    %vm91 = vcmp.le.s32.totalorder %v50, %v87
    %v92 = vsel %vm90, 1, 0
    %v93 = vsel %vm91, 1, 0
    %vm94 = vcmp.le.s32.totalorder %v49, %v89
    %vm95 = vcmp.le.s32.totalorder %v50, %v89
    %v96 = vsel %vm94, 1, 0
    %v97 = vsel %vm95, 1, 0
    %v98 = vmul.u32 %v96, 65536
    %v99 = vmul.u32 %v97, 65536
    %v100 = vadd.s32 %v92, %v98
    %v101 = vadd.s32 %v93, %v99
    %v102 = vadd.s32 %v100, %v101
    %v103 = vand.u32 %v102, 65535
    %v104 = vshrl.u32 %v102, 16
    %v105 = vcvt.s32.f32 %v103
    %v106 = vcvt.s32.f32 %v104
    %107 = vadd.xlane.f32.xlu0 %v105
    %v108 = vpop.xlane.xlu0 %107
    %109 = vadd.xlane.f32.xlu0 %v106
    %v110 = vpop.xlane.xlu0 %109
    %v111 = vcvt.f32.s32 %v108
    %v112 = vcvt.f32.s32 %v110
    %v113 = vshll.u32 %v112, 16
    %v114 = vadd.s32 %v113, %v111
    %v115 = vrot.slane %v114, 4
    %v116 = vadd.s32 %v114, %v115
    %v117 = vrot.slane %v116, 2
    %v118 = vadd.s32 %v116, %v117
    %v119 = vrot.slane %v118, 1
    %v120 = vadd.s32 %v118, %v119
    %s121 = vtos %v120
    %v122 = vstv %s121
    %v123 = vshra.s32 %v122, 16
    %v124 = vand.u32 %v122, 65535
    %vm125 = vcmp.ge.s32.totalorder %v124, 103
    %v126 = vor.u32 %v83, 1073741824
    %v127 = vsel %vm125, %v83, %v126
    %vm128 = vcmp.ge.s32.totalorder %v123, 1945
    %v129 = vor.u32 %v85, 1073741824
    %v130 = vsel %vm128, %v85, %v129
    %v131 = vor.u32 %v127, 536870911
    %v132 = vxor.u32 %v131, 2147483648
    %v133 = vor.u32 %v130, 536870911
    %v134 = vxor.u32 %v133, 2147483648
    %vm135 = vcmp.le.s32.totalorder %v49, %v132
    %vm136 = vcmp.le.s32.totalorder %v50, %v132
    %v137 = vsel %vm135, 1, 0
    %v138 = vsel %vm136, 1, 0
    %vm139 = vcmp.le.s32.totalorder %v49, %v134
    %vm140 = vcmp.le.s32.totalorder %v50, %v134
    %v141 = vsel %vm139, 1, 0
    %v142 = vsel %vm140, 1, 0
    %v143 = vmul.u32 %v141, 65536
    %v144 = vmul.u32 %v142, 65536
    %v145 = vadd.s32 %v137, %v143
    %v146 = vadd.s32 %v138, %v144
    %v147 = vadd.s32 %v145, %v146
    %v148 = vand.u32 %v147, 65535
    %v149 = vshrl.u32 %v147, 16
    %v150 = vcvt.s32.f32 %v148
    %v151 = vcvt.s32.f32 %v149
    %152 = vadd.xlane.f32.xlu0 %v150
    %v153 = vpop.xlane.xlu0 %152
    %154 = vadd.xlane.f32.xlu0 %v151
    %v155 = vpop.xlane.xlu0 %154
    %v156 = vcvt.f32.s32 %v153
    %v157 = vcvt.f32.s32 %v155
    %v158 = vshll.u32 %v157, 16
    %v159 = vadd.s32 %v158, %v156
    %v160 = vrot.slane %v159, 4
    %v161 = vadd.s32 %v159, %v160
    %v162 = vrot.slane %v161, 2
    %v163 = vadd.s32 %v161, %v162
    %v164 = vrot.slane %v163, 1
    %v165 = vadd.s32 %v163, %v164
    %s166 = vtos %v165
    %v167 = vstv %s166
    %v168 = vshra.s32 %v167, 16
    %v169 = vand.u32 %v167, 65535
    %vm170 = vcmp.ge.s32.totalorder %v169, 103
    %v171 = vor.u32 %v127, 536870912
    %v172 = vsel %vm170, %v127, %v171
    %vm173 = vcmp.ge.s32.totalorder %v168, 1945
    %v174 = vor.u32 %v130, 536870912
    %v175 = vsel %vm173, %v130, %v174
    %v176 = vor.u32 %v172, 268435455
    %v177 = vxor.u32 %v176, 2147483648
    %v178 = vor.u32 %v175, 268435455
    %v179 = vxor.u32 %v178, 2147483648
    %vm180 = vcmp.le.s32.totalorder %v49, %v177
    %vm181 = vcmp.le.s32.totalorder %v50, %v177
    %v182 = vsel %vm180, 1, 0
    %v183 = vsel %vm181, 1, 0
    %vm184 = vcmp.le.s32.totalorder %v49, %v179
    %vm185 = vcmp.le.s32.totalorder %v50, %v179
    %v186 = vsel %vm184, 1, 0
    %v187 = vsel %vm185, 1, 0
    %v188 = vmul.u32 %v186, 65536
    %v189 = vmul.u32 %v187, 65536
    %v190 = vadd.s32 %v182, %v188
    %v191 = vadd.s32 %v183, %v189
    %v192 = vadd.s32 %v190, %v191
    %v193 = vand.u32 %v192, 65535
    %v194 = vshrl.u32 %v192, 16
    %v195 = vcvt.s32.f32 %v193
    %v196 = vcvt.s32.f32 %v194
    %197 = vadd.xlane.f32.xlu0 %v195
    %v198 = vpop.xlane.xlu0 %197
    %199 = vadd.xlane.f32.xlu0 %v196
    %v200 = vpop.xlane.xlu0 %199
    %v201 = vcvt.f32.s32 %v198
    %v202 = vcvt.f32.s32 %v200
    %v203 = vshll.u32 %v202, 16
    %v204 = vadd.s32 %v203, %v201
    %v205 = vrot.slane %v204, 4
    %v206 = vadd.s32 %v204, %v205
    %v207 = vrot.slane %v206, 2
    %v208 = vadd.s32 %v206, %v207
    %v209 = vrot.slane %v208, 1
    %v210 = vadd.s32 %v208, %v209
    %s211 = vtos %v210
    %v212 = vstv %s211
    %v213 = vshra.s32 %v212, 16
    %v214 = vand.u32 %v212, 65535
    %vm215 = vcmp.ge.s32.totalorder %v214, 103
    %v216 = vor.u32 %v172, 268435456
    %v217 = vsel %vm215, %v172, %v216
    %vm218 = vcmp.ge.s32.totalorder %v213, 1945
    %v219 = vor.u32 %v175, 268435456
    %v220 = vsel %vm218, %v175, %v219
    %v221 = vor.u32 %v217, 134217727
    %v222 = vxor.u32 %v221, 2147483648
    %v223 = vor.u32 %v220, 134217727
    %v224 = vxor.u32 %v223, 2147483648
    %vm225 = vcmp.le.s32.totalorder %v49, %v222
    %vm226 = vcmp.le.s32.totalorder %v50, %v222
    %v227 = vsel %vm225, 1, 0
    %v228 = vsel %vm226, 1, 0
    %vm229 = vcmp.le.s32.totalorder %v49, %v224
    %vm230 = vcmp.le.s32.totalorder %v50, %v224
    %v231 = vsel %vm229, 1, 0
    %v232 = vsel %vm230, 1, 0
    %v233 = vmul.u32 %v231, 65536
    %v234 = vmul.u32 %v232, 65536
    %v235 = vadd.s32 %v227, %v233
    %v236 = vadd.s32 %v228, %v234
    %v237 = vadd.s32 %v235, %v236
    %v238 = vand.u32 %v237, 65535
    %v239 = vshrl.u32 %v237, 16
    %v240 = vcvt.s32.f32 %v238
    %v241 = vcvt.s32.f32 %v239
    %242 = vadd.xlane.f32.xlu0 %v240
    %v243 = vpop.xlane.xlu0 %242
    %244 = vadd.xlane.f32.xlu0 %v241
    %v245 = vpop.xlane.xlu0 %244
    %v246 = vcvt.f32.s32 %v243
    %v247 = vcvt.f32.s32 %v245
    %v248 = vshll.u32 %v247, 16
    %v249 = vadd.s32 %v248, %v246
    %v250 = vrot.slane %v249, 4
    %v251 = vadd.s32 %v249, %v250
    %v252 = vrot.slane %v251, 2
    %v253 = vadd.s32 %v251, %v252
    %v254 = vrot.slane %v253, 1
    %v255 = vadd.s32 %v253, %v254
    %s256 = vtos %v255
    %v257 = vstv %s256
    %v258 = vshra.s32 %v257, 16
    %v259 = vand.u32 %v257, 65535
    %vm260 = vcmp.ge.s32.totalorder %v259, 103
    %v261 = vor.u32 %v217, 134217728
    %v262 = vsel %vm260, %v217, %v261
    %vm263 = vcmp.ge.s32.totalorder %v258, 1945
    %v264 = vor.u32 %v220, 134217728
    %v265 = vsel %vm263, %v220, %v264
    %v266 = vor.u32 %v262, 67108863
    %v267 = vxor.u32 %v266, 2147483648
    %v268 = vor.u32 %v265, 67108863
    %v269 = vxor.u32 %v268, 2147483648
    %vm270 = vcmp.le.s32.totalorder %v49, %v267
    %vm271 = vcmp.le.s32.totalorder %v50, %v267
    %v272 = vsel %vm270, 1, 0
    %v273 = vsel %vm271, 1, 0
    %vm274 = vcmp.le.s32.totalorder %v49, %v269
    %vm275 = vcmp.le.s32.totalorder %v50, %v269
    %v276 = vsel %vm274, 1, 0
    %v277 = vsel %vm275, 1, 0
    %v278 = vmul.u32 %v276, 65536
    %v279 = vmul.u32 %v277, 65536
    %v280 = vadd.s32 %v272, %v278
    %v281 = vadd.s32 %v273, %v279
    %v282 = vadd.s32 %v280, %v281
    %v283 = vand.u32 %v282, 65535
    %v284 = vshrl.u32 %v282, 16
    %v285 = vcvt.s32.f32 %v283
    %v286 = vcvt.s32.f32 %v284
    %287 = vadd.xlane.f32.xlu0 %v285
    %v288 = vpop.xlane.xlu0 %287
    %289 = vadd.xlane.f32.xlu0 %v286
    %v290 = vpop.xlane.xlu0 %289
    %v291 = vcvt.f32.s32 %v288
    %v292 = vcvt.f32.s32 %v290
    %v293 = vshll.u32 %v292, 16
    %v294 = vadd.s32 %v293, %v291
    %v295 = vrot.slane %v294, 4
    %v296 = vadd.s32 %v294, %v295
    %v297 = vrot.slane %v296, 2
    %v298 = vadd.s32 %v296, %v297
    %v299 = vrot.slane %v298, 1
    %v300 = vadd.s32 %v298, %v299
    %s301 = vtos %v300
    %v302 = vstv %s301
    %v303 = vshra.s32 %v302, 16
    %v304 = vand.u32 %v302, 65535
    %vm305 = vcmp.ge.s32.totalorder %v304, 103
    %v306 = vor.u32 %v262, 67108864
    %v307 = vsel %vm305, %v262, %v306
    %vm308 = vcmp.ge.s32.totalorder %v303, 1945
    %v309 = vor.u32 %v265, 67108864
    %v310 = vsel %vm308, %v265, %v309
    %v311 = vor.u32 %v307, 33554431
    %v312 = vxor.u32 %v311, 2147483648
    %v313 = vor.u32 %v310, 33554431
    %v314 = vxor.u32 %v313, 2147483648
    %vm315 = vcmp.le.s32.totalorder %v49, %v312
    %vm316 = vcmp.le.s32.totalorder %v50, %v312
    %v317 = vsel %vm315, 1, 0
    %v318 = vsel %vm316, 1, 0
    %vm319 = vcmp.le.s32.totalorder %v49, %v314
    %vm320 = vcmp.le.s32.totalorder %v50, %v314
    %v321 = vsel %vm319, 1, 0
    %v322 = vsel %vm320, 1, 0
    %v323 = vmul.u32 %v321, 65536
    %v324 = vmul.u32 %v322, 65536
    %v325 = vadd.s32 %v317, %v323
    %v326 = vadd.s32 %v318, %v324
    %v327 = vadd.s32 %v325, %v326
    %v328 = vand.u32 %v327, 65535
    %v329 = vshrl.u32 %v327, 16
    %v330 = vcvt.s32.f32 %v328
    %v331 = vcvt.s32.f32 %v329
    %332 = vadd.xlane.f32.xlu0 %v330
    %v333 = vpop.xlane.xlu0 %332
    %334 = vadd.xlane.f32.xlu0 %v331
    %v335 = vpop.xlane.xlu0 %334
    %v336 = vcvt.f32.s32 %v333
    %v337 = vcvt.f32.s32 %v335
    %v338 = vshll.u32 %v337, 16
    %v339 = vadd.s32 %v338, %v336
    %v340 = vrot.slane %v339, 4
    %v341 = vadd.s32 %v339, %v340
    %v342 = vrot.slane %v341, 2
    %v343 = vadd.s32 %v341, %v342
    %v344 = vrot.slane %v343, 1
    %v345 = vadd.s32 %v343, %v344
    %s346 = vtos %v345
    %v347 = vstv %s346
    %v348 = vshra.s32 %v347, 16
    %v349 = vand.u32 %v347, 65535
    %vm350 = vcmp.ge.s32.totalorder %v349, 103
    %v351 = vor.u32 %v307, 33554432
    %v352 = vsel %vm350, %v307, %v351
    %vm353 = vcmp.ge.s32.totalorder %v348, 1945
    %v354 = vor.u32 %v310, 33554432
    %v355 = vsel %vm353, %v310, %v354
    %v356 = vor.u32 %v352, 16777215
    %v357 = vxor.u32 %v356, 2147483648
    %v358 = vor.u32 %v355, 16777215
    %v359 = vxor.u32 %v358, 2147483648
    %vm360 = vcmp.le.s32.totalorder %v49, %v357
    %vm361 = vcmp.le.s32.totalorder %v50, %v357
    %v362 = vsel %vm360, 1, 0
    %v363 = vsel %vm361, 1, 0
    %vm364 = vcmp.le.s32.totalorder %v49, %v359
    %vm365 = vcmp.le.s32.totalorder %v50, %v359
    %v366 = vsel %vm364, 1, 0
    %v367 = vsel %vm365, 1, 0
    %v368 = vmul.u32 %v366, 65536
    %v369 = vmul.u32 %v367, 65536
    %v370 = vadd.s32 %v362, %v368
    %v371 = vadd.s32 %v363, %v369
    %v372 = vadd.s32 %v370, %v371
    %v373 = vand.u32 %v372, 65535
    %v374 = vshrl.u32 %v372, 16
    %v375 = vcvt.s32.f32 %v373
    %v376 = vcvt.s32.f32 %v374
    %377 = vadd.xlane.f32.xlu0 %v375
    %v378 = vpop.xlane.xlu0 %377
    %379 = vadd.xlane.f32.xlu0 %v376
    %v380 = vpop.xlane.xlu0 %379
    %v381 = vcvt.f32.s32 %v378
    %v382 = vcvt.f32.s32 %v380
    %v383 = vshll.u32 %v382, 16
    %v384 = vadd.s32 %v383, %v381
    %v385 = vrot.slane %v384, 4
    %v386 = vadd.s32 %v384, %v385
    %v387 = vrot.slane %v386, 2
    %v388 = vadd.s32 %v386, %v387
    %v389 = vrot.slane %v388, 1
    %v390 = vadd.s32 %v388, %v389
    %s391 = vtos %v390
    %v392 = vstv %s391
    %v393 = vshra.s32 %v392, 16
    %v394 = vand.u32 %v392, 65535
    %vm395 = vcmp.ge.s32.totalorder %v394, 103
    %v396 = vor.u32 %v352, 16777216
    %v397 = vsel %vm395, %v352, %v396
    %vm398 = vcmp.ge.s32.totalorder %v393, 1945
    %v399 = vor.u32 %v355, 16777216
    %v400 = vsel %vm398, %v355, %v399
    %v401 = vor.u32 %v397, 8388607
    %v402 = vxor.u32 %v401, 2147483648
    %v403 = vor.u32 %v400, 8388607
    %v404 = vxor.u32 %v403, 2147483648
    %vm405 = vcmp.le.s32.totalorder %v49, %v402
    %vm406 = vcmp.le.s32.totalorder %v50, %v402
    %v407 = vsel %vm405, 1, 0
    %v408 = vsel %vm406, 1, 0
    %vm409 = vcmp.le.s32.totalorder %v49, %v404
    %vm410 = vcmp.le.s32.totalorder %v50, %v404
    %v411 = vsel %vm409, 1, 0
    %v412 = vsel %vm410, 1, 0
    %v413 = vmul.u32 %v411, 65536
    %v414 = vmul.u32 %v412, 65536
    %v415 = vadd.s32 %v407, %v413
    %v416 = vadd.s32 %v408, %v414
    %v417 = vadd.s32 %v415, %v416
    %v418 = vand.u32 %v417, 65535
    %v419 = vshrl.u32 %v417, 16
    %v420 = vcvt.s32.f32 %v418
    %v421 = vcvt.s32.f32 %v419
    %422 = vadd.xlane.f32.xlu0 %v420
    %v423 = vpop.xlane.xlu0 %422
    %424 = vadd.xlane.f32.xlu0 %v421
    %v425 = vpop.xlane.xlu0 %424
    %v426 = vcvt.f32.s32 %v423
    %v427 = vcvt.f32.s32 %v425
    %v428 = vshll.u32 %v427, 16
    %v429 = vadd.s32 %v428, %v426
    %v430 = vrot.slane %v429, 4
    %v431 = vadd.s32 %v429, %v430
    %v432 = vrot.slane %v431, 2
    %v433 = vadd.s32 %v431, %v432
    %v434 = vrot.slane %v433, 1
    %v435 = vadd.s32 %v433, %v434
    %s436 = vtos %v435
    %v437 = vstv %s436
    %v438 = vshra.s32 %v437, 16
    %v439 = vand.u32 %v437, 65535
    %vm440 = vcmp.ge.s32.totalorder %v439, 103
    %v441 = vor.u32 %v397, 8388608
    %v442 = vsel %vm440, %v397, %v441
    %vm443 = vcmp.ge.s32.totalorder %v438, 1945
    %v444 = vor.u32 %v400, 8388608
    %v445 = vsel %vm443, %v400, %v444
    %v446 = vor.u32 %v442, 4194303
    %v447 = vxor.u32 %v446, 2147483648
    %v448 = vor.u32 %v445, 4194303
    %v449 = vxor.u32 %v448, 2147483648
    %vm450 = vcmp.le.s32.totalorder %v49, %v447
    %vm451 = vcmp.le.s32.totalorder %v50, %v447
    %v452 = vsel %vm450, 1, 0
    %v453 = vsel %vm451, 1, 0
    %vm454 = vcmp.le.s32.totalorder %v49, %v449
    %vm455 = vcmp.le.s32.totalorder %v50, %v449
    %v456 = vsel %vm454, 1, 0
    %v457 = vsel %vm455, 1, 0
    %v458 = vmul.u32 %v456, 65536
    %v459 = vmul.u32 %v457, 65536
    %v460 = vadd.s32 %v452, %v458
    %v461 = vadd.s32 %v453, %v459
    %v462 = vadd.s32 %v460, %v461
    %v463 = vand.u32 %v462, 65535
    %v464 = vshrl.u32 %v462, 16
    %v465 = vcvt.s32.f32 %v463
    %v466 = vcvt.s32.f32 %v464
    %467 = vadd.xlane.f32.xlu0 %v465
    %v468 = vpop.xlane.xlu0 %467
    %469 = vadd.xlane.f32.xlu0 %v466
    %v470 = vpop.xlane.xlu0 %469
    %v471 = vcvt.f32.s32 %v468
    %v472 = vcvt.f32.s32 %v470
    %v473 = vshll.u32 %v472, 16
    %v474 = vadd.s32 %v473, %v471
    %v475 = vrot.slane %v474, 4
    %v476 = vadd.s32 %v474, %v475
    %v477 = vrot.slane %v476, 2
    %v478 = vadd.s32 %v476, %v477
    %v479 = vrot.slane %v478, 1
    %v480 = vadd.s32 %v478, %v479
    %s481 = vtos %v480
    %v482 = vstv %s481
    %v483 = vshra.s32 %v482, 16
    %v484 = vand.u32 %v482, 65535
    %vm485 = vcmp.ge.s32.totalorder %v484, 103
    %v486 = vor.u32 %v442, 4194304
    %v487 = vsel %vm485, %v442, %v486
    %vm488 = vcmp.ge.s32.totalorder %v483, 1945
    %v489 = vor.u32 %v445, 4194304
    %v490 = vsel %vm488, %v445, %v489
    %v491 = vor.u32 %v487, 2097151
    %v492 = vxor.u32 %v491, 2147483648
    %v493 = vor.u32 %v490, 2097151
    %v494 = vxor.u32 %v493, 2147483648
    %vm495 = vcmp.le.s32.totalorder %v49, %v492
    %vm496 = vcmp.le.s32.totalorder %v50, %v492
    %v497 = vsel %vm495, 1, 0
    %v498 = vsel %vm496, 1, 0
    %vm499 = vcmp.le.s32.totalorder %v49, %v494
    %vm500 = vcmp.le.s32.totalorder %v50, %v494
    %v501 = vsel %vm499, 1, 0
    %v502 = vsel %vm500, 1, 0
    %v503 = vmul.u32 %v501, 65536
    %v504 = vmul.u32 %v502, 65536
    %v505 = vadd.s32 %v497, %v503
    %v506 = vadd.s32 %v498, %v504
    %v507 = vadd.s32 %v505, %v506
    %v508 = vand.u32 %v507, 65535
    %v509 = vshrl.u32 %v507, 16
    %v510 = vcvt.s32.f32 %v508
    %v511 = vcvt.s32.f32 %v509
    %512 = vadd.xlane.f32.xlu0 %v510
    %v513 = vpop.xlane.xlu0 %512
    %514 = vadd.xlane.f32.xlu0 %v511
    %v515 = vpop.xlane.xlu0 %514
    %v516 = vcvt.f32.s32 %v513
    %v517 = vcvt.f32.s32 %v515
    %v518 = vshll.u32 %v517, 16
    %v519 = vadd.s32 %v518, %v516
    %v520 = vrot.slane %v519, 4
    %v521 = vadd.s32 %v519, %v520
    %v522 = vrot.slane %v521, 2
    %v523 = vadd.s32 %v521, %v522
    %v524 = vrot.slane %v523, 1
    %v525 = vadd.s32 %v523, %v524
    %s526 = vtos %v525
    %v527 = vstv %s526
    %v528 = vshra.s32 %v527, 16
    %v529 = vand.u32 %v527, 65535
    %vm530 = vcmp.ge.s32.totalorder %v529, 103
    %v531 = vor.u32 %v487, 2097152
    %v532 = vsel %vm530, %v487, %v531
    %vm533 = vcmp.ge.s32.totalorder %v528, 1945
    %v534 = vor.u32 %v490, 2097152
    %v535 = vsel %vm533, %v490, %v534
    %v536 = vor.u32 %v532, 1048575
    %v537 = vxor.u32 %v536, 2147483648
    %v538 = vor.u32 %v535, 1048575
    %v539 = vxor.u32 %v538, 2147483648
    %vm540 = vcmp.le.s32.totalorder %v49, %v537
    %vm541 = vcmp.le.s32.totalorder %v50, %v537
    %v542 = vsel %vm540, 1, 0
    %v543 = vsel %vm541, 1, 0
    %vm544 = vcmp.le.s32.totalorder %v49, %v539
    %vm545 = vcmp.le.s32.totalorder %v50, %v539
    %v546 = vsel %vm544, 1, 0
    %v547 = vsel %vm545, 1, 0
    %v548 = vmul.u32 %v546, 65536
    %v549 = vmul.u32 %v547, 65536
    %v550 = vadd.s32 %v542, %v548
    %v551 = vadd.s32 %v543, %v549
    %v552 = vadd.s32 %v550, %v551
    %v553 = vand.u32 %v552, 65535
    %v554 = vshrl.u32 %v552, 16
    %v555 = vcvt.s32.f32 %v553
    %v556 = vcvt.s32.f32 %v554
    %557 = vadd.xlane.f32.xlu0 %v555
    %v558 = vpop.xlane.xlu0 %557
    %559 = vadd.xlane.f32.xlu0 %v556
    %v560 = vpop.xlane.xlu0 %559
    %v561 = vcvt.f32.s32 %v558
    %v562 = vcvt.f32.s32 %v560
    %v563 = vshll.u32 %v562, 16
    %v564 = vadd.s32 %v563, %v561
    %v565 = vrot.slane %v564, 4
    %v566 = vadd.s32 %v564, %v565
    %v567 = vrot.slane %v566, 2
    %v568 = vadd.s32 %v566, %v567
    %v569 = vrot.slane %v568, 1
    %v570 = vadd.s32 %v568, %v569
    %s571 = vtos %v570
    %v572 = vstv %s571
    %v573 = vshra.s32 %v572, 16
    %v574 = vand.u32 %v572, 65535
    %vm575 = vcmp.ge.s32.totalorder %v574, 103
    %v576 = vor.u32 %v532, 1048576
    %v577 = vsel %vm575, %v532, %v576
    %vm578 = vcmp.ge.s32.totalorder %v573, 1945
    %v579 = vor.u32 %v535, 1048576
    %v580 = vsel %vm578, %v535, %v579
    %v581 = vor.u32 %v577, 524287
    %v582 = vxor.u32 %v581, 2147483648
    %v583 = vor.u32 %v580, 524287
    %v584 = vxor.u32 %v583, 2147483648
    %vm585 = vcmp.le.s32.totalorder %v49, %v582
    %vm586 = vcmp.le.s32.totalorder %v50, %v582
    %v587 = vsel %vm585, 1, 0
    %v588 = vsel %vm586, 1, 0
    %vm589 = vcmp.le.s32.totalorder %v49, %v584
    %vm590 = vcmp.le.s32.totalorder %v50, %v584
    %v591 = vsel %vm589, 1, 0
    %v592 = vsel %vm590, 1, 0
    %v593 = vmul.u32 %v591, 65536
    %v594 = vmul.u32 %v592, 65536
    %v595 = vadd.s32 %v587, %v593
    %v596 = vadd.s32 %v588, %v594
    %v597 = vadd.s32 %v595, %v596
    %v598 = vand.u32 %v597, 65535
    %v599 = vshrl.u32 %v597, 16
    %v600 = vcvt.s32.f32 %v598
    %v601 = vcvt.s32.f32 %v599
    %602 = vadd.xlane.f32.xlu0 %v600
    %v603 = vpop.xlane.xlu0 %602
    %604 = vadd.xlane.f32.xlu0 %v601
    %v605 = vpop.xlane.xlu0 %604
    %v606 = vcvt.f32.s32 %v603
    %v607 = vcvt.f32.s32 %v605
    %v608 = vshll.u32 %v607, 16
    %v609 = vadd.s32 %v608, %v606
    %v610 = vrot.slane %v609, 4
    %v611 = vadd.s32 %v609, %v610
    %v612 = vrot.slane %v611, 2
    %v613 = vadd.s32 %v611, %v612
    %v614 = vrot.slane %v613, 1
    %v615 = vadd.s32 %v613, %v614
    %s616 = vtos %v615
    %v617 = vstv %s616
    %v618 = vshra.s32 %v617, 16
    %v619 = vand.u32 %v617, 65535
    %vm620 = vcmp.ge.s32.totalorder %v619, 103
    %v621 = vor.u32 %v577, 524288
    %v622 = vsel %vm620, %v577, %v621
    %vm623 = vcmp.ge.s32.totalorder %v618, 1945
    %v624 = vor.u32 %v580, 524288
    %v625 = vsel %vm623, %v580, %v624
    %v626 = vor.u32 %v622, 262143
    %v627 = vxor.u32 %v626, 2147483648
    %v628 = vor.u32 %v625, 262143
    %v629 = vxor.u32 %v628, 2147483648
    %vm630 = vcmp.le.s32.totalorder %v49, %v627
    %vm631 = vcmp.le.s32.totalorder %v50, %v627
    %v632 = vsel %vm630, 1, 0
    %v633 = vsel %vm631, 1, 0
    %vm634 = vcmp.le.s32.totalorder %v49, %v629
    %vm635 = vcmp.le.s32.totalorder %v50, %v629
    %v636 = vsel %vm634, 1, 0
    %v637 = vsel %vm635, 1, 0
    %v638 = vmul.u32 %v636, 65536
    %v639 = vmul.u32 %v637, 65536
    %v640 = vadd.s32 %v632, %v638
    %v641 = vadd.s32 %v633, %v639
    %v642 = vadd.s32 %v640, %v641
    %v643 = vand.u32 %v642, 65535
    %v644 = vshrl.u32 %v642, 16
    %v645 = vcvt.s32.f32 %v643
    %v646 = vcvt.s32.f32 %v644
    %647 = vadd.xlane.f32.xlu0 %v645
    %v648 = vpop.xlane.xlu0 %647
    %649 = vadd.xlane.f32.xlu0 %v646
    %v650 = vpop.xlane.xlu0 %649
    %v651 = vcvt.f32.s32 %v648
    %v652 = vcvt.f32.s32 %v650
    %v653 = vshll.u32 %v652, 16
    %v654 = vadd.s32 %v653, %v651
    %v655 = vrot.slane %v654, 4
    %v656 = vadd.s32 %v654, %v655
    %v657 = vrot.slane %v656, 2
    %v658 = vadd.s32 %v656, %v657
    %v659 = vrot.slane %v658, 1
    %v660 = vadd.s32 %v658, %v659
    %s661 = vtos %v660
    %v662 = vstv %s661
    %v663 = vshra.s32 %v662, 16
    %v664 = vand.u32 %v662, 65535
    %vm665 = vcmp.ge.s32.totalorder %v664, 103
    %v666 = vor.u32 %v622, 262144
    %v667 = vsel %vm665, %v622, %v666
    %vm668 = vcmp.ge.s32.totalorder %v663, 1945
    %v669 = vor.u32 %v625, 262144
    %v670 = vsel %vm668, %v625, %v669
    %v671 = vor.u32 %v667, 131071
    %v672 = vxor.u32 %v671, 2147483648
    %v673 = vor.u32 %v670, 131071
    %v674 = vxor.u32 %v673, 2147483648
    %vm675 = vcmp.le.s32.totalorder %v49, %v672
    %vm676 = vcmp.le.s32.totalorder %v50, %v672
    %v677 = vsel %vm675, 1, 0
    %v678 = vsel %vm676, 1, 0
    %vm679 = vcmp.le.s32.totalorder %v49, %v674
    %vm680 = vcmp.le.s32.totalorder %v50, %v674
    %v681 = vsel %vm679, 1, 0
    %v682 = vsel %vm680, 1, 0
    %v683 = vmul.u32 %v681, 65536
    %v684 = vmul.u32 %v682, 65536
    %v685 = vadd.s32 %v677, %v683
    %v686 = vadd.s32 %v678, %v684
    %v687 = vadd.s32 %v685, %v686
    %v688 = vand.u32 %v687, 65535
    %v689 = vshrl.u32 %v687, 16
    %v690 = vcvt.s32.f32 %v688
    %v691 = vcvt.s32.f32 %v689
    %692 = vadd.xlane.f32.xlu0 %v690
    %v693 = vpop.xlane.xlu0 %692
    %694 = vadd.xlane.f32.xlu0 %v691
    %v695 = vpop.xlane.xlu0 %694
    %v696 = vcvt.f32.s32 %v693
    %v697 = vcvt.f32.s32 %v695
    %v698 = vshll.u32 %v697, 16
    %v699 = vadd.s32 %v698, %v696
    %v700 = vrot.slane %v699, 4
    %v701 = vadd.s32 %v699, %v700
    %v702 = vrot.slane %v701, 2
    %v703 = vadd.s32 %v701, %v702
    %v704 = vrot.slane %v703, 1
    %v705 = vadd.s32 %v703, %v704
    %s706 = vtos %v705
    %v707 = vstv %s706
    %v708 = vshra.s32 %v707, 16
    %v709 = vand.u32 %v707, 65535
    %vm710 = vcmp.ge.s32.totalorder %v709, 103
    %v711 = vor.u32 %v667, 131072
    %v712 = vsel %vm710, %v667, %v711
    %vm713 = vcmp.ge.s32.totalorder %v708, 1945
    %v714 = vor.u32 %v670, 131072
    %v715 = vsel %vm713, %v670, %v714
    %v716 = vor.u32 %v712, 65535
    %v717 = vxor.u32 %v716, 2147483648
    %v718 = vor.u32 %v715, 65535
    %v719 = vxor.u32 %v718, 2147483648
    %vm720 = vcmp.le.s32.totalorder %v49, %v717
    %vm721 = vcmp.le.s32.totalorder %v50, %v717
    %v722 = vsel %vm720, 1, 0
    %v723 = vsel %vm721, 1, 0
    %vm724 = vcmp.le.s32.totalorder %v49, %v719
    %vm725 = vcmp.le.s32.totalorder %v50, %v719
    %v726 = vsel %vm724, 1, 0
    %v727 = vsel %vm725, 1, 0
    %v728 = vmul.u32 %v726, 65536
    %v729 = vmul.u32 %v727, 65536
    %v730 = vadd.s32 %v722, %v728
    %v731 = vadd.s32 %v723, %v729
    %v732 = vadd.s32 %v730, %v731
    %v733 = vand.u32 %v732, 65535
    %v734 = vshrl.u32 %v732, 16
    %v735 = vcvt.s32.f32 %v733
    %v736 = vcvt.s32.f32 %v734
    %737 = vadd.xlane.f32.xlu0 %v735
    %v738 = vpop.xlane.xlu0 %737
    %739 = vadd.xlane.f32.xlu0 %v736
    %v740 = vpop.xlane.xlu0 %739
    %v741 = vcvt.f32.s32 %v738
    %v742 = vcvt.f32.s32 %v740
    %v743 = vshll.u32 %v742, 16
    %v744 = vadd.s32 %v743, %v741
    %v745 = vrot.slane %v744, 4
    %v746 = vadd.s32 %v744, %v745
    %v747 = vrot.slane %v746, 2
    %v748 = vadd.s32 %v746, %v747
    %v749 = vrot.slane %v748, 1
    %v750 = vadd.s32 %v748, %v749
    %s751 = vtos %v750
    %v752 = vstv %s751
    %v753 = vshra.s32 %v752, 16
    %v754 = vand.u32 %v752, 65535
    %vm755 = vcmp.ge.s32.totalorder %v754, 103
    %v756 = vor.u32 %v712, 65536
    %v757 = vsel %vm755, %v712, %v756
    %vm758 = vcmp.ge.s32.totalorder %v753, 1945
    %v759 = vor.u32 %v715, 65536
    %v760 = vsel %vm758, %v715, %v759
    %v761 = vor.u32 %v757, 32767
    %v762 = vxor.u32 %v761, 2147483648
    %v763 = vor.u32 %v760, 32767
    %v764 = vxor.u32 %v763, 2147483648
    %vm765 = vcmp.le.s32.totalorder %v49, %v762
    %vm766 = vcmp.le.s32.totalorder %v50, %v762
    %v767 = vsel %vm765, 1, 0
    %v768 = vsel %vm766, 1, 0
    %vm769 = vcmp.le.s32.totalorder %v49, %v764
    %vm770 = vcmp.le.s32.totalorder %v50, %v764
    %v771 = vsel %vm769, 1, 0
    %v772 = vsel %vm770, 1, 0
    %v773 = vmul.u32 %v771, 65536
    %v774 = vmul.u32 %v772, 65536
    %v775 = vadd.s32 %v767, %v773
    %v776 = vadd.s32 %v768, %v774
    %v777 = vadd.s32 %v775, %v776
    %v778 = vand.u32 %v777, 65535
    %v779 = vshrl.u32 %v777, 16
    %v780 = vcvt.s32.f32 %v778
    %v781 = vcvt.s32.f32 %v779
    %782 = vadd.xlane.f32.xlu0 %v780
    %v783 = vpop.xlane.xlu0 %782
    %784 = vadd.xlane.f32.xlu0 %v781
    %v785 = vpop.xlane.xlu0 %784
    %v786 = vcvt.f32.s32 %v783
    %v787 = vcvt.f32.s32 %v785
    %v788 = vshll.u32 %v787, 16
    %v789 = vadd.s32 %v788, %v786
    %v790 = vrot.slane %v789, 4
    %v791 = vadd.s32 %v789, %v790
    %v792 = vrot.slane %v791, 2
    %v793 = vadd.s32 %v791, %v792
    %v794 = vrot.slane %v793, 1
    %v795 = vadd.s32 %v793, %v794
    %s796 = vtos %v795
    %v797 = vstv %s796
    %v798 = vshra.s32 %v797, 16
    %v799 = vand.u32 %v797, 65535
    %vm800 = vcmp.ge.s32.totalorder %v799, 103
    %v801 = vor.u32 %v757, 32768
    %v802 = vsel %vm800, %v757, %v801
    %vm803 = vcmp.ge.s32.totalorder %v798, 1945
    %v804 = vor.u32 %v760, 32768
    %v805 = vsel %vm803, %v760, %v804
    %v806 = vor.u32 %v802, 16383
    %v807 = vxor.u32 %v806, 2147483648
    %v808 = vor.u32 %v805, 16383
    %v809 = vxor.u32 %v808, 2147483648
    %vm810 = vcmp.le.s32.totalorder %v49, %v807
    %vm811 = vcmp.le.s32.totalorder %v50, %v807
    %v812 = vsel %vm810, 1, 0
    %v813 = vsel %vm811, 1, 0
    %vm814 = vcmp.le.s32.totalorder %v49, %v809
    %vm815 = vcmp.le.s32.totalorder %v50, %v809
    %v816 = vsel %vm814, 1, 0
    %v817 = vsel %vm815, 1, 0
    %v818 = vmul.u32 %v816, 65536
    %v819 = vmul.u32 %v817, 65536
    %v820 = vadd.s32 %v812, %v818
    %v821 = vadd.s32 %v813, %v819
    %v822 = vadd.s32 %v820, %v821
    %v823 = vand.u32 %v822, 65535
    %v824 = vshrl.u32 %v822, 16
    %v825 = vcvt.s32.f32 %v823
    %v826 = vcvt.s32.f32 %v824
    %827 = vadd.xlane.f32.xlu0 %v825
    %v828 = vpop.xlane.xlu0 %827
    %829 = vadd.xlane.f32.xlu0 %v826
    %v830 = vpop.xlane.xlu0 %829
    %v831 = vcvt.f32.s32 %v828
    %v832 = vcvt.f32.s32 %v830
    %v833 = vshll.u32 %v832, 16
    %v834 = vadd.s32 %v833, %v831
    %v835 = vrot.slane %v834, 4
    %v836 = vadd.s32 %v834, %v835
    %v837 = vrot.slane %v836, 2
    %v838 = vadd.s32 %v836, %v837
    %v839 = vrot.slane %v838, 1
    %v840 = vadd.s32 %v838, %v839
    %s841 = vtos %v840
    %v842 = vstv %s841
    %v843 = vshra.s32 %v842, 16
    %v844 = vand.u32 %v842, 65535
    %vm845 = vcmp.ge.s32.totalorder %v844, 103
    %v846 = vor.u32 %v802, 16384
    %v847 = vsel %vm845, %v802, %v846
    %vm848 = vcmp.ge.s32.totalorder %v843, 1945
    %v849 = vor.u32 %v805, 16384
    %v850 = vsel %vm848, %v805, %v849
    %v851 = vor.u32 %v847, 8191
    %v852 = vxor.u32 %v851, 2147483648
    %v853 = vor.u32 %v850, 8191
    %v854 = vxor.u32 %v853, 2147483648
    %vm855 = vcmp.le.s32.totalorder %v49, %v852
    %vm856 = vcmp.le.s32.totalorder %v50, %v852
    %v857 = vsel %vm855, 1, 0
    %v858 = vsel %vm856, 1, 0
    %vm859 = vcmp.le.s32.totalorder %v49, %v854
    %vm860 = vcmp.le.s32.totalorder %v50, %v854
    %v861 = vsel %vm859, 1, 0
    %v862 = vsel %vm860, 1, 0
    %v863 = vmul.u32 %v861, 65536
    %v864 = vmul.u32 %v862, 65536
    %v865 = vadd.s32 %v857, %v863
    %v866 = vadd.s32 %v858, %v864
    %v867 = vadd.s32 %v865, %v866
    %v868 = vand.u32 %v867, 65535
    %v869 = vshrl.u32 %v867, 16
    %v870 = vcvt.s32.f32 %v868
    %v871 = vcvt.s32.f32 %v869
    %872 = vadd.xlane.f32.xlu0 %v870
    %v873 = vpop.xlane.xlu0 %872
    %874 = vadd.xlane.f32.xlu0 %v871
    %v875 = vpop.xlane.xlu0 %874
    %v876 = vcvt.f32.s32 %v873
    %v877 = vcvt.f32.s32 %v875
    %v878 = vshll.u32 %v877, 16
    %v879 = vadd.s32 %v878, %v876
    %v880 = vrot.slane %v879, 4
    %v881 = vadd.s32 %v879, %v880
    %v882 = vrot.slane %v881, 2
    %v883 = vadd.s32 %v881, %v882
    %v884 = vrot.slane %v883, 1
    %v885 = vadd.s32 %v883, %v884
    %s886 = vtos %v885
    %v887 = vstv %s886
    %v888 = vshra.s32 %v887, 16
    %v889 = vand.u32 %v887, 65535
    %vm890 = vcmp.ge.s32.totalorder %v889, 103
    %v891 = vor.u32 %v847, 8192
    %v892 = vsel %vm890, %v847, %v891
    %vm893 = vcmp.ge.s32.totalorder %v888, 1945
    %v894 = vor.u32 %v850, 8192
    %v895 = vsel %vm893, %v850, %v894
    %v896 = vor.u32 %v892, 4095
    %v897 = vxor.u32 %v896, 2147483648
    %v898 = vor.u32 %v895, 4095
    %v899 = vxor.u32 %v898, 2147483648
    %vm900 = vcmp.le.s32.totalorder %v49, %v897
    %vm901 = vcmp.le.s32.totalorder %v50, %v897
    %v902 = vsel %vm900, 1, 0
    %v903 = vsel %vm901, 1, 0
    %vm904 = vcmp.le.s32.totalorder %v49, %v899
    %vm905 = vcmp.le.s32.totalorder %v50, %v899
    %v906 = vsel %vm904, 1, 0
    %v907 = vsel %vm905, 1, 0
    %v908 = vmul.u32 %v906, 65536
    %v909 = vmul.u32 %v907, 65536
    %v910 = vadd.s32 %v902, %v908
    %v911 = vadd.s32 %v903, %v909
    %v912 = vadd.s32 %v910, %v911
    %v913 = vand.u32 %v912, 65535
    %v914 = vshrl.u32 %v912, 16
    %v915 = vcvt.s32.f32 %v913
    %v916 = vcvt.s32.f32 %v914
    %917 = vadd.xlane.f32.xlu0 %v915
    %v918 = vpop.xlane.xlu0 %917
    %919 = vadd.xlane.f32.xlu0 %v916
    %v920 = vpop.xlane.xlu0 %919
    %v921 = vcvt.f32.s32 %v918
    %v922 = vcvt.f32.s32 %v920
    %v923 = vshll.u32 %v922, 16
    %v924 = vadd.s32 %v923, %v921
    %v925 = vrot.slane %v924, 4
    %v926 = vadd.s32 %v924, %v925
    %v927 = vrot.slane %v926, 2
    %v928 = vadd.s32 %v926, %v927
    %v929 = vrot.slane %v928, 1
    %v930 = vadd.s32 %v928, %v929
    %s931 = vtos %v930
    %v932 = vstv %s931
    %v933 = vshra.s32 %v932, 16
    %v934 = vand.u32 %v932, 65535
    %vm935 = vcmp.ge.s32.totalorder %v934, 103
    %v936 = vor.u32 %v892, 4096
    %v937 = vsel %vm935, %v892, %v936
    %vm938 = vcmp.ge.s32.totalorder %v933, 1945
    %v939 = vor.u32 %v895, 4096
    %v940 = vsel %vm938, %v895, %v939
    %v941 = vor.u32 %v937, 2047
    %v942 = vxor.u32 %v941, 2147483648
    %v943 = vor.u32 %v940, 2047
    %v944 = vxor.u32 %v943, 2147483648
    %vm945 = vcmp.le.s32.totalorder %v49, %v942
    %vm946 = vcmp.le.s32.totalorder %v50, %v942
    %v947 = vsel %vm945, 1, 0
    %v948 = vsel %vm946, 1, 0
    %vm949 = vcmp.le.s32.totalorder %v49, %v944
    %vm950 = vcmp.le.s32.totalorder %v50, %v944
    %v951 = vsel %vm949, 1, 0
    %v952 = vsel %vm950, 1, 0
    %v953 = vmul.u32 %v951, 65536
    %v954 = vmul.u32 %v952, 65536
    %v955 = vadd.s32 %v947, %v953
    %v956 = vadd.s32 %v948, %v954
    %v957 = vadd.s32 %v955, %v956
    %v958 = vand.u32 %v957, 65535
    %v959 = vshrl.u32 %v957, 16
    %v960 = vcvt.s32.f32 %v958
    %v961 = vcvt.s32.f32 %v959
    %962 = vadd.xlane.f32.xlu0 %v960
    %v963 = vpop.xlane.xlu0 %962
    %964 = vadd.xlane.f32.xlu0 %v961
    %v965 = vpop.xlane.xlu0 %964
    %v966 = vcvt.f32.s32 %v963
    %v967 = vcvt.f32.s32 %v965
    %v968 = vshll.u32 %v967, 16
    %v969 = vadd.s32 %v968, %v966
    %v970 = vrot.slane %v969, 4
    %v971 = vadd.s32 %v969, %v970
    %v972 = vrot.slane %v971, 2
    %v973 = vadd.s32 %v971, %v972
    %v974 = vrot.slane %v973, 1
    %v975 = vadd.s32 %v973, %v974
    %s976 = vtos %v975
    %v977 = vstv %s976
    %v978 = vshra.s32 %v977, 16
    %v979 = vand.u32 %v977, 65535
    %vm980 = vcmp.ge.s32.totalorder %v979, 103
    %v981 = vor.u32 %v937, 2048
    %v982 = vsel %vm980, %v937, %v981
    %vm983 = vcmp.ge.s32.totalorder %v978, 1945
    %v984 = vor.u32 %v940, 2048
    %v985 = vsel %vm983, %v940, %v984
    %v986 = vor.u32 %v982, 1023
    %v987 = vxor.u32 %v986, 2147483648
    %v988 = vor.u32 %v985, 1023
    %v989 = vxor.u32 %v988, 2147483648
    %vm990 = vcmp.le.s32.totalorder %v49, %v987
    %vm991 = vcmp.le.s32.totalorder %v50, %v987
    %v992 = vsel %vm990, 1, 0
    %v993 = vsel %vm991, 1, 0
    %vm994 = vcmp.le.s32.totalorder %v49, %v989
    %vm995 = vcmp.le.s32.totalorder %v50, %v989
    %v996 = vsel %vm994, 1, 0
    %v997 = vsel %vm995, 1, 0
    %v998 = vmul.u32 %v996, 65536
    %v999 = vmul.u32 %v997, 65536
    %v1000 = vadd.s32 %v992, %v998
    %v1001 = vadd.s32 %v993, %v999
    %v1002 = vadd.s32 %v1000, %v1001
    %v1003 = vand.u32 %v1002, 65535
    %v1004 = vshrl.u32 %v1002, 16
    %v1005 = vcvt.s32.f32 %v1003
    %v1006 = vcvt.s32.f32 %v1004
    %1007 = vadd.xlane.f32.xlu0 %v1005
    %v1008 = vpop.xlane.xlu0 %1007
    %1009 = vadd.xlane.f32.xlu0 %v1006
    %v1010 = vpop.xlane.xlu0 %1009
    %v1011 = vcvt.f32.s32 %v1008
    %v1012 = vcvt.f32.s32 %v1010
    %v1013 = vshll.u32 %v1012, 16
    %v1014 = vadd.s32 %v1013, %v1011
    %v1015 = vrot.slane %v1014, 4
    %v1016 = vadd.s32 %v1014, %v1015
    %v1017 = vrot.slane %v1016, 2
    %v1018 = vadd.s32 %v1016, %v1017
    %v1019 = vrot.slane %v1018, 1
    %v1020 = vadd.s32 %v1018, %v1019
    %s1021 = vtos %v1020
    %v1022 = vstv %s1021
    %v1023 = vshra.s32 %v1022, 16
    %v1024 = vand.u32 %v1022, 65535
    %vm1025 = vcmp.ge.s32.totalorder %v1024, 103
    %v1026 = vor.u32 %v982, 1024
    %v1027 = vsel %vm1025, %v982, %v1026
    %vm1028 = vcmp.ge.s32.totalorder %v1023, 1945
    %v1029 = vor.u32 %v985, 1024
    %v1030 = vsel %vm1028, %v985, %v1029
    %v1031 = vor.u32 %v1027, 511
    %v1032 = vxor.u32 %v1031, 2147483648
    %v1033 = vor.u32 %v1030, 511
    %v1034 = vxor.u32 %v1033, 2147483648
    %vm1035 = vcmp.le.s32.totalorder %v49, %v1032
    %vm1036 = vcmp.le.s32.totalorder %v50, %v1032
    %v1037 = vsel %vm1035, 1, 0
    %v1038 = vsel %vm1036, 1, 0
    %vm1039 = vcmp.le.s32.totalorder %v49, %v1034
    %vm1040 = vcmp.le.s32.totalorder %v50, %v1034
    %v1041 = vsel %vm1039, 1, 0
    %v1042 = vsel %vm1040, 1, 0
    %v1043 = vmul.u32 %v1041, 65536
    %v1044 = vmul.u32 %v1042, 65536
    %v1045 = vadd.s32 %v1037, %v1043
    %v1046 = vadd.s32 %v1038, %v1044
    %v1047 = vadd.s32 %v1045, %v1046
    %v1048 = vand.u32 %v1047, 65535
    %v1049 = vshrl.u32 %v1047, 16
    %v1050 = vcvt.s32.f32 %v1048
    %v1051 = vcvt.s32.f32 %v1049
    %1052 = vadd.xlane.f32.xlu0 %v1050
    %v1053 = vpop.xlane.xlu0 %1052
    %1054 = vadd.xlane.f32.xlu0 %v1051
    %v1055 = vpop.xlane.xlu0 %1054
    %v1056 = vcvt.f32.s32 %v1053
    %v1057 = vcvt.f32.s32 %v1055
    %v1058 = vshll.u32 %v1057, 16
    %v1059 = vadd.s32 %v1058, %v1056
    %v1060 = vrot.slane %v1059, 4
    %v1061 = vadd.s32 %v1059, %v1060
    %v1062 = vrot.slane %v1061, 2
    %v1063 = vadd.s32 %v1061, %v1062
    %v1064 = vrot.slane %v1063, 1
    %v1065 = vadd.s32 %v1063, %v1064
    %s1066 = vtos %v1065
    %v1067 = vstv %s1066
    %v1068 = vshra.s32 %v1067, 16
    %v1069 = vand.u32 %v1067, 65535
    %vm1070 = vcmp.ge.s32.totalorder %v1069, 103
    %v1071 = vor.u32 %v1027, 512
    %v1072 = vsel %vm1070, %v1027, %v1071
    %vm1073 = vcmp.ge.s32.totalorder %v1068, 1945
    %v1074 = vor.u32 %v1030, 512
    %v1075 = vsel %vm1073, %v1030, %v1074
    %v1076 = vor.u32 %v1072, 255
    %v1077 = vxor.u32 %v1076, 2147483648
    %v1078 = vor.u32 %v1075, 255
    %v1079 = vxor.u32 %v1078, 2147483648
    %vm1080 = vcmp.le.s32.totalorder %v49, %v1077
    %vm1081 = vcmp.le.s32.totalorder %v50, %v1077
    %v1082 = vsel %vm1080, 1, 0
    %v1083 = vsel %vm1081, 1, 0
    %vm1084 = vcmp.le.s32.totalorder %v49, %v1079
    %vm1085 = vcmp.le.s32.totalorder %v50, %v1079
    %v1086 = vsel %vm1084, 1, 0
    %v1087 = vsel %vm1085, 1, 0
    %v1088 = vmul.u32 %v1086, 65536
    %v1089 = vmul.u32 %v1087, 65536
    %v1090 = vadd.s32 %v1082, %v1088
    %v1091 = vadd.s32 %v1083, %v1089
    %v1092 = vadd.s32 %v1090, %v1091
    %v1093 = vand.u32 %v1092, 65535
    %v1094 = vshrl.u32 %v1092, 16
    %v1095 = vcvt.s32.f32 %v1093
    %v1096 = vcvt.s32.f32 %v1094
    %1097 = vadd.xlane.f32.xlu0 %v1095
    %v1098 = vpop.xlane.xlu0 %1097
    %1099 = vadd.xlane.f32.xlu0 %v1096
    %v1100 = vpop.xlane.xlu0 %1099
    %v1101 = vcvt.f32.s32 %v1098
    %v1102 = vcvt.f32.s32 %v1100
    %v1103 = vshll.u32 %v1102, 16
    %v1104 = vadd.s32 %v1103, %v1101
    %v1105 = vrot.slane %v1104, 4
    %v1106 = vadd.s32 %v1104, %v1105
    %v1107 = vrot.slane %v1106, 2
    %v1108 = vadd.s32 %v1106, %v1107
    %v1109 = vrot.slane %v1108, 1
    %v1110 = vadd.s32 %v1108, %v1109
    %s1111 = vtos %v1110
    %v1112 = vstv %s1111
    %v1113 = vshra.s32 %v1112, 16
    %v1114 = vand.u32 %v1112, 65535
    %vm1115 = vcmp.ge.s32.totalorder %v1114, 103
    %v1116 = vor.u32 %v1072, 256
    %v1117 = vsel %vm1115, %v1072, %v1116
    %vm1118 = vcmp.ge.s32.totalorder %v1113, 1945
    %v1119 = vor.u32 %v1075, 256
    %v1120 = vsel %vm1118, %v1075, %v1119
    %v1121 = vor.u32 %v1117, 127
    %v1122 = vxor.u32 %v1121, 2147483648
    %v1123 = vor.u32 %v1120, 127
    %v1124 = vxor.u32 %v1123, 2147483648
    %vm1125 = vcmp.le.s32.totalorder %v49, %v1122
    %vm1126 = vcmp.le.s32.totalorder %v50, %v1122
    %v1127 = vsel %vm1125, 1, 0
    %v1128 = vsel %vm1126, 1, 0
    %vm1129 = vcmp.le.s32.totalorder %v49, %v1124
    %vm1130 = vcmp.le.s32.totalorder %v50, %v1124
    %v1131 = vsel %vm1129, 1, 0
    %v1132 = vsel %vm1130, 1, 0
    %v1133 = vmul.u32 %v1131, 65536
    %v1134 = vmul.u32 %v1132, 65536
    %v1135 = vadd.s32 %v1127, %v1133
    %v1136 = vadd.s32 %v1128, %v1134
    %v1137 = vadd.s32 %v1135, %v1136
    %v1138 = vand.u32 %v1137, 65535
    %v1139 = vshrl.u32 %v1137, 16
    %v1140 = vcvt.s32.f32 %v1138
    %v1141 = vcvt.s32.f32 %v1139
    %1142 = vadd.xlane.f32.xlu0 %v1140
    %v1143 = vpop.xlane.xlu0 %1142
    %1144 = vadd.xlane.f32.xlu0 %v1141
    %v1145 = vpop.xlane.xlu0 %1144
    %v1146 = vcvt.f32.s32 %v1143
    %v1147 = vcvt.f32.s32 %v1145
    %v1148 = vshll.u32 %v1147, 16
    %v1149 = vadd.s32 %v1148, %v1146
    %v1150 = vrot.slane %v1149, 4
    %v1151 = vadd.s32 %v1149, %v1150
    %v1152 = vrot.slane %v1151, 2
    %v1153 = vadd.s32 %v1151, %v1152
    %v1154 = vrot.slane %v1153, 1
    %v1155 = vadd.s32 %v1153, %v1154
    %s1156 = vtos %v1155
    %v1157 = vstv %s1156
    %v1158 = vshra.s32 %v1157, 16
    %v1159 = vand.u32 %v1157, 65535
    %vm1160 = vcmp.ge.s32.totalorder %v1159, 103
    %v1161 = vor.u32 %v1117, 128
    %v1162 = vsel %vm1160, %v1117, %v1161
    %vm1163 = vcmp.ge.s32.totalorder %v1158, 1945
    %v1164 = vor.u32 %v1120, 128
    %v1165 = vsel %vm1163, %v1120, %v1164
    %v1166 = vor.u32 %v1162, 63
    %v1167 = vxor.u32 %v1166, 2147483648
    %v1168 = vor.u32 %v1165, 63
    %v1169 = vxor.u32 %v1168, 2147483648
    %vm1170 = vcmp.le.s32.totalorder %v49, %v1167
    %vm1171 = vcmp.le.s32.totalorder %v50, %v1167
    %v1172 = vsel %vm1170, 1, 0
    %v1173 = vsel %vm1171, 1, 0
    %vm1174 = vcmp.le.s32.totalorder %v49, %v1169
    %vm1175 = vcmp.le.s32.totalorder %v50, %v1169
    %v1176 = vsel %vm1174, 1, 0
    %v1177 = vsel %vm1175, 1, 0
    %v1178 = vmul.u32 %v1176, 65536
    %v1179 = vmul.u32 %v1177, 65536
    %v1180 = vadd.s32 %v1172, %v1178
    %v1181 = vadd.s32 %v1173, %v1179
    %v1182 = vadd.s32 %v1180, %v1181
    %v1183 = vand.u32 %v1182, 65535
    %v1184 = vshrl.u32 %v1182, 16
    %v1185 = vcvt.s32.f32 %v1183
    %v1186 = vcvt.s32.f32 %v1184
    %1187 = vadd.xlane.f32.xlu0 %v1185
    %v1188 = vpop.xlane.xlu0 %1187
    %1189 = vadd.xlane.f32.xlu0 %v1186
    %v1190 = vpop.xlane.xlu0 %1189
    %v1191 = vcvt.f32.s32 %v1188
    %v1192 = vcvt.f32.s32 %v1190
    %v1193 = vshll.u32 %v1192, 16
    %v1194 = vadd.s32 %v1193, %v1191
    %v1195 = vrot.slane %v1194, 4
    %v1196 = vadd.s32 %v1194, %v1195
    %v1197 = vrot.slane %v1196, 2
    %v1198 = vadd.s32 %v1196, %v1197
    %v1199 = vrot.slane %v1198, 1
    %v1200 = vadd.s32 %v1198, %v1199
    %s1201 = vtos %v1200
    %v1202 = vstv %s1201
    %v1203 = vshra.s32 %v1202, 16
    %v1204 = vand.u32 %v1202, 65535
    %vm1205 = vcmp.ge.s32.totalorder %v1204, 103
    %v1206 = vor.u32 %v1162, 64
    %v1207 = vsel %vm1205, %v1162, %v1206
    %vm1208 = vcmp.ge.s32.totalorder %v1203, 1945
    %v1209 = vor.u32 %v1165, 64
    %v1210 = vsel %vm1208, %v1165, %v1209
    %v1211 = vor.u32 %v1207, 31
    %v1212 = vxor.u32 %v1211, 2147483648
    %v1213 = vor.u32 %v1210, 31
    %v1214 = vxor.u32 %v1213, 2147483648
    %vm1215 = vcmp.le.s32.totalorder %v49, %v1212
    %vm1216 = vcmp.le.s32.totalorder %v50, %v1212
    %v1217 = vsel %vm1215, 1, 0
    %v1218 = vsel %vm1216, 1, 0
    %vm1219 = vcmp.le.s32.totalorder %v49, %v1214
    %vm1220 = vcmp.le.s32.totalorder %v50, %v1214
    %v1221 = vsel %vm1219, 1, 0
    %v1222 = vsel %vm1220, 1, 0
    %v1223 = vmul.u32 %v1221, 65536
    %v1224 = vmul.u32 %v1222, 65536
    %v1225 = vadd.s32 %v1217, %v1223
    %v1226 = vadd.s32 %v1218, %v1224
    %v1227 = vadd.s32 %v1225, %v1226
    %v1228 = vand.u32 %v1227, 65535
    %v1229 = vshrl.u32 %v1227, 16
    %v1230 = vcvt.s32.f32 %v1228
    %v1231 = vcvt.s32.f32 %v1229
    %1232 = vadd.xlane.f32.xlu0 %v1230
    %v1233 = vpop.xlane.xlu0 %1232
    %1234 = vadd.xlane.f32.xlu0 %v1231
    %v1235 = vpop.xlane.xlu0 %1234
    %v1236 = vcvt.f32.s32 %v1233
    %v1237 = vcvt.f32.s32 %v1235
    %v1238 = vshll.u32 %v1237, 16
    %v1239 = vadd.s32 %v1238, %v1236
    %v1240 = vrot.slane %v1239, 4
    %v1241 = vadd.s32 %v1239, %v1240
    %v1242 = vrot.slane %v1241, 2
    %v1243 = vadd.s32 %v1241, %v1242
    %v1244 = vrot.slane %v1243, 1
    %v1245 = vadd.s32 %v1243, %v1244
    %s1246 = vtos %v1245
    %v1247 = vstv %s1246
    %v1248 = vshra.s32 %v1247, 16
    %v1249 = vand.u32 %v1247, 65535
    %vm1250 = vcmp.ge.s32.totalorder %v1249, 103
    %v1251 = vor.u32 %v1207, 32
    %v1252 = vsel %vm1250, %v1207, %v1251
    %vm1253 = vcmp.ge.s32.totalorder %v1248, 1945
    %v1254 = vor.u32 %v1210, 32
    %v1255 = vsel %vm1253, %v1210, %v1254
    %v1256 = vor.u32 %v1252, 15
    %v1257 = vxor.u32 %v1256, 2147483648
    %v1258 = vor.u32 %v1255, 15
    %v1259 = vxor.u32 %v1258, 2147483648
    %vm1260 = vcmp.le.s32.totalorder %v49, %v1257
    %vm1261 = vcmp.le.s32.totalorder %v50, %v1257
    %v1262 = vsel %vm1260, 1, 0
    %v1263 = vsel %vm1261, 1, 0
    %vm1264 = vcmp.le.s32.totalorder %v49, %v1259
    %vm1265 = vcmp.le.s32.totalorder %v50, %v1259
    %v1266 = vsel %vm1264, 1, 0
    %v1267 = vsel %vm1265, 1, 0
    %v1268 = vmul.u32 %v1266, 65536
    %v1269 = vmul.u32 %v1267, 65536
    %v1270 = vadd.s32 %v1262, %v1268
    %v1271 = vadd.s32 %v1263, %v1269
    %v1272 = vadd.s32 %v1270, %v1271
    %v1273 = vand.u32 %v1272, 65535
    %v1274 = vshrl.u32 %v1272, 16
    %v1275 = vcvt.s32.f32 %v1273
    %v1276 = vcvt.s32.f32 %v1274
    %1277 = vadd.xlane.f32.xlu0 %v1275
    %v1278 = vpop.xlane.xlu0 %1277
    %1279 = vadd.xlane.f32.xlu0 %v1276
    %v1280 = vpop.xlane.xlu0 %1279
    %v1281 = vcvt.f32.s32 %v1278
    %v1282 = vcvt.f32.s32 %v1280
    %v1283 = vshll.u32 %v1282, 16
    %v1284 = vadd.s32 %v1283, %v1281
    %v1285 = vrot.slane %v1284, 4
    %v1286 = vadd.s32 %v1284, %v1285
    %v1287 = vrot.slane %v1286, 2
    %v1288 = vadd.s32 %v1286, %v1287
    %v1289 = vrot.slane %v1288, 1
    %v1290 = vadd.s32 %v1288, %v1289
    %s1291 = vtos %v1290
    %v1292 = vstv %s1291
    %v1293 = vshra.s32 %v1292, 16
    %v1294 = vand.u32 %v1292, 65535
    %vm1295 = vcmp.ge.s32.totalorder %v1294, 103
    %v1296 = vor.u32 %v1252, 16
    %v1297 = vsel %vm1295, %v1252, %v1296
    %vm1298 = vcmp.ge.s32.totalorder %v1293, 1945
    %v1299 = vor.u32 %v1255, 16
    %v1300 = vsel %vm1298, %v1255, %v1299
    %v1301 = vor.u32 %v1297, 7
    %v1302 = vxor.u32 %v1301, 2147483648
    %v1303 = vor.u32 %v1300, 7
    %v1304 = vxor.u32 %v1303, 2147483648
    %vm1305 = vcmp.le.s32.totalorder %v49, %v1302
    %vm1306 = vcmp.le.s32.totalorder %v50, %v1302
    %v1307 = vsel %vm1305, 1, 0
    %v1308 = vsel %vm1306, 1, 0
    %vm1309 = vcmp.le.s32.totalorder %v49, %v1304
    %vm1310 = vcmp.le.s32.totalorder %v50, %v1304
    %v1311 = vsel %vm1309, 1, 0
    %v1312 = vsel %vm1310, 1, 0
    %v1313 = vmul.u32 %v1311, 65536
    %v1314 = vmul.u32 %v1312, 65536
    %v1315 = vadd.s32 %v1307, %v1313
    %v1316 = vadd.s32 %v1308, %v1314
    %v1317 = vadd.s32 %v1315, %v1316
    %v1318 = vand.u32 %v1317, 65535
    %v1319 = vshrl.u32 %v1317, 16
    %v1320 = vcvt.s32.f32 %v1318
    %v1321 = vcvt.s32.f32 %v1319
    %1322 = vadd.xlane.f32.xlu0 %v1320
    %v1323 = vpop.xlane.xlu0 %1322
    %1324 = vadd.xlane.f32.xlu0 %v1321
    %v1325 = vpop.xlane.xlu0 %1324
    %v1326 = vcvt.f32.s32 %v1323
    %v1327 = vcvt.f32.s32 %v1325
    %v1328 = vshll.u32 %v1327, 16
    %v1329 = vadd.s32 %v1328, %v1326
    %v1330 = vrot.slane %v1329, 4
    %v1331 = vadd.s32 %v1329, %v1330
    %v1332 = vrot.slane %v1331, 2
    %v1333 = vadd.s32 %v1331, %v1332
    %v1334 = vrot.slane %v1333, 1
    %v1335 = vadd.s32 %v1333, %v1334
    %s1336 = vtos %v1335
    %v1337 = vstv %s1336
    %v1338 = vshra.s32 %v1337, 16
    %v1339 = vand.u32 %v1337, 65535
    %vm1340 = vcmp.ge.s32.totalorder %v1339, 103
    %v1341 = vor.u32 %v1297, 8
    %v1342 = vsel %vm1340, %v1297, %v1341
    %vm1343 = vcmp.ge.s32.totalorder %v1338, 1945
    %v1344 = vor.u32 %v1300, 8
    %v1345 = vsel %vm1343, %v1300, %v1344
    %v1346 = vor.u32 %v1342, 3
    %v1347 = vxor.u32 %v1346, 2147483648
    %v1348 = vor.u32 %v1345, 3
    %v1349 = vxor.u32 %v1348, 2147483648
    %vm1350 = vcmp.le.s32.totalorder %v49, %v1347
    %vm1351 = vcmp.le.s32.totalorder %v50, %v1347
    %v1352 = vsel %vm1350, 1, 0
    %v1353 = vsel %vm1351, 1, 0
    %vm1354 = vcmp.le.s32.totalorder %v49, %v1349
    %vm1355 = vcmp.le.s32.totalorder %v50, %v1349
    %v1356 = vsel %vm1354, 1, 0
    %v1357 = vsel %vm1355, 1, 0
    %v1358 = vmul.u32 %v1356, 65536
    %v1359 = vmul.u32 %v1357, 65536
    %v1360 = vadd.s32 %v1352, %v1358
    %v1361 = vadd.s32 %v1353, %v1359
    %v1362 = vadd.s32 %v1360, %v1361
    %v1363 = vand.u32 %v1362, 65535
    %v1364 = vshrl.u32 %v1362, 16
    %v1365 = vcvt.s32.f32 %v1363
    %v1366 = vcvt.s32.f32 %v1364
    %1367 = vadd.xlane.f32.xlu0 %v1365
    %v1368 = vpop.xlane.xlu0 %1367
    %1369 = vadd.xlane.f32.xlu0 %v1366
    %v1370 = vpop.xlane.xlu0 %1369
    %v1371 = vcvt.f32.s32 %v1368
    %v1372 = vcvt.f32.s32 %v1370
    %v1373 = vshll.u32 %v1372, 16
    %v1374 = vadd.s32 %v1373, %v1371
    %v1375 = vrot.slane %v1374, 4
    %v1376 = vadd.s32 %v1374, %v1375
    %v1377 = vrot.slane %v1376, 2
    %v1378 = vadd.s32 %v1376, %v1377
    %v1379 = vrot.slane %v1378, 1
    %v1380 = vadd.s32 %v1378, %v1379
    %s1381 = vtos %v1380
    %v1382 = vstv %s1381
    %v1383 = vshra.s32 %v1382, 16
    %v1384 = vand.u32 %v1382, 65535
    %vm1385 = vcmp.ge.s32.totalorder %v1384, 103
    %v1386 = vor.u32 %v1342, 4
    %v1387 = vsel %vm1385, %v1342, %v1386
    %vm1388 = vcmp.ge.s32.totalorder %v1383, 1945
    %v1389 = vor.u32 %v1345, 4
    %v1390 = vsel %vm1388, %v1345, %v1389
    %v1391 = vor.u32 %v1387, 1
    %v1392 = vxor.u32 %v1391, 2147483648
    %v1393 = vor.u32 %v1390, 1
    %v1394 = vxor.u32 %v1393, 2147483648
    %vm1395 = vcmp.le.s32.totalorder %v49, %v1392
    %vm1396 = vcmp.le.s32.totalorder %v50, %v1392
    %v1397 = vsel %vm1395, 1, 0
    %v1398 = vsel %vm1396, 1, 0
    %vm1399 = vcmp.le.s32.totalorder %v49, %v1394
    %vm1400 = vcmp.le.s32.totalorder %v50, %v1394
    %v1401 = vsel %vm1399, 1, 0
    %v1402 = vsel %vm1400, 1, 0
    %v1403 = vmul.u32 %v1401, 65536
    %v1404 = vmul.u32 %v1402, 65536
    %v1405 = vadd.s32 %v1397, %v1403
    %v1406 = vadd.s32 %v1398, %v1404
    %v1407 = vadd.s32 %v1405, %v1406
    %v1408 = vand.u32 %v1407, 65535
    %v1409 = vshrl.u32 %v1407, 16
    %v1410 = vcvt.s32.f32 %v1408
    %v1411 = vcvt.s32.f32 %v1409
    %1412 = vadd.xlane.f32.xlu0 %v1410
    %v1413 = vpop.xlane.xlu0 %1412
    %1414 = vadd.xlane.f32.xlu0 %v1411
    %v1415 = vpop.xlane.xlu0 %1414
    %v1416 = vcvt.f32.s32 %v1413
    %v1417 = vcvt.f32.s32 %v1415
    %v1418 = vshll.u32 %v1417, 16
    %v1419 = vadd.s32 %v1418, %v1416
    %v1420 = vrot.slane %v1419, 4
    %v1421 = vadd.s32 %v1419, %v1420
    %v1422 = vrot.slane %v1421, 2
    %v1423 = vadd.s32 %v1421, %v1422
    %v1424 = vrot.slane %v1423, 1
    %v1425 = vadd.s32 %v1423, %v1424
    %s1426 = vtos %v1425
    %v1427 = vstv %s1426
    %v1428 = vshra.s32 %v1427, 16
    %v1429 = vand.u32 %v1427, 65535
    %vm1430 = vcmp.ge.s32.totalorder %v1429, 103
    %v1431 = vor.u32 %v1387, 2
    %v1432 = vsel %vm1430, %v1387, %v1431
    %vm1433 = vcmp.ge.s32.totalorder %v1428, 1945
    %v1434 = vor.u32 %v1390, 2
    %v1435 = vsel %vm1433, %v1390, %v1434
    %v1436 = vxor.u32 %v1432, 2147483648
    %v1437 = vxor.u32 %v1435, 2147483648
    %vm1438 = vcmp.le.s32.totalorder %v49, %v1436
    %vm1439 = vcmp.le.s32.totalorder %v50, %v1436
    %v1440 = vsel %vm1438, 1, 0
    %v1441 = vsel %vm1439, 1, 0
    %vm1442 = vcmp.le.s32.totalorder %v49, %v1437
    %vm1443 = vcmp.le.s32.totalorder %v50, %v1437
    %v1444 = vsel %vm1442, 1, 0
    %v1445 = vsel %vm1443, 1, 0
    %v1446 = vmul.u32 %v1444, 65536
    %v1447 = vmul.u32 %v1445, 65536
    %v1448 = vadd.s32 %v1440, %v1446
    %v1449 = vadd.s32 %v1441, %v1447
    %v1450 = vadd.s32 %v1448, %v1449
    %v1451 = vand.u32 %v1450, 65535
    %v1452 = vshrl.u32 %v1450, 16
    %v1453 = vcvt.s32.f32 %v1451
    %v1454 = vcvt.s32.f32 %v1452
    %1455 = vadd.xlane.f32.xlu0 %v1453
    %v1456 = vpop.xlane.xlu0 %1455
    %1457 = vadd.xlane.f32.xlu0 %v1454
    %v1458 = vpop.xlane.xlu0 %1457
    %v1459 = vcvt.f32.s32 %v1456
    %v1460 = vcvt.f32.s32 %v1458
    %v1461 = vshll.u32 %v1460, 16
    %v1462 = vadd.s32 %v1461, %v1459
    %v1463 = vrot.slane %v1462, 4
    %v1464 = vadd.s32 %v1462, %v1463
    %v1465 = vrot.slane %v1464, 2
    %v1466 = vadd.s32 %v1464, %v1465
    %v1467 = vrot.slane %v1466, 1
    %v1468 = vadd.s32 %v1466, %v1467
    %s1469 = vtos %v1468
    %v1470 = vstv %s1469
    %v1471 = vshra.s32 %v1470, 16
    %v1472 = vand.u32 %v1470, 65535
    %vm1473 = vcmp.ge.s32.totalorder %v1472, 103
    %v1474 = vor.u32 %v1432, 1
    %v1475 = vsel %vm1473, %v1432, %v1474
    %vm1476 = vcmp.ge.s32.totalorder %v1471, 1945
    %v1477 = vor.u32 %v1435, 1
    %v1478 = vsel %vm1476, %v1435, %v1477
    %v1479 = vxor.u32 %v1475, 2147483648
    %v1480 = vxor.u32 %v1478, 2147483648
    %vm1481 = vcmp.ge.s32.totalorder %v1479, 0
    %v1482 = vxor.u32 %v1475, 4294967295
    %v1483 = vsel %vm1481, %v1479, %v1482
    %vm1485 = vcmp.ge.s32.totalorder %v1480, 0
    %v1486 = vxor.u32 %v1478, 4294967295
    %v1487 = vsel %vm1485, %v1480, %v1486
    %vm1489 = vcmp.le.s32.totalorder %v49, %v1479
    %vm1490 = vcmp.le.s32.totalorder %v50, %v1479
    %v1491 = vsel %vm1489, 1, 0
    %v1492 = vsel %vm1490, 1, 0
    %v1493 = vadd.s32 %v1491, %v1492
    %v1494 = vand.u32 %v1493, 65535
    %v1495 = vshrl.u32 %v1493, 16
    %v1496 = vcvt.s32.f32 %v1494
    %v1497 = vcvt.s32.f32 %v1495
    %1498 = vadd.xlane.f32.xlu0 %v1496
    %v1499 = vpop.xlane.xlu0 %1498
    %1500 = vadd.xlane.f32.xlu0 %v1497
    %v1501 = vpop.xlane.xlu0 %1500
    %v1502 = vcvt.f32.s32 %v1499
    %v1503 = vcvt.f32.s32 %v1501
    %v1504 = vshll.u32 %v1503, 16
    %v1505 = vadd.s32 %v1504, %v1502
    %v1506 = vrot.slane %v1505, 4
    %v1507 = vadd.s32 %v1505, %v1506
    %v1508 = vrot.slane %v1507, 2
    %v1509 = vadd.s32 %v1507, %v1508
    %v1510 = vrot.slane %v1509, 1
    %v1511 = vadd.s32 %v1509, %v1510
    %s1512 = vtos %v1511
    %v1513 = vstv %s1512
    %v1514 = vsel %vm1489, 2147483647, %v49
    %v1515 = vsel %vm1490, 2147483647, %v50
    %vm1516 = vcmp.lt.s32.totalorder %v1514, %v1515
    %v1517 = vsel %vm1516, %v1514, %v1515
    %v1518 = vand.u32 %v1517, 65535
    %v1519 = vshra.s32 %v1517, 16
    %v1520 = vcvt.s32.f32 %v1518
    %v1521 = vcvt.s32.f32 %v1519
    %1522 = vmin.xlane.f32.xlu0 %v1521
    %v1523 = vpop.xlane.xlu0 %1522
    %vm1524 = vcmp.eq.f32.partialorder %v1521, %v1523
    %v1525 = vsel %vm1524, %v1520, inf
    %1526 = vmin.xlane.f32.xlu0 %v1525
    %v1527 = vpop.xlane.xlu0 %1526
    %v1528 = vcvt.f32.s32 %v1527
    %v1529 = vcvt.f32.s32 %v1523
    %v1530 = vshll.u32 %v1529, 16
    %v1531 = vadd.s32 %v1530, %v1528
    %v1532 = vrot.slane %v1531, 4
    %vm1533 = vcmp.lt.s32.totalorder %v1531, %v1532
    %v1534 = vsel %vm1533, %v1531, %v1532
    %v1535 = vrot.slane %v1534, 2
    %vm1536 = vcmp.lt.s32.totalorder %v1534, %v1535
    %v1537 = vsel %vm1536, %v1534, %v1535
    %v1538 = vrot.slane %v1537, 1
    %vm1539 = vcmp.lt.s32.totalorder %v1537, %v1538
    %v1540 = vsel %vm1539, %v1537, %v1538
    %s1541 = vtos %v1540
    %v1542 = vstv %s1541
    %vm1543 = vcmp.ge.s32.totalorder %v1513, 104
    %vm1544 = vcmp.ge.s32.totalorder %v1542, 0
    %v1545 = vxor.u32 %v1542, 2147483648
    %v1546 = vxor.u32 %v1545, 4294967295
    %v1547 = vsel %vm1544, %v1542, %v1546
    %v1549 = vsel %vm1543, %v1483, %v1547
    %v1550 = vsub.f32 %v1549, %v1483
    %v1551 = vmul.f32 %v1550, 0.35
    %v1552 = vadd.f32 %v1483, %v1551
    %vm1553 = vcmp.le.s32.totalorder %v49, %v1480
    %vm1554 = vcmp.le.s32.totalorder %v50, %v1480
    %v1555 = vsel %vm1553, 1, 0
    %v1556 = vsel %vm1554, 1, 0
    %v1557 = vadd.s32 %v1555, %v1556
    %v1558 = vand.u32 %v1557, 65535
    %v1559 = vshrl.u32 %v1557, 16
    %v1560 = vcvt.s32.f32 %v1558
    %v1561 = vcvt.s32.f32 %v1559
    %1562 = vadd.xlane.f32.xlu0 %v1560
    %v1563 = vpop.xlane.xlu0 %1562
    %1564 = vadd.xlane.f32.xlu0 %v1561
    %v1565 = vpop.xlane.xlu0 %1564
    %v1566 = vcvt.f32.s32 %v1563
    %v1567 = vcvt.f32.s32 %v1565
    %v1568 = vshll.u32 %v1567, 16
    %v1569 = vadd.s32 %v1568, %v1566
    %v1570 = vrot.slane %v1569, 4
    %v1571 = vadd.s32 %v1569, %v1570
    %v1572 = vrot.slane %v1571, 2
    %v1573 = vadd.s32 %v1571, %v1572
    %v1574 = vrot.slane %v1573, 1
    %v1575 = vadd.s32 %v1573, %v1574
    %s1576 = vtos %v1575
    %v1577 = vstv %s1576
    %v1578 = vsel %vm1553, 2147483647, %v49
    %v1579 = vsel %vm1554, 2147483647, %v50
    %vm1580 = vcmp.lt.s32.totalorder %v1578, %v1579
    %v1581 = vsel %vm1580, %v1578, %v1579
    %v1582 = vand.u32 %v1581, 65535
    %v1583 = vshra.s32 %v1581, 16
    %v1584 = vcvt.s32.f32 %v1582
    %v1585 = vcvt.s32.f32 %v1583
    %1586 = vmin.xlane.f32.xlu0 %v1585
    %v1587 = vpop.xlane.xlu0 %1586
    %vm1588 = vcmp.eq.f32.partialorder %v1585, %v1587
    %v1589 = vsel %vm1588, %v1584, inf
    %1590 = vmin.xlane.f32.xlu0 %v1589
    %v1591 = vpop.xlane.xlu0 %1590
    %v1592 = vcvt.f32.s32 %v1591
    %v1593 = vcvt.f32.s32 %v1587
    %v1594 = vshll.u32 %v1593, 16
    %v1595 = vadd.s32 %v1594, %v1592
    %v1596 = vrot.slane %v1595, 4
    %vm1597 = vcmp.lt.s32.totalorder %v1595, %v1596
    %v1598 = vsel %vm1597, %v1595, %v1596
    %v1599 = vrot.slane %v1598, 2
    %vm1600 = vcmp.lt.s32.totalorder %v1598, %v1599
    %v1601 = vsel %vm1600, %v1598, %v1599
    %v1602 = vrot.slane %v1601, 1
    %vm1603 = vcmp.lt.s32.totalorder %v1601, %v1602
    %v1604 = vsel %vm1603, %v1601, %v1602
    %s1605 = vtos %v1604
    %v1606 = vstv %s1605
    %vm1607 = vcmp.ge.s32.totalorder %v1577, 1946
    %vm1608 = vcmp.ge.s32.totalorder %v1606, 0
    %v1609 = vxor.u32 %v1606, 2147483648
    %v1610 = vxor.u32 %v1609, 4294967295
    %v1611 = vsel %vm1608, %v1606, %v1610
    %v1613 = vsel %vm1607, %v1487, %v1611
    %v1614 = vsub.f32 %v1613, %v1487
    %v1615 = vmul.f32 %v1614, 0.65
    %v1616 = vadd.f32 %v1487, %v1615
    %s1617 = sld [smem:[#allocation6]]
    %s1618 = sld [smem:[#allocation6 + $0x1]]
    %s1619 = smul.f32 %s1617, 0.99
    %v1620 = vmul.f32 %v1552, 0.01
    %v1621 = vstv %s1619
    %v1622 = vadd.f32 %v1621, %v1620
    %s1623 = smul.f32 %s1618, 0.99
    %v1624 = vmul.f32 %v1616, 0.01
    %v1625 = vstv %s1623
    %v1626 = vadd.f32 %v1625, %v1624
    %v1627 = vsub.f32 %v1626, %v1622
    %v1628 = vmax.f32 %v1627, 1.0
    %v1629 = vlaneseq
    %v1630 = vand.u32 %v1629, 127
    %vm1631 = vcmp.eq.s32.totalorder %v1630, 0
    %vm1632 = vcmp.eq.s32.totalorder %v1630, 1
    %vm1633 = vcmp.eq.s32.totalorder %v1630, 2
    %v1634 = vsel %vm1633, %v1628, 0.0
    %v1635 = vsel %vm1632, %v1626, %v1634
    %v1636 = vsel %vm1631, %v1622, %v1635
    %1637 = vst [vmem:[#allocation7] sm:$0x1] %v1636
    // Predicated region
    $region18: #{tpu_custom_call.1} parent=1 // pred_check
      _
    $region19: #{tpu_custom_call.1} parent=1 // pred_check_branch
      %1639 = sbr.rel (0) target = $region21
    $region20: #{tpu_custom_call.1} parent=1 // pred_region
      %s1641 = ssub.s32 16, 16
      %1642 = vsyncadd [#allocation4], %s1641
      %s1644 = sshll.u32 [#allocation7], 4
      %s1645 = int_to_ptr.vmem [resolvable:$true] %s1644
      %1647 = dma.vmem_to_hbm [thread:$0]  %s1645, 16, %s2, [#allocation4]
    $region21: #{tpu_custom_call.1} parent=1 // pred_fallthru
      _
    // Predicated region
    $region22: #{tpu_custom_call.1} parent=1 // pred_check
      _
    $region23: #{tpu_custom_call.1} parent=1 // pred_check_branch
      %1649 = sbr.rel (0) target = $region25
    $region24: #{tpu_custom_call.1} parent=1 // pred_region
      %1650 = dma.done [#allocation4], 16
    $region25: #{tpu_custom_call.1} parent=1 // pred_fallthru
      _
    %1651 = vsyncpa [#allocation3], 1
    %1652 = vsyncpa [#allocation4], 1
    %1653 = vsyncpa [#allocation5], 1

</llo_original>
